<compile_context>
chip_gen: v7x
topology: tpu7x:2x2x1
jax: 0.10.0
libtpu: 0.0.40
codegen_flags: <defaults>
</compile_context>

<pallas_src>
import math
import jax
import jax.numpy as jnp
from jax import lax
from jax.experimental import pallas as pl
from jax.experimental.pallas import tpu as pltpu  # noqa: F401  (TPU backend)

# ---------------- model config (small, consistent with the module) ----------------
LAYERS = 2
D_MODEL = 32
HEADS = 4
D_QUERY = 8            # HEADS * D_QUERY == D_MODEL
VOCAB = 64
VOCAB_PAD = 128        # lane-dense output width (padded lanes masked out of the lse)
MAX_LEN = 16
BATCH = 2
SEQ = 8
ROWS = BATCH * SEQ     # flattened (B, S) rows
PAD = -1
EPS = 1e-5
NEG = -1.0e9
LOG2_SEQ = int(math.log2(SEQ))
assert (1 << LOG2_SEQ) == SEQ, "SEQ must be a power of two for the in-kernel mask"

# ---------------- packed-slab row layouts (static offsets used in the kernel) -------
# embed_slab (EMBED_ROWS, D): [We | PE+be | gamma_final | beta_final]
ROW_WE = 0
ROW_PE = VOCAB
ROW_GF = VOCAB + ROWS
ROW_BF = VOCAB + ROWS + 1
EMBED_ROWS = VOCAB + ROWS + 2
# d_slab (L, D_SLAB_ROWS, D): [Wo | W2 | bo | b2 | g1 | bn1 | g2 | bn2]
ROW_WO = 0
ROW_W2 = D_MODEL
_DB = D_MODEL + 4 * D_MODEL
ROW_BO, ROW_B2, ROW_G1, ROW_BN1, ROW_G2, ROW_BN2 = _DB, _DB + 1, _DB + 2, _DB + 3, _DB + 4, _DB + 5
D_SLAB_ROWS = _DB + 6
# qkv_slab (L, D+1, 3D): [Wqkv | bqkv] ; wide_slab (L+1, D+1, 128): [W1|b1], last = [Wg_pad|bg_pad]


def _layernorm(x, gamma, beta):
    # single-pass LN: var = E[x^2] - E[x]^2 (one pair of lane reductions)
    mu = jnp.mean(x, axis=-1, keepdims=True)
    ex2 = jnp.mean(x * x, axis=-1, keepdims=True)
    var = ex2 - mu * mu
    return (x - mu) * lax.rsqrt(var + EPS) * gamma + beta


# ---------------------------- fused forward kernel ----------------------------
def fused_forward_kernel(tok_col_ref, tok_row_ref, embed_ref, qkv_ref, dmat_ref, wide_ref,
                         out_ref):
    R = ROWS
    tok_col = tok_col_ref[...]                      # (R, 1) i32
    tok_row = tok_row_ref[...]                      # (1, R) i32

    # --- embedding: one_hot(tok) @ We + (PE + be)  (dropout = identity in eval) ---
    we = embed_ref[ROW_WE:ROW_WE + VOCAB, :]                              # (V, D)
    pe_be = embed_ref[ROW_PE:ROW_PE + R, :]                               # (R, D)
    onehot = (tok_col == lax.broadcasted_iota(jnp.int32, (R, VOCAB), 1)).astype(jnp.float32)
    emb = jnp.dot(onehot, we, preferred_element_type=jnp.float32) + pe_be  # (R, D)

    # --- additive attention mask, built once: same batch & causal & key-not-pad ---
    row_i = lax.broadcasted_iota(jnp.int32, (R, R), 0)
    col_j = lax.broadcasted_iota(jnp.int32, (R, R), 1)
    allowed = ((jnp.right_shift(row_i, LOG2_SEQ) == jnp.right_shift(col_j, LOG2_SEQ))
               & (col_j <= row_i)
               & jnp.broadcast_to(tok_row != PAD, (R, R)))
    madd = jnp.where(allowed, 0.0, NEG)                                   # (R, R) float
    madd_h = jnp.concatenate([madd] * HEADS, axis=0)                      # (H*R, R) sublane-stacked

    scale = 1.0 / math.sqrt(D_QUERY)
    out = emb
    for i in range(LAYERS):                         # static unroll over layers
        resid = out
        # NB: the reference PyTorch code feeds the ORIGINAL embedding to every
        # self-attention layer; `out` only carries the residual stream.
        wqkv = qkv_ref[i, 0:D_MODEL, :]                                   # (D, 3D)
        bqkv = qkv_ref[i, D_MODEL:D_MODEL + 1, :]                         # (1, 3D)
        qkv = jnp.dot(emb, wqkv, preferred_element_type=jnp.float32) + bqkv   # (R, 3D)

        # scores for all heads, stacked on sublanes -> one masked softmax over (H*R, R)
        s_blocks = []
        for h in range(HEADS):                      # static unroll over heads
            qh = qkv[:, h * D_QUERY:(h + 1) * D_QUERY]
            kh = qkv[:, D_MODEL + h * D_QUERY:D_MODEL + (h + 1) * D_QUERY]
            s_blocks.append(lax.dot_general(qh, kh, (((1,), (1,)), ((), ())),
                                            preferred_element_type=jnp.float32))   # (R, R)
        s_all = jnp.concatenate(s_blocks, axis=0) * scale + madd_h        # (H*R, R)
        s_all = s_all - jnp.max(s_all, axis=-1, keepdims=True)            # keep for PAD-row safety
        p_all = jnp.exp(s_all)
        # exact reciprocal (approx=True kept off so the 1e-3 parity check always holds)
        p_all = p_all * pl.reciprocal(jnp.sum(p_all, axis=-1, keepdims=True))

        # head outputs accumulated straight into the Wo projection (no lane concat)
        acc = None
        for h in range(HEADS):
            ph = p_all[h * R:(h + 1) * R, :]                              # (R, R)
            vh = qkv[:, 2 * D_MODEL + h * D_QUERY:2 * D_MODEL + (h + 1) * D_QUERY]
            head = jnp.dot(ph, vh, preferred_element_type=jnp.float32)    # (R, dq)
            wo_h = dmat_ref[i, ROW_WO + h * D_QUERY:ROW_WO + (h + 1) * D_QUERY, :]  # (dq, D)
            part = jnp.dot(head, wo_h, preferred_element_type=jnp.float32)          # (R, D)
            acc = part if acc is None else acc + part
        attn = acc + dmat_ref[i, ROW_BO:ROW_BO + 1, :]

        x = _layernorm(attn,
                       dmat_ref[i, ROW_G1:ROW_G1 + 1, :],
                       dmat_ref[i, ROW_BN1:ROW_BN1 + 1, :]) + resid       # dropout = identity
        resid = x
        w1 = wide_ref[i, 0:D_MODEL, :]                                    # (D, 4D)
        b1 = wide_ref[i, D_MODEL:D_MODEL + 1, :]
        h1 = jnp.maximum(jnp.dot(x, w1, preferred_element_type=jnp.float32) + b1, 0.0)
        w2 = dmat_ref[i, ROW_W2:ROW_W2 + 4 * D_MODEL, :]                  # (4D, D)
        h2 = (jnp.dot(h1, w2, preferred_element_type=jnp.float32)
              + dmat_ref[i, ROW_B2:ROW_B2 + 1, :])
        out = _layernorm(h2,
                         dmat_ref[i, ROW_G2:ROW_G2 + 1, :],
                         dmat_ref[i, ROW_BN2:ROW_BN2 + 1, :]) + resid

    # --- final decoder LN + generator: linear -> relu -> log_softmax (lane-dense) ---
    xf = _layernorm(out, embed_ref[ROW_GF:ROW_GF + 1, :], embed_ref[ROW_BF:ROW_BF + 1, :])
    wg = wide_ref[LAYERS, 0:D_MODEL, :]                                   # (D, VOCAB_PAD)
    bg = wide_ref[LAYERS, D_MODEL:D_MODEL + 1, :]                         # (1, VOCAB_PAD)
    logits = jnp.dot(xf, wg, preferred_element_type=jnp.float32) + bg     # (R, VOCAB_PAD)
    r = jnp.maximum(logits, 0.0)
    lane = lax.broadcasted_iota(jnp.int32, (R, VOCAB_PAD), 1)
    r = jnp.where(lane < VOCAB, r, NEG)            # keep padded lanes out of the lse
    mx = jnp.max(r, axis=-1, keepdims=True)
    lse = jnp.log(jnp.sum(jnp.exp(r - mx), axis=-1, keepdims=True)) + mx
    out_ref[...] = r - lse                          # (R, 128) lane-dense store


# ---------------------------- pallas_call wrapper ----------------------------
def pack_params(p):
    """Pack the per-tensor params into 4 VMEM slabs (cuts DMA operand count to 6)."""
    embed_slab = jnp.concatenate(
        [p["we"], p["pe_flat"] + p["be"], p["gf"], p["bf"]], axis=0)            # (82, D)
    qkv_layers, d_layers, wide_layers = [], [], []
    for i in range(LAYERS):
        wqkv = jnp.concatenate([p["wq"][i], p["wk"][i], p["wv"][i]], axis=1)    # (D, 3D)
        bqkv = jnp.concatenate([p["bq"][i], p["bk"][i], p["bv"][i]], axis=1)    # (1, 3D)
        qkv_layers.append(jnp.concatenate([wqkv, bqkv], axis=0))                # (D+1, 3D)
        d_layers.append(jnp.concatenate(
            [p["wo"][i], p["w2"][i], p["bo"][i], p["b2"][i],
             p["g1"][i], p["bn1"][i], p["g2"][i], p["bn2"][i]], axis=0))        # (166, D)
        wide_layers.append(jnp.concatenate([p["w1"][i], p["b1"][i]], axis=0))   # (D+1, 4D)
    wg_pad = jnp.pad(p["wg"], ((0, 0), (0, VOCAB_PAD - VOCAB)))
    bg_pad = jnp.pad(p["bg"], ((0, 0), (0, VOCAB_PAD - VOCAB)))
    wide_layers.append(jnp.concatenate([wg_pad, bg_pad], axis=0))               # (D+1, 128)
    return (embed_slab,
            jnp.stack(qkv_layers, axis=0),     # (L, 33, 96)
            jnp.stack(d_layers, axis=0),       # (L, 166, 32)
            jnp.stack(wide_layers, axis=0))    # (L+1, 33, 128)


def model_forward(tokens, packed):
    embed_slab, qkv_slab, d_slab, wide_slab = packed
    B, S = tokens.shape
    R = B * S
    tok_col = tokens.reshape(R, 1).astype(jnp.int32)   # drives the one-hot compare
    tok_row = tokens.reshape(1, R).astype(jnp.int32)   # drives the key-pad mask
    out = pl.pallas_call(
        fused_forward_kernel,
        out_shape=jax.ShapeDtypeStruct((R, VOCAB_PAD), jnp.float32),
        # no grid / BlockSpecs: single invocation, every operand is a whole-array
        # VMEM block (total footprint ~150 KB << VMEM on v5e/v6e/v7x)
    )(tok_col, tok_row, embed_slab, qkv_slab, d_slab, wide_slab)
    return out[:, :VOCAB].reshape(B, S, VOCAB)


# ---------------------------- params (PyTorch-style init) ----------------------------
def init_params(key):
    keys = iter(jax.random.split(key, 64))

    def linear(fan_in, fan_out):   # weight pre-transposed to [in, out]
        k1, k2 = jax.random.split(next(keys))
        lim = 1.0 / math.sqrt(fan_in)
        w_t = jax.random.uniform(k1, (fan_in, fan_out), jnp.float32, -lim, lim)
        b = jax.random.uniform(k2, (1, fan_out), jnp.float32, -lim, lim)
        return w_t, b

    params = {}
    params["we"], params["be"] = linear(VOCAB, D_MODEL)

    pos = jnp.arange(MAX_LEN, dtype=jnp.float32)[:, None]
    div = jnp.exp(jnp.arange(0, D_MODEL, 2, dtype=jnp.float32) * (-math.log(10000.0) / D_MODEL))
    pe = jnp.zeros((MAX_LEN, D_MODEL), jnp.float32)
    pe = pe.at[:, 0::2].set(jnp.sin(pos * div))
    pe = pe.at[:, 1::2].set(jnp.cos(pos * div))
    params["pe_flat"] = jnp.tile(pe[:SEQ], (BATCH, 1))          # (B*S, D)

    names = ["wq", "bq", "wk", "bk", "wv", "bv", "wo", "bo",
             "w1", "b1", "w2", "b2", "g1", "bn1", "g2", "bn2"]
    per_layer = {n: [] for n in names}
    for _ in range(LAYERS):
        wq, bq = linear(D_MODEL, D_MODEL)
        wk, bk = linear(D_MODEL, D_MODEL)
        wv, bv = linear(D_MODEL, D_MODEL)
        wo, bo = linear(D_MODEL, D_MODEL)
        w1, b1 = linear(D_MODEL, 4 * D_MODEL)
        w2, b2 = linear(4 * D_MODEL, D_MODEL)
        ones = jnp.ones((1, D_MODEL), jnp.float32)
        zeros = jnp.zeros((1, D_MODEL), jnp.float32)
        vals = [wq, bq, wk, bk, wv, bv, wo, bo, w1, b1, w2, b2, ones, zeros, ones, zeros]
        for n, val in zip(names, vals):
            per_layer[n].append(val)
    for n in names:
        params[n] = jnp.stack(per_layer[n], axis=0)             # leading layer axis

    params["gf"] = jnp.ones((1, D_MODEL), jnp.float32)          # norm[-1]
    params["bf"] = jnp.zeros((1, D_MODEL), jnp.float32)
    params["wg"], params["bg"] = linear(D_MODEL, VOCAB)
    return params


# ---------------------------- pure-JAX reference for validation ----------------------------
def _ref_layernorm(x, gamma, beta):
    mu = jnp.mean(x, axis=-1, keepdims=True)
    var = jnp.mean((x - mu) ** 2, axis=-1, keepdims=True)
    return (x - mu) * lax.rsqrt(var + EPS) * gamma + beta


def reference_forward(tokens, params):
    B, S = tokens.shape
    pad_mask = (tokens != PAD)[:, None, :]                          # (B,1,S)
    sub = (jnp.triu(jnp.ones((S, S), jnp.int32), k=1) == 0)         # (S,S) causal
    mask = (pad_mask & sub[None]).astype(jnp.int32)                 # (B,S,S)

    onehot = jax.nn.one_hot(tokens, VOCAB, dtype=jnp.float32)
    pe = params["pe_flat"].reshape(B, S, D_MODEL)
    emb = onehot @ params["we"] + params["be"] + pe
    out = emb
    for i in range(LAYERS):
        resid = out
        q = emb @ params["wq"][i] + params["bq"][i]
        k = emb @ params["wk"][i] + params["bk"][i]
        v = emb @ params["wv"][i] + params["bv"][i]
        split = lambda x: x.reshape(B, S, HEADS, D_QUERY).transpose(0, 2, 1, 3)
        qh, kh, vh = split(q), split(k), split(v)
        s = jnp.einsum("bhqd,bhkd->bhqk", qh, kh) / math.sqrt(D_QUERY)
        s = jnp.where(mask[:, None] == 0, NEG, s)
        p = jax.nn.softmax(s, axis=-1)
        a = jnp.einsum("bhqk,bhkd->bhqd", p, vh).transpose(0, 2, 1, 3).reshape(B, S, D_MODEL)
        a = a @ params["wo"][i] + params["bo"][i]
        x = _ref_layernorm(a, params["g1"][i], params["bn1"][i]) + resid
        resid = x
        h = jnp.maximum(x @ params["w1"][i] + params["b1"][i], 0.0)
        h = h @ params["w2"][i] + params["b2"][i]
        out = _ref_layernorm(h, params["g2"][i], params["bn2"][i]) + resid
    out = _ref_layernorm(out, params["gf"], params["bf"])
    logits = jnp.maximum(out @ params["wg"] + params["bg"], 0.0)
    return jax.nn.log_softmax(logits, axis=-1)


if __name__ == "__main__":
    key = jax.random.PRNGKey(0)
    pkey, tkey = jax.random.split(key)
    params = init_params(pkey)
    packed = pack_params(params)
    tokens = jax.random.randint(tkey, (BATCH, SEQ), 0, VOCAB, dtype=jnp.int32)

    out = model_forward(tokens, packed)
    out = jax.block_until_ready(out)

    ref = reference_forward(tokens, params)
    assert out.shape == (BATCH, SEQ, VOCAB), out.shape
    assert bool(jnp.all(jnp.isfinite(out)))
    max_err = float(jnp.max(jnp.abs(out - ref)))
    assert max_err < 1e-3, f"mismatch vs reference: {max_err}"
    print("KERNEL_OK")
</pallas_src>

<mosaic_0001>
module attributes {stable_mosaic.version = 11 : i64} {
  func.func @fused_forward_kernel(%arg0: memref<16x1xi32, #tpu.memory_space<vmem>>, %arg1: memref<1x16xi32, #tpu.memory_space<vmem>>, %arg2: memref<82x32xf32, #tpu.memory_space<vmem>>, %arg3: memref<2x33x96xf32, #tpu.memory_space<vmem>>, %arg4: memref<2x166x32xf32, #tpu.memory_space<vmem>>, %arg5: memref<3x33x128xf32, #tpu.memory_space<vmem>>, %arg6: memref<16x128xf32, #tpu.memory_space<vmem>>) attributes {dimension_semantics = [], scalar_prefetch = 0 : i64, scratch_operands = 0 : i64, tpu.core_type = #tpu.core_type<tc>} {
    %c0 = arith.constant 0 : index
    %c0_0 = arith.constant 0 : index
    %0 = vector.load %arg0[%c0, %c0_0] : memref<16x1xi32, #tpu.memory_space<vmem>>, vector<16x1xi32>
    %c0_1 = arith.constant 0 : index
    %c0_2 = arith.constant 0 : index
    %1 = vector.load %arg1[%c0_1, %c0_2] : memref<1x16xi32, #tpu.memory_space<vmem>>, vector<1x16xi32>
    %c0_3 = arith.constant 0 : index
    %c0_4 = arith.constant 0 : index
    %2 = vector.load %arg2[%c0_3, %c0_4] : memref<82x32xf32, #tpu.memory_space<vmem>>, vector<64x32xf32>
    %c64 = arith.constant 64 : index
    %c0_5 = arith.constant 0 : index
    %3 = vector.load %arg2[%c64, %c0_5] : memref<82x32xf32, #tpu.memory_space<vmem>>, vector<16x32xf32>
    %4 = tpu.iota {dimensions = array<i32: 1>} : vector<16x64xi32>
    %5 = vector.broadcast %0 : vector<16x1xi32> to vector<16x64xi32>
    %6 = arith.cmpi eq, %5, %4 : vector<16x64xi32>
    %7 = arith.extui %6 : vector<16x64xi1> to vector<16x64xi32>
    %8 = arith.sitofp %7 : vector<16x64xi32> to vector<16x64xf32>
    %cst = arith.constant dense<0.000000e+00> : vector<16x32xf32>
    %9 = tpu.matmul %8, %2, %cst {dimension_numbers = #tpu.dot_dimension_numbers<[1], [0], [0], [1], [0, 0, 1, 1], [], []>} : vector<16x64xf32>, vector<64x32xf32>, vector<16x32xf32> -> vector<16x32xf32>
    %10 = arith.addf %9, %3 : vector<16x32xf32>
    %11 = tpu.iota {dimensions = array<i32: 0>} : vector<16x16xi32>
    %12 = tpu.iota {dimensions = array<i32: 1>} : vector<16x16xi32>
    %c3_i32 = arith.constant 3 : i32
    %13 = vector.broadcast %c3_i32 : i32 to vector<16x16xi32>
    %14 = arith.shrsi %11, %13 : vector<16x16xi32>
    %c3_i32_6 = arith.constant 3 : i32
    %15 = vector.broadcast %c3_i32_6 : i32 to vector<16x16xi32>
    %16 = arith.shrsi %12, %15 : vector<16x16xi32>
    %17 = arith.cmpi eq, %14, %16 : vector<16x16xi32>
    %18 = arith.cmpi sle, %12, %11 : vector<16x16xi32>
    %19 = arith.andi %17, %18 : vector<16x16xi1>
    %c-1_i32 = arith.constant -1 : i32
    %20 = vector.broadcast %c-1_i32 : i32 to vector<1x16xi32>
    %21 = arith.cmpi ne, %1, %20 : vector<1x16xi32>
    %22 = vector.shape_cast %21 : vector<1x16xi1> to vector<1x16xi1>
    %23 = vector.broadcast %22 : vector<1x16xi1> to vector<16x16xi1>
    %24 = arith.andi %19, %23 : vector<16x16xi1>
    %cst_7 = arith.constant 0.000000e+00 : f32
    %cst_8 = arith.constant -1.000000e+09 : f32
    %25 = vector.broadcast %cst_7 : f32 to vector<16x16xf32>
    %26 = vector.broadcast %cst_8 : f32 to vector<16x16xf32>
    %27 = arith.select %24, %25, %26 : vector<16x16xi1>, vector<16x16xf32>
    %28 = tpu.concatenate %27, %27, %27, %27 in 0 : vector<16x16xf32>, vector<16x16xf32>, vector<16x16xf32>, vector<16x16xf32> -> vector<64x16xf32>
    %c0_9 = arith.constant 0 : index
    %c0_10 = arith.constant 0 : index
    %c0_11 = arith.constant 0 : index
    %29 = vector.load %arg3[%c0_9, %c0_10, %c0_11] : memref<2x33x96xf32, #tpu.memory_space<vmem>>, vector<1x32x96xf32>
    %30 = vector.shape_cast %29 : vector<1x32x96xf32> to vector<32x96xf32>
    %c0_12 = arith.constant 0 : index
    %c32 = arith.constant 32 : index
    %c0_13 = arith.constant 0 : index
    %31 = vector.load %arg3[%c0_12, %c32, %c0_13] : memref<2x33x96xf32, #tpu.memory_space<vmem>>, vector<1x1x96xf32>
    %32 = vector.shape_cast %31 : vector<1x1x96xf32> to vector<1x96xf32>
    %cst_14 = arith.constant dense<0.000000e+00> : vector<16x96xf32>
    %33 = tpu.matmul %10, %30, %cst_14 {dimension_numbers = #tpu.dot_dimension_numbers<[1], [0], [0], [1], [0, 0, 1, 1], [], []>} : vector<16x32xf32>, vector<32x96xf32>, vector<16x96xf32> -> vector<16x96xf32>
    %34 = vector.broadcast %32 : vector<1x96xf32> to vector<16x96xf32>
    %35 = arith.addf %33, %34 : vector<16x96xf32>
    %36 = vector.extract_strided_slice %35 {offsets = [0, 0], sizes = [16, 8], strides = [1, 1]} : vector<16x96xf32> to vector<16x8xf32>
    %37 = vector.extract_strided_slice %35 {offsets = [0, 32], sizes = [16, 8], strides = [1, 1]} : vector<16x96xf32> to vector<16x8xf32>
    %cst_15 = arith.constant dense<0.000000e+00> : vector<16x16xf32>
    %38 = tpu.matmul %36, %37, %cst_15 {dimension_numbers = #tpu.dot_dimension_numbers<[1], [1], [0], [0], [0, 0, 1, 0], [], []>} : vector<16x8xf32>, vector<16x8xf32>, vector<16x16xf32> -> vector<16x16xf32>
    %39 = vector.extract_strided_slice %35 {offsets = [0, 8], sizes = [16, 8], strides = [1, 1]} : vector<16x96xf32> to vector<16x8xf32>
    %40 = vector.extract_strided_slice %35 {offsets = [0, 40], sizes = [16, 8], strides = [1, 1]} : vector<16x96xf32> to vector<16x8xf32>
    %cst_16 = arith.constant dense<0.000000e+00> : vector<16x16xf32>
    %41 = tpu.matmul %39, %40, %cst_16 {dimension_numbers = #tpu.dot_dimension_numbers<[1], [1], [0], [0], [0, 0, 1, 0], [], []>} : vector<16x8xf32>, vector<16x8xf32>, vector<16x16xf32> -> vector<16x16xf32>
    %42 = vector.extract_strided_slice %35 {offsets = [0, 16], sizes = [16, 8], strides = [1, 1]} : vector<16x96xf32> to vector<16x8xf32>
    %43 = vector.extract_strided_slice %35 {offsets = [0, 48], sizes = [16, 8], strides = [1, 1]} : vector<16x96xf32> to vector<16x8xf32>
    %cst_17 = arith.constant dense<0.000000e+00> : vector<16x16xf32>
    %44 = tpu.matmul %42, %43, %cst_17 {dimension_numbers = #tpu.dot_dimension_numbers<[1], [1], [0], [0], [0, 0, 1, 0], [], []>} : vector<16x8xf32>, vector<16x8xf32>, vector<16x16xf32> -> vector<16x16xf32>
    %45 = vector.extract_strided_slice %35 {offsets = [0, 24], sizes = [16, 8], strides = [1, 1]} : vector<16x96xf32> to vector<16x8xf32>
    %46 = vector.extract_strided_slice %35 {offsets = [0, 56], sizes = [16, 8], strides = [1, 1]} : vector<16x96xf32> to vector<16x8xf32>
    %cst_18 = arith.constant dense<0.000000e+00> : vector<16x16xf32>
    %47 = tpu.matmul %45, %46, %cst_18 {dimension_numbers = #tpu.dot_dimension_numbers<[1], [1], [0], [0], [0, 0, 1, 0], [], []>} : vector<16x8xf32>, vector<16x8xf32>, vector<16x16xf32> -> vector<16x16xf32>
    %48 = tpu.concatenate %38, %41, %44, %47 in 0 : vector<16x16xf32>, vector<16x16xf32>, vector<16x16xf32>, vector<16x16xf32> -> vector<64x16xf32>
    %cst_19 = arith.constant 0.353553385 : f32
    %49 = vector.broadcast %cst_19 : f32 to vector<64x16xf32>
    %50 = arith.mulf %48, %49 : vector<64x16xf32>
    %51 = arith.addf %50, %28 : vector<64x16xf32>
    %cst_20 = arith.constant dense<0xFF800000> : vector<64xf32>
    %52 = vector.multi_reduction <maximumf>, %51, %cst_20 [1] : vector<64x16xf32> to vector<64xf32>
    %53 = vector.shape_cast %52 : vector<64xf32> to vector<64x1xf32>
    %54 = vector.broadcast %53 : vector<64x1xf32> to vector<64x16xf32>
    %55 = arith.subf %51, %54 : vector<64x16xf32>
    %56 = math.exp %55 : vector<64x16xf32>
    %cst_21 = arith.constant dense<0.000000e+00> : vector<64xf32>
    %57 = vector.multi_reduction <add>, %56, %cst_21 [1] : vector<64x16xf32> to vector<64xf32>
    %58 = vector.shape_cast %57 : vector<64xf32> to vector<64x1xf32>
    %59 = tpu.reciprocal %58 : vector<64x1xf32> -> vector<64x1xf32>
    %60 = vector.broadcast %59 : vector<64x1xf32> to vector<64x16xf32>
    %61 = arith.mulf %56, %60 : vector<64x16xf32>
    %62 = vector.extract_strided_slice %61 {offsets = [0, 0], sizes = [16, 16], strides = [1, 1]} : vector<64x16xf32> to vector<16x16xf32>
    %63 = vector.extract_strided_slice %35 {offsets = [0, 64], sizes = [16, 8], strides = [1, 1]} : vector<16x96xf32> to vector<16x8xf32>
    %cst_22 = arith.constant dense<0.000000e+00> : vector<16x8xf32>
    %64 = tpu.matmul %62, %63, %cst_22 {dimension_numbers = #tpu.dot_dimension_numbers<[1], [0], [0], [1], [0, 0, 1, 1], [], []>} : vector<16x16xf32>, vector<16x8xf32>, vector<16x8xf32> -> vector<16x8xf32>
    %c0_23 = arith.constant 0 : index
    %c0_24 = arith.constant 0 : index
    %c0_25 = arith.constant 0 : index
    %65 = vector.load %arg4[%c0_23, %c0_24, %c0_25] : memref<2x166x32xf32, #tpu.memory_space<vmem>>, vector<1x8x32xf32>
    %66 = vector.shape_cast %65 : vector<1x8x32xf32> to vector<8x32xf32>
    %cst_26 = arith.constant dense<0.000000e+00> : vector<16x32xf32>
    %67 = tpu.matmul %64, %66, %cst_26 {dimension_numbers = #tpu.dot_dimension_numbers<[1], [0], [0], [1], [0, 0, 1, 1], [], []>} : vector<16x8xf32>, vector<8x32xf32>, vector<16x32xf32> -> vector<16x32xf32>
    %68 = vector.extract_strided_slice %61 {offsets = [16, 0], sizes = [16, 16], strides = [1, 1]} : vector<64x16xf32> to vector<16x16xf32>
    %69 = vector.extract_strided_slice %35 {offsets = [0, 72], sizes = [16, 8], strides = [1, 1]} : vector<16x96xf32> to vector<16x8xf32>
    %cst_27 = arith.constant dense<0.000000e+00> : vector<16x8xf32>
    %70 = tpu.matmul %68, %69, %cst_27 {dimension_numbers = #tpu.dot_dimension_numbers<[1], [0], [0], [1], [0, 0, 1, 1], [], []>} : vector<16x16xf32>, vector<16x8xf32>, vector<16x8xf32> -> vector<16x8xf32>
    %c0_28 = arith.constant 0 : index
    %c8 = arith.constant 8 : index
    %c0_29 = arith.constant 0 : index
    %71 = vector.load %arg4[%c0_28, %c8, %c0_29] : memref<2x166x32xf32, #tpu.memory_space<vmem>>, vector<1x8x32xf32>
    %72 = vector.shape_cast %71 : vector<1x8x32xf32> to vector<8x32xf32>
    %cst_30 = arith.constant dense<0.000000e+00> : vector<16x32xf32>
    %73 = tpu.matmul %70, %72, %cst_30 {dimension_numbers = #tpu.dot_dimension_numbers<[1], [0], [0], [1], [0, 0, 1, 1], [], []>} : vector<16x8xf32>, vector<8x32xf32>, vector<16x32xf32> -> vector<16x32xf32>
    %74 = arith.addf %67, %73 : vector<16x32xf32>
    %75 = vector.extract_strided_slice %61 {offsets = [32, 0], sizes = [16, 16], strides = [1, 1]} : vector<64x16xf32> to vector<16x16xf32>
    %76 = vector.extract_strided_slice %35 {offsets = [0, 80], sizes = [16, 8], strides = [1, 1]} : vector<16x96xf32> to vector<16x8xf32>
    %cst_31 = arith.constant dense<0.000000e+00> : vector<16x8xf32>
    %77 = tpu.matmul %75, %76, %cst_31 {dimension_numbers = #tpu.dot_dimension_numbers<[1], [0], [0], [1], [0, 0, 1, 1], [], []>} : vector<16x16xf32>, vector<16x8xf32>, vector<16x8xf32> -> vector<16x8xf32>
    %c0_32 = arith.constant 0 : index
    %c16 = arith.constant 16 : index
    %c0_33 = arith.constant 0 : index
    %78 = vector.load %arg4[%c0_32, %c16, %c0_33] : memref<2x166x32xf32, #tpu.memory_space<vmem>>, vector<1x8x32xf32>
    %79 = vector.shape_cast %78 : vector<1x8x32xf32> to vector<8x32xf32>
    %cst_34 = arith.constant dense<0.000000e+00> : vector<16x32xf32>
    %80 = tpu.matmul %77, %79, %cst_34 {dimension_numbers = #tpu.dot_dimension_numbers<[1], [0], [0], [1], [0, 0, 1, 1], [], []>} : vector<16x8xf32>, vector<8x32xf32>, vector<16x32xf32> -> vector<16x32xf32>
    %81 = arith.addf %74, %80 : vector<16x32xf32>
    %82 = vector.extract_strided_slice %61 {offsets = [48, 0], sizes = [16, 16], strides = [1, 1]} : vector<64x16xf32> to vector<16x16xf32>
    %83 = vector.extract_strided_slice %35 {offsets = [0, 88], sizes = [16, 8], strides = [1, 1]} : vector<16x96xf32> to vector<16x8xf32>
    %cst_35 = arith.constant dense<0.000000e+00> : vector<16x8xf32>
    %84 = tpu.matmul %82, %83, %cst_35 {dimension_numbers = #tpu.dot_dimension_numbers<[1], [0], [0], [1], [0, 0, 1, 1], [], []>} : vector<16x16xf32>, vector<16x8xf32>, vector<16x8xf32> -> vector<16x8xf32>
    %c0_36 = arith.constant 0 : index
    %c24 = arith.constant 24 : index
    %c0_37 = arith.constant 0 : index
    %85 = vector.load %arg4[%c0_36, %c24, %c0_37] : memref<2x166x32xf32, #tpu.memory_space<vmem>>, vector<1x8x32xf32>
    %86 = vector.shape_cast %85 : vector<1x8x32xf32> to vector<8x32xf32>
    %cst_38 = arith.constant dense<0.000000e+00> : vector<16x32xf32>
    %87 = tpu.matmul %84, %86, %cst_38 {dimension_numbers = #tpu.dot_dimension_numbers<[1], [0], [0], [1], [0, 0, 1, 1], [], []>} : vector<16x8xf32>, vector<8x32xf32>, vector<16x32xf32> -> vector<16x32xf32>
    %88 = arith.addf %81, %87 : vector<16x32xf32>
    %c0_39 = arith.constant 0 : index
    %c160 = arith.constant 160 : index
    %c0_40 = arith.constant 0 : index
    %89 = vector.load %arg4[%c0_39, %c160, %c0_40] : memref<2x166x32xf32, #tpu.memory_space<vmem>>, vector<1x1x32xf32>
    %90 = vector.shape_cast %89 : vector<1x1x32xf32> to vector<1x32xf32>
    %91 = vector.broadcast %90 : vector<1x32xf32> to vector<16x32xf32>
    %92 = arith.addf %88, %91 : vector<16x32xf32>
    %c0_41 = arith.constant 0 : index
    %c162 = arith.constant 162 : index
    %c0_42 = arith.constant 0 : index
    %93 = vector.load %arg4[%c0_41, %c162, %c0_42] : memref<2x166x32xf32, #tpu.memory_space<vmem>>, vector<1x1x32xf32>
    %94 = vector.shape_cast %93 : vector<1x1x32xf32> to vector<1x32xf32>
    %c0_43 = arith.constant 0 : index
    %c163 = arith.constant 163 : index
    %c0_44 = arith.constant 0 : index
    %95 = vector.load %arg4[%c0_43, %c163, %c0_44] : memref<2x166x32xf32, #tpu.memory_space<vmem>>, vector<1x1x32xf32>
    %96 = vector.shape_cast %95 : vector<1x1x32xf32> to vector<1x32xf32>
    %cst_45 = arith.constant dense<0.000000e+00> : vector<16xf32>
    %97 = vector.multi_reduction <add>, %92, %cst_45 [1] : vector<16x32xf32> to vector<16xf32>
    %98 = vector.shape_cast %97 : vector<16xf32> to vector<16x1xf32>
    %cst_46 = arith.constant 3.200000e+01 : f32
    %99 = vector.broadcast %cst_46 : f32 to vector<16x1xf32>
    %100 = arith.divf %98, %99 : vector<16x1xf32>
    %101 = arith.mulf %92, %92 : vector<16x32xf32>
    %cst_47 = arith.constant dense<0.000000e+00> : vector<16xf32>
    %102 = vector.multi_reduction <add>, %101, %cst_47 [1] : vector<16x32xf32> to vector<16xf32>
    %103 = vector.shape_cast %102 : vector<16xf32> to vector<16x1xf32>
    %cst_48 = arith.constant 3.200000e+01 : f32
    %104 = vector.broadcast %cst_48 : f32 to vector<16x1xf32>
    %105 = arith.divf %103, %104 : vector<16x1xf32>
    %106 = arith.mulf %100, %100 : vector<16x1xf32>
    %107 = arith.subf %105, %106 : vector<16x1xf32>
    %108 = vector.broadcast %100 : vector<16x1xf32> to vector<16x32xf32>
    %109 = arith.subf %92, %108 : vector<16x32xf32>
    %cst_49 = arith.constant 9.99999974E-6 : f32
    %110 = vector.broadcast %cst_49 : f32 to vector<16x1xf32>
    %111 = arith.addf %107, %110 : vector<16x1xf32>
    %112 = math.rsqrt %111 : vector<16x1xf32>
    %113 = vector.broadcast %112 : vector<16x1xf32> to vector<16x32xf32>
    %114 = arith.mulf %109, %113 : vector<16x32xf32>
    %115 = vector.broadcast %94 : vector<1x32xf32> to vector<16x32xf32>
    %116 = arith.mulf %114, %115 : vector<16x32xf32>
    %117 = vector.broadcast %96 : vector<1x32xf32> to vector<16x32xf32>
    %118 = arith.addf %116, %117 : vector<16x32xf32>
    %119 = arith.addf %118, %10 : vector<16x32xf32>
    %c0_50 = arith.constant 0 : index
    %c0_51 = arith.constant 0 : index
    %c0_52 = arith.constant 0 : index
    %120 = vector.load %arg5[%c0_50, %c0_51, %c0_52] : memref<3x33x128xf32, #tpu.memory_space<vmem>>, vector<1x32x128xf32>
    %121 = vector.shape_cast %120 : vector<1x32x128xf32> to vector<32x128xf32>
    %c0_53 = arith.constant 0 : index
    %c32_54 = arith.constant 32 : index
    %c0_55 = arith.constant 0 : index
    %122 = vector.load %arg5[%c0_53, %c32_54, %c0_55] : memref<3x33x128xf32, #tpu.memory_space<vmem>>, vector<1x1x128xf32>
    %123 = vector.shape_cast %122 : vector<1x1x128xf32> to vector<1x128xf32>
    %cst_56 = arith.constant dense<0.000000e+00> : vector<16x128xf32>
    %124 = tpu.matmul %119, %121, %cst_56 {dimension_numbers = #tpu.dot_dimension_numbers<[1], [0], [0], [1], [0, 0, 1, 1], [], []>} : vector<16x32xf32>, vector<32x128xf32>, vector<16x128xf32> -> vector<16x128xf32>
    %125 = vector.broadcast %123 : vector<1x128xf32> to vector<16x128xf32>
    %126 = arith.addf %124, %125 : vector<16x128xf32>
    %cst_57 = arith.constant 0.000000e+00 : f32
    %127 = vector.broadcast %cst_57 : f32 to vector<16x128xf32>
    %128 = arith.maximumf %126, %127 : vector<16x128xf32>
    %c0_58 = arith.constant 0 : index
    %c32_59 = arith.constant 32 : index
    %c0_60 = arith.constant 0 : index
    %129 = vector.load %arg4[%c0_58, %c32_59, %c0_60] : memref<2x166x32xf32, #tpu.memory_space<vmem>>, vector<1x128x32xf32>
    %130 = vector.shape_cast %129 : vector<1x128x32xf32> to vector<128x32xf32>
    %cst_61 = arith.constant dense<0.000000e+00> : vector<16x32xf32>
    %131 = tpu.matmul %128, %130, %cst_61 {dimension_numbers = #tpu.dot_dimension_numbers<[1], [0], [0], [1], [0, 0, 1, 1], [], []>} : vector<16x128xf32>, vector<128x32xf32>, vector<16x32xf32> -> vector<16x32xf32>
    %c0_62 = arith.constant 0 : index
    %c161 = arith.constant 161 : index
    %c0_63 = arith.constant 0 : index
    %132 = vector.load %arg4[%c0_62, %c161, %c0_63] : memref<2x166x32xf32, #tpu.memory_space<vmem>>, vector<1x1x32xf32>
    %133 = vector.shape_cast %132 : vector<1x1x32xf32> to vector<1x32xf32>
    %134 = vector.broadcast %133 : vector<1x32xf32> to vector<16x32xf32>
    %135 = arith.addf %131, %134 : vector<16x32xf32>
    %c0_64 = arith.constant 0 : index
    %c164 = arith.constant 164 : index
    %c0_65 = arith.constant 0 : index
    %136 = vector.load %arg4[%c0_64, %c164, %c0_65] : memref<2x166x32xf32, #tpu.memory_space<vmem>>, vector<1x1x32xf32>
    %137 = vector.shape_cast %136 : vector<1x1x32xf32> to vector<1x32xf32>
    %c0_66 = arith.constant 0 : index
    %c165 = arith.constant 165 : index
    %c0_67 = arith.constant 0 : index
    %138 = vector.load %arg4[%c0_66, %c165, %c0_67] : memref<2x166x32xf32, #tpu.memory_space<vmem>>, vector<1x1x32xf32>
    %139 = vector.shape_cast %138 : vector<1x1x32xf32> to vector<1x32xf32>
    %cst_68 = arith.constant dense<0.000000e+00> : vector<16xf32>
    %140 = vector.multi_reduction <add>, %135, %cst_68 [1] : vector<16x32xf32> to vector<16xf32>
    %141 = vector.shape_cast %140 : vector<16xf32> to vector<16x1xf32>
    %cst_69 = arith.constant 3.200000e+01 : f32
    %142 = vector.broadcast %cst_69 : f32 to vector<16x1xf32>
    %143 = arith.divf %141, %142 : vector<16x1xf32>
    %144 = arith.mulf %135, %135 : vector<16x32xf32>
    %cst_70 = arith.constant dense<0.000000e+00> : vector<16xf32>
    %145 = vector.multi_reduction <add>, %144, %cst_70 [1] : vector<16x32xf32> to vector<16xf32>
    %146 = vector.shape_cast %145 : vector<16xf32> to vector<16x1xf32>
    %cst_71 = arith.constant 3.200000e+01 : f32
    %147 = vector.broadcast %cst_71 : f32 to vector<16x1xf32>
    %148 = arith.divf %146, %147 : vector<16x1xf32>
    %149 = arith.mulf %143, %143 : vector<16x1xf32>
    %150 = arith.subf %148, %149 : vector<16x1xf32>
    %151 = vector.broadcast %143 : vector<16x1xf32> to vector<16x32xf32>
    %152 = arith.subf %135, %151 : vector<16x32xf32>
    %cst_72 = arith.constant 9.99999974E-6 : f32
    %153 = vector.broadcast %cst_72 : f32 to vector<16x1xf32>
    %154 = arith.addf %150, %153 : vector<16x1xf32>
    %155 = math.rsqrt %154 : vector<16x1xf32>
    %156 = vector.broadcast %155 : vector<16x1xf32> to vector<16x32xf32>
    %157 = arith.mulf %152, %156 : vector<16x32xf32>
    %158 = vector.broadcast %137 : vector<1x32xf32> to vector<16x32xf32>
    %159 = arith.mulf %157, %158 : vector<16x32xf32>
    %160 = vector.broadcast %139 : vector<1x32xf32> to vector<16x32xf32>
    %161 = arith.addf %159, %160 : vector<16x32xf32>
    %162 = arith.addf %161, %119 : vector<16x32xf32>
    %c1 = arith.constant 1 : index
    %c0_73 = arith.constant 0 : index
    %c0_74 = arith.constant 0 : index
    %163 = vector.load %arg3[%c1, %c0_73, %c0_74] : memref<2x33x96xf32, #tpu.memory_space<vmem>>, vector<1x32x96xf32>
    %164 = vector.shape_cast %163 : vector<1x32x96xf32> to vector<32x96xf32>
    %c1_75 = arith.constant 1 : index
    %c32_76 = arith.constant 32 : index
    %c0_77 = arith.constant 0 : index
    %165 = vector.load %arg3[%c1_75, %c32_76, %c0_77] : memref<2x33x96xf32, #tpu.memory_space<vmem>>, vector<1x1x96xf32>
    %166 = vector.shape_cast %165 : vector<1x1x96xf32> to vector<1x96xf32>
    %cst_78 = arith.constant dense<0.000000e+00> : vector<16x96xf32>
    %167 = tpu.matmul %10, %164, %cst_78 {dimension_numbers = #tpu.dot_dimension_numbers<[1], [0], [0], [1], [0, 0, 1, 1], [], []>} : vector<16x32xf32>, vector<32x96xf32>, vector<16x96xf32> -> vector<16x96xf32>
    %168 = vector.broadcast %166 : vector<1x96xf32> to vector<16x96xf32>
    %169 = arith.addf %167, %168 : vector<16x96xf32>
    %170 = vector.extract_strided_slice %169 {offsets = [0, 0], sizes = [16, 8], strides = [1, 1]} : vector<16x96xf32> to vector<16x8xf32>
    %171 = vector.extract_strided_slice %169 {offsets = [0, 32], sizes = [16, 8], strides = [1, 1]} : vector<16x96xf32> to vector<16x8xf32>
    %cst_79 = arith.constant dense<0.000000e+00> : vector<16x16xf32>
    %172 = tpu.matmul %170, %171, %cst_79 {dimension_numbers = #tpu.dot_dimension_numbers<[1], [1], [0], [0], [0, 0, 1, 0], [], []>} : vector<16x8xf32>, vector<16x8xf32>, vector<16x16xf32> -> vector<16x16xf32>
    %173 = vector.extract_strided_slice %169 {offsets = [0, 8], sizes = [16, 8], strides = [1, 1]} : vector<16x96xf32> to vector<16x8xf32>
    %174 = vector.extract_strided_slice %169 {offsets = [0, 40], sizes = [16, 8], strides = [1, 1]} : vector<16x96xf32> to vector<16x8xf32>
    %cst_80 = arith.constant dense<0.000000e+00> : vector<16x16xf32>
    %175 = tpu.matmul %173, %174, %cst_80 {dimension_numbers = #tpu.dot_dimension_numbers<[1], [1], [0], [0], [0, 0, 1, 0], [], []>} : vector<16x8xf32>, vector<16x8xf32>, vector<16x16xf32> -> vector<16x16xf32>
    %176 = vector.extract_strided_slice %169 {offsets = [0, 16], sizes = [16, 8], strides = [1, 1]} : vector<16x96xf32> to vector<16x8xf32>
    %177 = vector.extract_strided_slice %169 {offsets = [0, 48], sizes = [16, 8], strides = [1, 1]} : vector<16x96xf32> to vector<16x8xf32>
    %cst_81 = arith.constant dense<0.000000e+00> : vector<16x16xf32>
    %178 = tpu.matmul %176, %177, %cst_81 {dimension_numbers = #tpu.dot_dimension_numbers<[1], [1], [0], [0], [0, 0, 1, 0], [], []>} : vector<16x8xf32>, vector<16x8xf32>, vector<16x16xf32> -> vector<16x16xf32>
    %179 = vector.extract_strided_slice %169 {offsets = [0, 24], sizes = [16, 8], strides = [1, 1]} : vector<16x96xf32> to vector<16x8xf32>
    %180 = vector.extract_strided_slice %169 {offsets = [0, 56], sizes = [16, 8], strides = [1, 1]} : vector<16x96xf32> to vector<16x8xf32>
    %cst_82 = arith.constant dense<0.000000e+00> : vector<16x16xf32>
    %181 = tpu.matmul %179, %180, %cst_82 {dimension_numbers = #tpu.dot_dimension_numbers<[1], [1], [0], [0], [0, 0, 1, 0], [], []>} : vector<16x8xf32>, vector<16x8xf32>, vector<16x16xf32> -> vector<16x16xf32>
    %182 = tpu.concatenate %172, %175, %178, %181 in 0 : vector<16x16xf32>, vector<16x16xf32>, vector<16x16xf32>, vector<16x16xf32> -> vector<64x16xf32>
    %cst_83 = arith.constant 0.353553385 : f32
    %183 = vector.broadcast %cst_83 : f32 to vector<64x16xf32>
    %184 = arith.mulf %182, %183 : vector<64x16xf32>
    %185 = arith.addf %184, %28 : vector<64x16xf32>
    %cst_84 = arith.constant dense<0xFF800000> : vector<64xf32>
    %186 = vector.multi_reduction <maximumf>, %185, %cst_84 [1] : vector<64x16xf32> to vector<64xf32>
    %187 = vector.shape_cast %186 : vector<64xf32> to vector<64x1xf32>
    %188 = vector.broadcast %187 : vector<64x1xf32> to vector<64x16xf32>
    %189 = arith.subf %185, %188 : vector<64x16xf32>
    %190 = math.exp %189 : vector<64x16xf32>
    %cst_85 = arith.constant dense<0.000000e+00> : vector<64xf32>
    %191 = vector.multi_reduction <add>, %190, %cst_85 [1] : vector<64x16xf32> to vector<64xf32>
    %192 = vector.shape_cast %191 : vector<64xf32> to vector<64x1xf32>
    %193 = tpu.reciprocal %192 : vector<64x1xf32> -> vector<64x1xf32>
    %194 = vector.broadcast %193 : vector<64x1xf32> to vector<64x16xf32>
    %195 = arith.mulf %190, %194 : vector<64x16xf32>
    %196 = vector.extract_strided_slice %195 {offsets = [0, 0], sizes = [16, 16], strides = [1, 1]} : vector<64x16xf32> to vector<16x16xf32>
    %197 = vector.extract_strided_slice %169 {offsets = [0, 64], sizes = [16, 8], strides = [1, 1]} : vector<16x96xf32> to vector<16x8xf32>
    %cst_86 = arith.constant dense<0.000000e+00> : vector<16x8xf32>
    %198 = tpu.matmul %196, %197, %cst_86 {dimension_numbers = #tpu.dot_dimension_numbers<[1], [0], [0], [1], [0, 0, 1, 1], [], []>} : vector<16x16xf32>, vector<16x8xf32>, vector<16x8xf32> -> vector<16x8xf32>
    %c1_87 = arith.constant 1 : index
    %c0_88 = arith.constant 0 : index
    %c0_89 = arith.constant 0 : index
    %199 = vector.load %arg4[%c1_87, %c0_88, %c0_89] : memref<2x166x32xf32, #tpu.memory_space<vmem>>, vector<1x8x32xf32>
    %200 = vector.shape_cast %199 : vector<1x8x32xf32> to vector<8x32xf32>
    %cst_90 = arith.constant dense<0.000000e+00> : vector<16x32xf32>
    %201 = tpu.matmul %198, %200, %cst_90 {dimension_numbers = #tpu.dot_dimension_numbers<[1], [0], [0], [1], [0, 0, 1, 1], [], []>} : vector<16x8xf32>, vector<8x32xf32>, vector<16x32xf32> -> vector<16x32xf32>
    %202 = vector.extract_strided_slice %195 {offsets = [16, 0], sizes = [16, 16], strides = [1, 1]} : vector<64x16xf32> to vector<16x16xf32>
    %203 = vector.extract_strided_slice %169 {offsets = [0, 72], sizes = [16, 8], strides = [1, 1]} : vector<16x96xf32> to vector<16x8xf32>
    %cst_91 = arith.constant dense<0.000000e+00> : vector<16x8xf32>
    %204 = tpu.matmul %202, %203, %cst_91 {dimension_numbers = #tpu.dot_dimension_numbers<[1], [0], [0], [1], [0, 0, 1, 1], [], []>} : vector<16x16xf32>, vector<16x8xf32>, vector<16x8xf32> -> vector<16x8xf32>
    %c1_92 = arith.constant 1 : index
    %c8_93 = arith.constant 8 : index
    %c0_94 = arith.constant 0 : index
    %205 = vector.load %arg4[%c1_92, %c8_93, %c0_94] : memref<2x166x32xf32, #tpu.memory_space<vmem>>, vector<1x8x32xf32>
    %206 = vector.shape_cast %205 : vector<1x8x32xf32> to vector<8x32xf32>
    %cst_95 = arith.constant dense<0.000000e+00> : vector<16x32xf32>
    %207 = tpu.matmul %204, %206, %cst_95 {dimension_numbers = #tpu.dot_dimension_numbers<[1], [0], [0], [1], [0, 0, 1, 1], [], []>} : vector<16x8xf32>, vector<8x32xf32>, vector<16x32xf32> -> vector<16x32xf32>
    %208 = arith.addf %201, %207 : vector<16x32xf32>
    %209 = vector.extract_strided_slice %195 {offsets = [32, 0], sizes = [16, 16], strides = [1, 1]} : vector<64x16xf32> to vector<16x16xf32>
    %210 = vector.extract_strided_slice %169 {offsets = [0, 80], sizes = [16, 8], strides = [1, 1]} : vector<16x96xf32> to vector<16x8xf32>
    %cst_96 = arith.constant dense<0.000000e+00> : vector<16x8xf32>
    %211 = tpu.matmul %209, %210, %cst_96 {dimension_numbers = #tpu.dot_dimension_numbers<[1], [0], [0], [1], [0, 0, 1, 1], [], []>} : vector<16x16xf32>, vector<16x8xf32>, vector<16x8xf32> -> vector<16x8xf32>
    %c1_97 = arith.constant 1 : index
    %c16_98 = arith.constant 16 : index
    %c0_99 = arith.constant 0 : index
    %212 = vector.load %arg4[%c1_97, %c16_98, %c0_99] : memref<2x166x32xf32, #tpu.memory_space<vmem>>, vector<1x8x32xf32>
    %213 = vector.shape_cast %212 : vector<1x8x32xf32> to vector<8x32xf32>
    %cst_100 = arith.constant dense<0.000000e+00> : vector<16x32xf32>
    %214 = tpu.matmul %211, %213, %cst_100 {dimension_numbers = #tpu.dot_dimension_numbers<[1], [0], [0], [1], [0, 0, 1, 1], [], []>} : vector<16x8xf32>, vector<8x32xf32>, vector<16x32xf32> -> vector<16x32xf32>
    %215 = arith.addf %208, %214 : vector<16x32xf32>
    %216 = vector.extract_strided_slice %195 {offsets = [48, 0], sizes = [16, 16], strides = [1, 1]} : vector<64x16xf32> to vector<16x16xf32>
    %217 = vector.extract_strided_slice %169 {offsets = [0, 88], sizes = [16, 8], strides = [1, 1]} : vector<16x96xf32> to vector<16x8xf32>
    %cst_101 = arith.constant dense<0.000000e+00> : vector<16x8xf32>
    %218 = tpu.matmul %216, %217, %cst_101 {dimension_numbers = #tpu.dot_dimension_numbers<[1], [0], [0], [1], [0, 0, 1, 1], [], []>} : vector<16x16xf32>, vector<16x8xf32>, vector<16x8xf32> -> vector<16x8xf32>
    %c1_102 = arith.constant 1 : index
    %c24_103 = arith.constant 24 : index
    %c0_104 = arith.constant 0 : index
    %219 = vector.load %arg4[%c1_102, %c24_103, %c0_104] : memref<2x166x32xf32, #tpu.memory_space<vmem>>, vector<1x8x32xf32>
    %220 = vector.shape_cast %219 : vector<1x8x32xf32> to vector<8x32xf32>
    %cst_105 = arith.constant dense<0.000000e+00> : vector<16x32xf32>
    %221 = tpu.matmul %218, %220, %cst_105 {dimension_numbers = #tpu.dot_dimension_numbers<[1], [0], [0], [1], [0, 0, 1, 1], [], []>} : vector<16x8xf32>, vector<8x32xf32>, vector<16x32xf32> -> vector<16x32xf32>
    %222 = arith.addf %215, %221 : vector<16x32xf32>
    %c1_106 = arith.constant 1 : index
    %c160_107 = arith.constant 160 : index
    %c0_108 = arith.constant 0 : index
    %223 = vector.load %arg4[%c1_106, %c160_107, %c0_108] : memref<2x166x32xf32, #tpu.memory_space<vmem>>, vector<1x1x32xf32>
    %224 = vector.shape_cast %223 : vector<1x1x32xf32> to vector<1x32xf32>
    %225 = vector.broadcast %224 : vector<1x32xf32> to vector<16x32xf32>
    %226 = arith.addf %222, %225 : vector<16x32xf32>
    %c1_109 = arith.constant 1 : index
    %c162_110 = arith.constant 162 : index
    %c0_111 = arith.constant 0 : index
    %227 = vector.load %arg4[%c1_109, %c162_110, %c0_111] : memref<2x166x32xf32, #tpu.memory_space<vmem>>, vector<1x1x32xf32>
    %228 = vector.shape_cast %227 : vector<1x1x32xf32> to vector<1x32xf32>
    %c1_112 = arith.constant 1 : index
    %c163_113 = arith.constant 163 : index
    %c0_114 = arith.constant 0 : index
    %229 = vector.load %arg4[%c1_112, %c163_113, %c0_114] : memref<2x166x32xf32, #tpu.memory_space<vmem>>, vector<1x1x32xf32>
    %230 = vector.shape_cast %229 : vector<1x1x32xf32> to vector<1x32xf32>
    %cst_115 = arith.constant dense<0.000000e+00> : vector<16xf32>
    %231 = vector.multi_reduction <add>, %226, %cst_115 [1] : vector<16x32xf32> to vector<16xf32>
    %232 = vector.shape_cast %231 : vector<16xf32> to vector<16x1xf32>
    %cst_116 = arith.constant 3.200000e+01 : f32
    %233 = vector.broadcast %cst_116 : f32 to vector<16x1xf32>
    %234 = arith.divf %232, %233 : vector<16x1xf32>
    %235 = arith.mulf %226, %226 : vector<16x32xf32>
    %cst_117 = arith.constant dense<0.000000e+00> : vector<16xf32>
    %236 = vector.multi_reduction <add>, %235, %cst_117 [1] : vector<16x32xf32> to vector<16xf32>
    %237 = vector.shape_cast %236 : vector<16xf32> to vector<16x1xf32>
    %cst_118 = arith.constant 3.200000e+01 : f32
    %238 = vector.broadcast %cst_118 : f32 to vector<16x1xf32>
    %239 = arith.divf %237, %238 : vector<16x1xf32>
    %240 = arith.mulf %234, %234 : vector<16x1xf32>
    %241 = arith.subf %239, %240 : vector<16x1xf32>
    %242 = vector.broadcast %234 : vector<16x1xf32> to vector<16x32xf32>
    %243 = arith.subf %226, %242 : vector<16x32xf32>
    %cst_119 = arith.constant 9.99999974E-6 : f32
    %244 = vector.broadcast %cst_119 : f32 to vector<16x1xf32>
    %245 = arith.addf %241, %244 : vector<16x1xf32>
    %246 = math.rsqrt %245 : vector<16x1xf32>
    %247 = vector.broadcast %246 : vector<16x1xf32> to vector<16x32xf32>
    %248 = arith.mulf %243, %247 : vector<16x32xf32>
    %249 = vector.broadcast %228 : vector<1x32xf32> to vector<16x32xf32>
    %250 = arith.mulf %248, %249 : vector<16x32xf32>
    %251 = vector.broadcast %230 : vector<1x32xf32> to vector<16x32xf32>
    %252 = arith.addf %250, %251 : vector<16x32xf32>
    %253 = arith.addf %252, %162 : vector<16x32xf32>
    %c1_120 = arith.constant 1 : index
    %c0_121 = arith.constant 0 : index
    %c0_122 = arith.constant 0 : index
    %254 = vector.load %arg5[%c1_120, %c0_121, %c0_122] : memref<3x33x128xf32, #tpu.memory_space<vmem>>, vector<1x32x128xf32>
    %255 = vector.shape_cast %254 : vector<1x32x128xf32> to vector<32x128xf32>
    %c1_123 = arith.constant 1 : index
    %c32_124 = arith.constant 32 : index
    %c0_125 = arith.constant 0 : index
    %256 = vector.load %arg5[%c1_123, %c32_124, %c0_125] : memref<3x33x128xf32, #tpu.memory_space<vmem>>, vector<1x1x128xf32>
    %257 = vector.shape_cast %256 : vector<1x1x128xf32> to vector<1x128xf32>
    %cst_126 = arith.constant dense<0.000000e+00> : vector<16x128xf32>
    %258 = tpu.matmul %253, %255, %cst_126 {dimension_numbers = #tpu.dot_dimension_numbers<[1], [0], [0], [1], [0, 0, 1, 1], [], []>} : vector<16x32xf32>, vector<32x128xf32>, vector<16x128xf32> -> vector<16x128xf32>
    %259 = vector.broadcast %257 : vector<1x128xf32> to vector<16x128xf32>
    %260 = arith.addf %258, %259 : vector<16x128xf32>
    %cst_127 = arith.constant 0.000000e+00 : f32
    %261 = vector.broadcast %cst_127 : f32 to vector<16x128xf32>
    %262 = arith.maximumf %260, %261 : vector<16x128xf32>
    %c1_128 = arith.constant 1 : index
    %c32_129 = arith.constant 32 : index
    %c0_130 = arith.constant 0 : index
    %263 = vector.load %arg4[%c1_128, %c32_129, %c0_130] : memref<2x166x32xf32, #tpu.memory_space<vmem>>, vector<1x128x32xf32>
    %264 = vector.shape_cast %263 : vector<1x128x32xf32> to vector<128x32xf32>
    %cst_131 = arith.constant dense<0.000000e+00> : vector<16x32xf32>
    %265 = tpu.matmul %262, %264, %cst_131 {dimension_numbers = #tpu.dot_dimension_numbers<[1], [0], [0], [1], [0, 0, 1, 1], [], []>} : vector<16x128xf32>, vector<128x32xf32>, vector<16x32xf32> -> vector<16x32xf32>
    %c1_132 = arith.constant 1 : index
    %c161_133 = arith.constant 161 : index
    %c0_134 = arith.constant 0 : index
    %266 = vector.load %arg4[%c1_132, %c161_133, %c0_134] : memref<2x166x32xf32, #tpu.memory_space<vmem>>, vector<1x1x32xf32>
    %267 = vector.shape_cast %266 : vector<1x1x32xf32> to vector<1x32xf32>
    %268 = vector.broadcast %267 : vector<1x32xf32> to vector<16x32xf32>
    %269 = arith.addf %265, %268 : vector<16x32xf32>
    %c1_135 = arith.constant 1 : index
    %c164_136 = arith.constant 164 : index
    %c0_137 = arith.constant 0 : index
    %270 = vector.load %arg4[%c1_135, %c164_136, %c0_137] : memref<2x166x32xf32, #tpu.memory_space<vmem>>, vector<1x1x32xf32>
    %271 = vector.shape_cast %270 : vector<1x1x32xf32> to vector<1x32xf32>
    %c1_138 = arith.constant 1 : index
    %c165_139 = arith.constant 165 : index
    %c0_140 = arith.constant 0 : index
    %272 = vector.load %arg4[%c1_138, %c165_139, %c0_140] : memref<2x166x32xf32, #tpu.memory_space<vmem>>, vector<1x1x32xf32>
    %273 = vector.shape_cast %272 : vector<1x1x32xf32> to vector<1x32xf32>
    %cst_141 = arith.constant dense<0.000000e+00> : vector<16xf32>
    %274 = vector.multi_reduction <add>, %269, %cst_141 [1] : vector<16x32xf32> to vector<16xf32>
    %275 = vector.shape_cast %274 : vector<16xf32> to vector<16x1xf32>
    %cst_142 = arith.constant 3.200000e+01 : f32
    %276 = vector.broadcast %cst_142 : f32 to vector<16x1xf32>
    %277 = arith.divf %275, %276 : vector<16x1xf32>
    %278 = arith.mulf %269, %269 : vector<16x32xf32>
    %cst_143 = arith.constant dense<0.000000e+00> : vector<16xf32>
    %279 = vector.multi_reduction <add>, %278, %cst_143 [1] : vector<16x32xf32> to vector<16xf32>
    %280 = vector.shape_cast %279 : vector<16xf32> to vector<16x1xf32>
    %cst_144 = arith.constant 3.200000e+01 : f32
    %281 = vector.broadcast %cst_144 : f32 to vector<16x1xf32>
    %282 = arith.divf %280, %281 : vector<16x1xf32>
    %283 = arith.mulf %277, %277 : vector<16x1xf32>
    %284 = arith.subf %282, %283 : vector<16x1xf32>
    %285 = vector.broadcast %277 : vector<16x1xf32> to vector<16x32xf32>
    %286 = arith.subf %269, %285 : vector<16x32xf32>
    %cst_145 = arith.constant 9.99999974E-6 : f32
    %287 = vector.broadcast %cst_145 : f32 to vector<16x1xf32>
    %288 = arith.addf %284, %287 : vector<16x1xf32>
    %289 = math.rsqrt %288 : vector<16x1xf32>
    %290 = vector.broadcast %289 : vector<16x1xf32> to vector<16x32xf32>
    %291 = arith.mulf %286, %290 : vector<16x32xf32>
    %292 = vector.broadcast %271 : vector<1x32xf32> to vector<16x32xf32>
    %293 = arith.mulf %291, %292 : vector<16x32xf32>
    %294 = vector.broadcast %273 : vector<1x32xf32> to vector<16x32xf32>
    %295 = arith.addf %293, %294 : vector<16x32xf32>
    %296 = arith.addf %295, %253 : vector<16x32xf32>
    %c80 = arith.constant 80 : index
    %c0_146 = arith.constant 0 : index
    %297 = vector.load %arg2[%c80, %c0_146] : memref<82x32xf32, #tpu.memory_space<vmem>>, vector<1x32xf32>
    %c81 = arith.constant 81 : index
    %c0_147 = arith.constant 0 : index
    %298 = vector.load %arg2[%c81, %c0_147] : memref<82x32xf32, #tpu.memory_space<vmem>>, vector<1x32xf32>
    %cst_148 = arith.constant dense<0.000000e+00> : vector<16xf32>
    %299 = vector.multi_reduction <add>, %296, %cst_148 [1] : vector<16x32xf32> to vector<16xf32>
    %300 = vector.shape_cast %299 : vector<16xf32> to vector<16x1xf32>
    %cst_149 = arith.constant 3.200000e+01 : f32
    %301 = vector.broadcast %cst_149 : f32 to vector<16x1xf32>
    %302 = arith.divf %300, %301 : vector<16x1xf32>
    %303 = arith.mulf %296, %296 : vector<16x32xf32>
    %cst_150 = arith.constant dense<0.000000e+00> : vector<16xf32>
    %304 = vector.multi_reduction <add>, %303, %cst_150 [1] : vector<16x32xf32> to vector<16xf32>
    %305 = vector.shape_cast %304 : vector<16xf32> to vector<16x1xf32>
    %cst_151 = arith.constant 3.200000e+01 : f32
    %306 = vector.broadcast %cst_151 : f32 to vector<16x1xf32>
    %307 = arith.divf %305, %306 : vector<16x1xf32>
    %308 = arith.mulf %302, %302 : vector<16x1xf32>
    %309 = arith.subf %307, %308 : vector<16x1xf32>
    %310 = vector.broadcast %302 : vector<16x1xf32> to vector<16x32xf32>
    %311 = arith.subf %296, %310 : vector<16x32xf32>
    %cst_152 = arith.constant 9.99999974E-6 : f32
    %312 = vector.broadcast %cst_152 : f32 to vector<16x1xf32>
    %313 = arith.addf %309, %312 : vector<16x1xf32>
    %314 = math.rsqrt %313 : vector<16x1xf32>
    %315 = vector.broadcast %314 : vector<16x1xf32> to vector<16x32xf32>
    %316 = arith.mulf %311, %315 : vector<16x32xf32>
    %317 = vector.broadcast %297 : vector<1x32xf32> to vector<16x32xf32>
    %318 = arith.mulf %316, %317 : vector<16x32xf32>
    %319 = vector.broadcast %298 : vector<1x32xf32> to vector<16x32xf32>
    %320 = arith.addf %318, %319 : vector<16x32xf32>
    %c2 = arith.constant 2 : index
    %c0_153 = arith.constant 0 : index
    %c0_154 = arith.constant 0 : index
    %321 = vector.load %arg5[%c2, %c0_153, %c0_154] : memref<3x33x128xf32, #tpu.memory_space<vmem>>, vector<1x32x128xf32>
    %322 = vector.shape_cast %321 : vector<1x32x128xf32> to vector<32x128xf32>
    %c2_155 = arith.constant 2 : index
    %c32_156 = arith.constant 32 : index
    %c0_157 = arith.constant 0 : index
    %323 = vector.load %arg5[%c2_155, %c32_156, %c0_157] : memref<3x33x128xf32, #tpu.memory_space<vmem>>, vector<1x1x128xf32>
    %324 = vector.shape_cast %323 : vector<1x1x128xf32> to vector<1x128xf32>
    %cst_158 = arith.constant dense<0.000000e+00> : vector<16x128xf32>
    %325 = tpu.matmul %320, %322, %cst_158 {dimension_numbers = #tpu.dot_dimension_numbers<[1], [0], [0], [1], [0, 0, 1, 1], [], []>} : vector<16x32xf32>, vector<32x128xf32>, vector<16x128xf32> -> vector<16x128xf32>
    %326 = vector.broadcast %324 : vector<1x128xf32> to vector<16x128xf32>
    %327 = arith.addf %325, %326 : vector<16x128xf32>
    %cst_159 = arith.constant 0.000000e+00 : f32
    %328 = vector.broadcast %cst_159 : f32 to vector<16x128xf32>
    %329 = arith.maximumf %327, %328 : vector<16x128xf32>
    %330 = tpu.iota {dimensions = array<i32: 1>} : vector<16x128xi32>
    %c64_i32 = arith.constant 64 : i32
    %331 = vector.broadcast %c64_i32 : i32 to vector<16x128xi32>
    %332 = arith.cmpi slt, %330, %331 : vector<16x128xi32>
    %cst_160 = arith.constant -1.000000e+09 : f32
    %333 = vector.broadcast %cst_160 : f32 to vector<16x128xf32>
    %334 = arith.select %332, %329, %333 : vector<16x128xi1>, vector<16x128xf32>
    %cst_161 = arith.constant dense<0xFF800000> : vector<16xf32>
    %335 = vector.multi_reduction <maximumf>, %334, %cst_161 [1] : vector<16x128xf32> to vector<16xf32>
    %336 = vector.shape_cast %335 : vector<16xf32> to vector<16x1xf32>
    %337 = vector.broadcast %336 : vector<16x1xf32> to vector<16x128xf32>
    %338 = arith.subf %334, %337 : vector<16x128xf32>
    %339 = math.exp %338 : vector<16x128xf32>
    %cst_162 = arith.constant dense<0.000000e+00> : vector<16xf32>
    %340 = vector.multi_reduction <add>, %339, %cst_162 [1] : vector<16x128xf32> to vector<16xf32>
    %341 = vector.shape_cast %340 : vector<16xf32> to vector<16x1xf32>
    %342 = math.log %341 : vector<16x1xf32>
    %343 = arith.addf %342, %336 : vector<16x1xf32>
    %344 = vector.broadcast %343 : vector<16x1xf32> to vector<16x128xf32>
    %345 = arith.subf %334, %344 : vector<16x128xf32>
    %c0_163 = arith.constant 0 : index
    %c0_164 = arith.constant 0 : index
    %346 = vector.load %arg6[%c0_163, %c0_164] : memref<16x128xf32, #tpu.memory_space<vmem>>, vector<16x128xf32>
    tpu.vector_store %arg6[%c0_163, %c0_164], %345 {strides = array<i32>} : memref<16x128xf32, #tpu.memory_space<vmem>>, vector<16x128xf32>,
    return
  }
}

</mosaic_0001>

<llo_original>
// kernel: tpu_custom_call.1
$region0: #{tpu_custom_call.1}
  #allocation0 [shape = 'u32[]', space=smem, size = 0x4, offset = 0x4, fixed_abs, tag = 'smem constant byte address 0x4 - core index']
  #allocation1 [shape = 'u32[144,128]{1,0:T(1,128)}', space=vmem, size = 0x12000, scoped, tag = 'internal scratch']
  %s0 = inlined_call_operand.vmem [shape: s32[16,1], index: 0, kind: input, shape index: {}]
  %s1 = inlined_call_operand.vmem [shape: s32[1,16], index: 1, kind: input, shape index: {}]
  %s2 = inlined_call_operand.vmem [shape: f32[82,32], index: 2, kind: input, shape index: {}]
  %s3 = inlined_call_operand.vmem [shape: f32[2,33,96], index: 3, kind: input, shape index: {}]
  %s4 = inlined_call_operand.vmem [shape: f32[2,166,32], index: 4, kind: input, shape index: {}]
  %s5 = inlined_call_operand.vmem [shape: f32[3,33,128], index: 5, kind: input, shape index: {}]
  %s6 = inlined_call_operand.hbm [shape: f32[16,128], index: 6, kind: output, shape index: {}]
  %s7 = sld [smem:[#allocation0]]
  $region34: #{tpu_custom_call.1} parent=0
    _
  %s9 = ssub.s32 1, %s7
  %s10 = scalar_select 0, %s9, %s7
  $region1: #{tpu_custom_call.1} parent=0
    #allocation2 [shape = 'u8[8192]{0}', space=vmem, size = 0x2000, scoped, tag = 'output window, operand 0, single buffered']
    #allocation3 [shape = 's32[1]{0}', space=sflag, size = 0x4, scoped, tag = 'scoped memory for tpu_custom_call.1']
    %11 = vsyncpa [#allocation3], 0
    // Predicated region
    $region2: #{tpu_custom_call.1} parent=1 // pred_check
      _
    $region3: #{tpu_custom_call.1} parent=1 // pred_check_branch
      %13 = sbr.rel (0) target = $region5
    $region4: #{tpu_custom_call.1} parent=1 // pred_region
      _
    $region5: #{tpu_custom_call.1} parent=1 // pred_fallthru
      _
    // Predicated region
    $region6: #{tpu_custom_call.1} parent=1 // pred_check
      _
    $region7: #{tpu_custom_call.1} parent=1 // pred_check_branch
      %15 = sbr.rel (0) target = $region9
    $region8: #{tpu_custom_call.1} parent=1 // pred_region
      _
    $region9: #{tpu_custom_call.1} parent=1 // pred_fallthru
      _
    // Predicated region
    $region10: #{tpu_custom_call.1} parent=1 // pred_check
      _
    $region11: #{tpu_custom_call.1} parent=1 // pred_check_branch
      %17 = sbr.rel (0) target = $region13
    $region12: #{tpu_custom_call.1} parent=1 // pred_region
      _
    $region13: #{tpu_custom_call.1} parent=1 // pred_fallthru
      _
    // Predicated region
    $region14: #{tpu_custom_call.1} parent=1 // pred_check
      _
    $region15: #{tpu_custom_call.1} parent=1 // pred_check_branch
      %19 = sbr.rel (0) target = $region17
    $region16: #{tpu_custom_call.1} parent=1 // pred_region
      _
    $region17: #{tpu_custom_call.1} parent=1 // pred_fallthru
      _
    // Predicated region
    $region18: #{tpu_custom_call.1} parent=1 // pred_check
      _
    $region19: #{tpu_custom_call.1} parent=1 // pred_check_branch
      %21 = sbr.rel (0) target = $region21
    $region20: #{tpu_custom_call.1} parent=1 // pred_region
      _
    $region21: #{tpu_custom_call.1} parent=1 // pred_fallthru
      _
    // Predicated region
    $region22: #{tpu_custom_call.1} parent=1 // pred_check
      _
    $region23: #{tpu_custom_call.1} parent=1 // pred_check_branch
      %23 = sbr.rel (0) target = $region25
    $region24: #{tpu_custom_call.1} parent=1 // pred_region
      _
    $region25: #{tpu_custom_call.1} parent=1 // pred_fallthru
      _
    %v24 = vld [vmem:[%s0] sm:$0xff]
    %v25 = vld [vmem:[%s0 + $0x8] sm:$0xff]
    %v26 = vld [vmem:[%s1] sm:$0x1]
    %v27 = vld [vmem:[%s2] sm:$0xff]
    %v28 = vld [vmem:[%s2 + $0x8] sm:$0xff]
    %v29 = vld [vmem:[%s2 + $0x10] sm:$0xff]
    %v30 = vld [vmem:[%s2 + $0x18] sm:$0xff]
    %v31 = vld [vmem:[%s2 + $0x20] sm:$0xff]
    %v32 = vld [vmem:[%s2 + $0x28] sm:$0xff]
    %v33 = vld [vmem:[%s2 + $0x30] sm:$0xff]
    %v34 = vld [vmem:[%s2 + $0x38] sm:$0xff]
    %v35 = vld [vmem:[%s2 + $0x40] sm:$0xff]
    %v36 = vld [vmem:[%s2 + $0x48] sm:$0xff]
    %v37 = vlaneseq
    %v38 = vand.u32 %v37, 127
    %39 = vset.pattern.permute.xlu0 0
    %40 = vperm.xlu0 %39, %v24
    %v41 = vpop.permute.xlu0 %40
    %42 = vset.pattern.permute.xlu0 0
    %43 = vperm.xlu0 %42, %v25
    %v44 = vpop.permute.xlu0 %43
    %vm45 = vcmp.eq.s32.totalorder %v41, %v38
    %vm46 = vcmp.eq.s32.totalorder %v44, %v38
    %v47 = vsel %vm45, 1, 0
    %v48 = vsel %vm46, 1, 0
    %v49 = vcvt.s32.f32 %v47
    %v50 = vcvt.s32.f32 %v48
    %vm51 = vcmask 523264
    %v53 = vsel %vm51, %v49, 0
    %v56 = vsel %vm51, %v50, 0
    %58 = vmatprep.subr.mxu0 0.0
    %59 = vmatpush1.msra.mxu0 %v27
    %60 = vmatprep.subr.mxu0 0.0
    %61 = vmatpush1.msra.mxu0 %v28
    %62 = vmatprep.subr.mxu0 0.0
    %63 = vmatpush1.msra.mxu0 %v29
    %64 = vmatprep.subr.mxu0 0.0
    %65 = vmatpush1.msra.mxu0 %v30
    %66 = vmatprep.subr.mxu0 0.0
    %67 = vmatpush1.msra.mxu0 %v31
    %68 = vmatprep.subr.mxu0 0.0
    %69 = vmatpush1.msra.mxu0 %v32
    %70 = vmatprep.subr.mxu0 0.0
    %71 = vmatpush1.msra.mxu0 %v33
    %72 = vmatprep.subr.mxu0 0.0
    %73 = vmatpush1.msra.mxu0 %v34
    %74 = vmatprep.subr.mxu0 0.0
    %75 = vmatpush1.msra.mxu0 0.0
    %76 = vmatprep.subr.mxu0 0.0
    %77 = vmatpush1.msra.mxu0 0.0
    %78 = vmatprep.subr.mxu0 0.0
    %79 = vmatpush1.msra.mxu0 0.0
    %80 = vmatprep.subr.mxu0 0.0
    %81 = vmatpush1.msra.mxu0 0.0
    %82 = vmatprep.subr.mxu0 0.0
    %83 = vmatpush1.msra.mxu0 0.0
    %84 = vmatprep.subr.mxu0 0.0
    %85 = vmatpush1.msra.mxu0 0.0
    %86 = vmatprep.subr.mxu0 0.0
    %87 = vmatpush1.msra.mxu0 0.0
    %88 = vmatprep.subr.mxu0 0.0
    %89 = vmatpush1.msra.mxu0 0.0
    %90 = vmatprep.subr.mxu0 0.0
    %91 = vmatpush1.msra.mxu0 0.0
    %92 = vmatprep.subr.mxu0 0.0
    %93 = vmatpush1.msra.mxu0 0.0
    %94 = vmatprep.subr.mxu0 0.0
    %95 = vmatpush1.msra.mxu0 0.0
    %96 = vmatprep.subr.mxu0 0.0
    %97 = vmatpush1.msra.mxu0 0.0
    %98 = vmatprep.subr.mxu0 0.0
    %99 = vmatpush1.msra.mxu0 0.0
    %100 = vmatprep.subr.mxu0 0.0
    %101 = vmatpush1.msra.mxu0 0.0
    %102 = vmatprep.subr.mxu0 0.0
    %103 = vmatpush1.msra.mxu0 0.0
    %104 = vmatprep.subr.mxu0 0.0
    %105 = vmatpush1.msra.mxu0 0.0
    %106 = vmatprep.subr.mxu0 0.0
    %107 = vmatpush1.msra.mxu0 0.0
    %108 = vmatprep.subr.mxu0 0.0
    %109 = vmatpush1.msra.mxu0 0.0
    %110 = vmatprep.subr.mxu0 0.0
    %111 = vmatpush1.msra.mxu0 0.0
    %112 = vmatprep.subr.mxu0 0.0
    %113 = vmatpush1.msra.mxu0 0.0
    %114 = vmatprep.subr.mxu0 0.0
    %115 = vmatpush1.msra.mxu0 0.0
    %116 = vmatprep.subr.mxu0 0.0
    %117 = vmatpush1.msra.mxu0 0.0
    %118 = vmatprep.subr.mxu0 0.0
    %119 = vmatpush1.msra.mxu0 0.0
    %120 = vmatprep.subr.mxu0 0.0
    %121 = vmatpush1.msra.mxu0 0.0
    %122 = vmatprep.mubr.f32.mxu0 0.0
    %123 = vmatmul.mubr.f32.gmra.mrb[0].mxu0 %v53
    %v124 = vpop.f32.mrb[0].mxu0
    %v125 = vadd.f32 %v35, %v124
    %v126 = vpop.f32.mrb[0].mxu0
    %127 = vmatprep.mubr.f32.mxu0 0.0
    %128 = vmatmul.mubr.f32.gmra.mrb[0].mxu0 %v56
    %v129 = vpop.f32.mrb[0].mxu0
    %v130 = vadd.f32 %v36, %v129
    %v131 = vpop.f32.mrb[0].mxu0
    %132 = vdwg.mxu0
    %v133 = vlaneseq
    %v134 = vshrl.u32 %v133, 7
    %v135 = vadd.s32 %v134, 8
    %v136 = vshra.s32 %v134, 3
    %v137 = vshra.s32 %v135, 3
    %v138 = vshra.s32 %v38, 3
    %vm139 = vcmp.eq.s32.totalorder %v136, %v138
    %vm140 = vcmp.eq.s32.totalorder %v137, %v138
    %vm141 = vcmp.le.s32.totalorder %v38, %v134
    %vm142 = vcmp.le.s32.totalorder %v38, %v135
    %vm143 = vmand %vm139, %vm141
    %vm144 = vmand %vm140, %vm142
    %vm145 = vcmp.ne.s32.totalorder %v26, 4294967295
    %v146 = vsel %vm145, 1, 0
    %v147 = vlaneseq
    %v148 = vshrl.u32 %v147, 7
    %v149 = vsub.s32 0, %v148
    %v150 = vrot.slane %v146, %v149
    %vm151 = vcmp.eq.s32.totalorder %v150, 1
    %vm152 = vmand %vm143, %vm151
    %vm153 = vmand %vm144, %vm151
    %v154 = vsel %vm152, 0.0, -1e+09
    %v155 = vsel %vm153, 0.0, -1e+09
    %v156 = vld [vmem:[%s3] sm:$0xff]
    %v157 = vld [vmem:[%s3 + $0x8] sm:$0xff]
    %v158 = vld [vmem:[%s3 + $0x10] sm:$0xff]
    %v159 = vld [vmem:[%s3 + $0x18] sm:$0xff]
    %v160 = vld [vmem:[%s3 + $0x20] sm:$0x1]
    %v161 = vlaneseq
    %v162 = vshrl.u32 %v161, 7
    %v163 = vsub.s32 0, %v162
    %v164 = vrot.slane %v160, %v163
    %vm165 = vcmask 261120
    %v167 = vsel %vm165, %v125, 0
    %v170 = vsel %vm165, %v130, 0
    %172 = vmatprep.subr.mxu0 0.0
    %173 = vmatpush1.msra.mxu0 %v156
    %174 = vmatprep.subr.mxu0 0.0
    %175 = vmatpush1.msra.mxu0 %v157
    %176 = vmatprep.subr.mxu0 0.0
    %177 = vmatpush1.msra.mxu0 %v158
    %178 = vmatprep.subr.mxu0 0.0
    %179 = vmatpush1.msra.mxu0 %v159
    %180 = vmatprep.subr.mxu0 0.0
    %181 = vmatpush1.msra.mxu0 0.0
    %182 = vmatprep.subr.mxu0 0.0
    %183 = vmatpush1.msra.mxu0 0.0
    %184 = vmatprep.subr.mxu0 0.0
    %185 = vmatpush1.msra.mxu0 0.0
    %186 = vmatprep.subr.mxu0 0.0
    %187 = vmatpush1.msra.mxu0 0.0
    %188 = vmatprep.subr.mxu0 0.0
    %189 = vmatpush1.msra.mxu0 0.0
    %190 = vmatprep.subr.mxu0 0.0
    %191 = vmatpush1.msra.mxu0 0.0
    %192 = vmatprep.subr.mxu0 0.0
    %193 = vmatpush1.msra.mxu0 0.0
    %194 = vmatprep.subr.mxu0 0.0
    %195 = vmatpush1.msra.mxu0 0.0
    %196 = vmatprep.subr.mxu0 0.0
    %197 = vmatpush1.msra.mxu0 0.0
    %198 = vmatprep.subr.mxu0 0.0
    %199 = vmatpush1.msra.mxu0 0.0
    %200 = vmatprep.subr.mxu0 0.0
    %201 = vmatpush1.msra.mxu0 0.0
    %202 = vmatprep.subr.mxu0 0.0
    %203 = vmatpush1.msra.mxu0 0.0
    %204 = vmatprep.subr.mxu0 0.0
    %205 = vmatpush1.msra.mxu0 0.0
    %206 = vmatprep.subr.mxu0 0.0
    %207 = vmatpush1.msra.mxu0 0.0
    %208 = vmatprep.subr.mxu0 0.0
    %209 = vmatpush1.msra.mxu0 0.0
    %210 = vmatprep.subr.mxu0 0.0
    %211 = vmatpush1.msra.mxu0 0.0
    %212 = vmatprep.subr.mxu0 0.0
    %213 = vmatpush1.msra.mxu0 0.0
    %214 = vmatprep.subr.mxu0 0.0
    %215 = vmatpush1.msra.mxu0 0.0
    %216 = vmatprep.subr.mxu0 0.0
    %217 = vmatpush1.msra.mxu0 0.0
    %218 = vmatprep.subr.mxu0 0.0
    %219 = vmatpush1.msra.mxu0 0.0
    %220 = vmatprep.subr.mxu0 0.0
    %221 = vmatpush1.msra.mxu0 0.0
    %222 = vmatprep.subr.mxu0 0.0
    %223 = vmatpush1.msra.mxu0 0.0
    %224 = vmatprep.subr.mxu0 0.0
    %225 = vmatpush1.msra.mxu0 0.0
    %226 = vmatprep.subr.mxu0 0.0
    %227 = vmatpush1.msra.mxu0 0.0
    %228 = vmatprep.subr.mxu0 0.0
    %229 = vmatpush1.msra.mxu0 0.0
    %230 = vmatprep.subr.mxu0 0.0
    %231 = vmatpush1.msra.mxu0 0.0
    %232 = vmatprep.subr.mxu0 0.0
    %233 = vmatpush1.msra.mxu0 0.0
    %234 = vmatprep.subr.mxu0 0.0
    %235 = vmatpush1.msra.mxu0 0.0
    %236 = vmatprep.mubr.f32.mxu0 0.0
    %237 = vmatmul.mubr.f32.gmra.mrb[0].mxu0 %v167
    %v238 = vpop.f32.mrb[0].mxu0
    %v239 = vadd.f32 %v164, %v238
    %v240 = vpop.f32.mrb[0].mxu0
    %241 = vmatprep.mubr.f32.mxu0 0.0
    %242 = vmatmul.mubr.f32.gmra.mrb[0].mxu0 %v170
    %v243 = vpop.f32.mrb[0].mxu0
    %v244 = vadd.f32 %v164, %v243
    %v245 = vpop.f32.mrb[0].mxu0
    %246 = vdwg.mxu0
    %249 = vrot.lane.b32.xlu0 %v239, 96
    %v250 = vpop.permute.xlu0 %249
    %251 = vrot.lane.b32.xlu0 %v244, 96
    %v252 = vpop.permute.xlu0 %251
    %vm253 = vcmask 64512
    %v254 = vsel %vm253, %v239, 0
    %v256 = vsel %vm253, %v244, 0
    %v258 = vsel %vm253, %v250, 0
    %v260 = vsel %vm253, %v252, 0
    %262 = vmatprep.subr.mxu0 0.0
    %263 = vmatpush1.xpose.msra.mxu0 %v258
    %264 = vmatprep.subr.mxu0 0.0
    %265 = vmatpush1.xpose.msra.mxu0 %v260
    %266 = vmatprep.subr.mxu0 0.0
    %267 = vmatpush1.xpose.msra.mxu0 0.0
    %268 = vmatprep.subr.mxu0 0.0
    %269 = vmatpush1.xpose.msra.mxu0 0.0
    %270 = vmatprep.subr.mxu0 0.0
    %271 = vmatpush1.xpose.msra.mxu0 0.0
    %272 = vmatprep.subr.mxu0 0.0
    %273 = vmatpush1.xpose.msra.mxu0 0.0
    %274 = vmatprep.subr.mxu0 0.0
    %275 = vmatpush1.xpose.msra.mxu0 0.0
    %276 = vmatprep.subr.mxu0 0.0
    %277 = vmatpush1.xpose.msra.mxu0 0.0
    %278 = vmatprep.subr.mxu0 0.0
    %279 = vmatpush1.xpose.msra.mxu0 0.0
    %280 = vmatprep.subr.mxu0 0.0
    %281 = vmatpush1.xpose.msra.mxu0 0.0
    %282 = vmatprep.subr.mxu0 0.0
    %283 = vmatpush1.xpose.msra.mxu0 0.0
    %284 = vmatprep.subr.mxu0 0.0
    %285 = vmatpush1.xpose.msra.mxu0 0.0
    %286 = vmatprep.subr.mxu0 0.0
    %287 = vmatpush1.xpose.msra.mxu0 0.0
    %288 = vmatprep.subr.mxu0 0.0
    %289 = vmatpush1.xpose.msra.mxu0 0.0
    %290 = vmatprep.subr.mxu0 0.0
    %291 = vmatpush1.xpose.msra.mxu0 0.0
    %292 = vmatprep.subr.mxu0 0.0
    %293 = vmatpush1.xpose.msra.mxu0 0.0
    %294 = vmatprep.subr.mxu0 0.0
    %295 = vmatpush1.xpose.msra.mxu0 0.0
    %296 = vmatprep.subr.mxu0 0.0
    %297 = vmatpush1.xpose.msra.mxu0 0.0
    %298 = vmatprep.subr.mxu0 0.0
    %299 = vmatpush1.xpose.msra.mxu0 0.0
    %300 = vmatprep.subr.mxu0 0.0
    %301 = vmatpush1.xpose.msra.mxu0 0.0
    %302 = vmatprep.subr.mxu0 0.0
    %303 = vmatpush1.xpose.msra.mxu0 0.0
    %304 = vmatprep.subr.mxu0 0.0
    %305 = vmatpush1.xpose.msra.mxu0 0.0
    %306 = vmatprep.subr.mxu0 0.0
    %307 = vmatpush1.xpose.msra.mxu0 0.0
    %308 = vmatprep.subr.mxu0 0.0
    %309 = vmatpush1.xpose.msra.mxu0 0.0
    %310 = vmatprep.subr.mxu0 0.0
    %311 = vmatpush1.xpose.msra.mxu0 0.0
    %312 = vmatprep.subr.mxu0 0.0
    %313 = vmatpush1.xpose.msra.mxu0 0.0
    %314 = vmatprep.subr.mxu0 0.0
    %315 = vmatpush1.xpose.msra.mxu0 0.0
    %316 = vmatprep.subr.mxu0 0.0
    %317 = vmatpush1.xpose.msra.mxu0 0.0
    %318 = vmatprep.subr.mxu0 0.0
    %319 = vmatpush1.xpose.msra.mxu0 0.0
    %320 = vmatprep.subr.mxu0 0.0
    %321 = vmatpush1.xpose.msra.mxu0 0.0
    %322 = vmatprep.subr.mxu0 0.0
    %323 = vmatpush1.xpose.msra.mxu0 0.0
    %324 = vmatprep.subr.mxu0 0.0
    %325 = vmatpush1.xpose.msra.mxu0 0.0
    %326 = vmatprep.mubr.f32.mxu0 0.0
    %327 = vmatmul.mubr.f32.gmra.mrb[0].mxu0 %v254
    %v328 = vpop.f32.mrb[0].mxu0
    %v329 = vadd.f32 0.0, %v328
    %v330 = vpop.f32.mrb[0].mxu0
    %331 = vmatprep.mubr.f32.mxu0 0.0
    %332 = vmatmul.mubr.f32.gmra.mrb[0].mxu0 %v256
    %v333 = vpop.f32.mrb[0].mxu0
    %v334 = vadd.f32 0.0, %v333
    %v335 = vpop.f32.mrb[0].mxu0
    %336 = vdwg.mxu0
    %337 = vrot.lane.b32.xlu0 %v239, 120
    %v338 = vpop.permute.xlu0 %337
    %339 = vrot.lane.b32.xlu0 %v244, 120
    %v340 = vpop.permute.xlu0 %339
    %341 = vrot.lane.b32.xlu0 %v239, 88
    %v342 = vpop.permute.xlu0 %341
    %343 = vrot.lane.b32.xlu0 %v244, 88
    %v344 = vpop.permute.xlu0 %343
    %v345 = vsel %vm253, %v338, 0
    %v347 = vsel %vm253, %v340, 0
    %v349 = vsel %vm253, %v342, 0
    %v351 = vsel %vm253, %v344, 0
    %353 = vmatprep.subr.mxu0 0.0
    %354 = vmatpush1.xpose.msra.mxu0 %v349
    %355 = vmatprep.subr.mxu0 0.0
    %356 = vmatpush1.xpose.msra.mxu0 %v351
    %357 = vmatprep.subr.mxu0 0.0
    %358 = vmatpush1.xpose.msra.mxu0 0.0
    %359 = vmatprep.subr.mxu0 0.0
    %360 = vmatpush1.xpose.msra.mxu0 0.0
    %361 = vmatprep.subr.mxu0 0.0
    %362 = vmatpush1.xpose.msra.mxu0 0.0
    %363 = vmatprep.subr.mxu0 0.0
    %364 = vmatpush1.xpose.msra.mxu0 0.0
    %365 = vmatprep.subr.mxu0 0.0
    %366 = vmatpush1.xpose.msra.mxu0 0.0
    %367 = vmatprep.subr.mxu0 0.0
    %368 = vmatpush1.xpose.msra.mxu0 0.0
    %369 = vmatprep.subr.mxu0 0.0
    %370 = vmatpush1.xpose.msra.mxu0 0.0
    %371 = vmatprep.subr.mxu0 0.0
    %372 = vmatpush1.xpose.msra.mxu0 0.0
    %373 = vmatprep.subr.mxu0 0.0
    %374 = vmatpush1.xpose.msra.mxu0 0.0
    %375 = vmatprep.subr.mxu0 0.0
    %376 = vmatpush1.xpose.msra.mxu0 0.0
    %377 = vmatprep.subr.mxu0 0.0
    %378 = vmatpush1.xpose.msra.mxu0 0.0
    %379 = vmatprep.subr.mxu0 0.0
    %380 = vmatpush1.xpose.msra.mxu0 0.0
    %381 = vmatprep.subr.mxu0 0.0
    %382 = vmatpush1.xpose.msra.mxu0 0.0
    %383 = vmatprep.subr.mxu0 0.0
    %384 = vmatpush1.xpose.msra.mxu0 0.0
    %385 = vmatprep.subr.mxu0 0.0
    %386 = vmatpush1.xpose.msra.mxu0 0.0
    %387 = vmatprep.subr.mxu0 0.0
    %388 = vmatpush1.xpose.msra.mxu0 0.0
    %389 = vmatprep.subr.mxu0 0.0
    %390 = vmatpush1.xpose.msra.mxu0 0.0
    %391 = vmatprep.subr.mxu0 0.0
    %392 = vmatpush1.xpose.msra.mxu0 0.0
    %393 = vmatprep.subr.mxu0 0.0
    %394 = vmatpush1.xpose.msra.mxu0 0.0
    %395 = vmatprep.subr.mxu0 0.0
    %396 = vmatpush1.xpose.msra.mxu0 0.0
    %397 = vmatprep.subr.mxu0 0.0
    %398 = vmatpush1.xpose.msra.mxu0 0.0
    %399 = vmatprep.subr.mxu0 0.0
    %400 = vmatpush1.xpose.msra.mxu0 0.0
    %401 = vmatprep.subr.mxu0 0.0
    %402 = vmatpush1.xpose.msra.mxu0 0.0
    %403 = vmatprep.subr.mxu0 0.0
    %404 = vmatpush1.xpose.msra.mxu0 0.0
    %405 = vmatprep.subr.mxu0 0.0
    %406 = vmatpush1.xpose.msra.mxu0 0.0
    %407 = vmatprep.subr.mxu0 0.0
    %408 = vmatpush1.xpose.msra.mxu0 0.0
    %409 = vmatprep.subr.mxu0 0.0
    %410 = vmatpush1.xpose.msra.mxu0 0.0
    %411 = vmatprep.subr.mxu0 0.0
    %412 = vmatpush1.xpose.msra.mxu0 0.0
    %413 = vmatprep.subr.mxu0 0.0
    %414 = vmatpush1.xpose.msra.mxu0 0.0
    %415 = vmatprep.subr.mxu0 0.0
    %416 = vmatpush1.xpose.msra.mxu0 0.0
    %417 = vmatprep.mubr.f32.mxu0 0.0
    %418 = vmatmul.mubr.f32.gmra.mrb[0].mxu0 %v345
    %v419 = vpop.f32.mrb[0].mxu0
    %v420 = vadd.f32 0.0, %v419
    %v421 = vpop.f32.mrb[0].mxu0
    %422 = vmatprep.mubr.f32.mxu0 0.0
    %423 = vmatmul.mubr.f32.gmra.mrb[0].mxu0 %v347
    %v424 = vpop.f32.mrb[0].mxu0
    %v425 = vadd.f32 0.0, %v424
    %v426 = vpop.f32.mrb[0].mxu0
    %427 = vdwg.mxu0
    %428 = vrot.lane.b32.xlu0 %v239, 112
    %v429 = vpop.permute.xlu0 %428
    %430 = vrot.lane.b32.xlu0 %v244, 112
    %v431 = vpop.permute.xlu0 %430
    %432 = vrot.lane.b32.xlu0 %v239, 80
    %v433 = vpop.permute.xlu0 %432
    %434 = vrot.lane.b32.xlu0 %v244, 80
    %v435 = vpop.permute.xlu0 %434
    %v436 = vsel %vm253, %v429, 0
    %v438 = vsel %vm253, %v431, 0
    %v440 = vsel %vm253, %v433, 0
    %v442 = vsel %vm253, %v435, 0
    %444 = vmatprep.subr.mxu0 0.0
    %445 = vmatpush1.xpose.msra.mxu0 %v440
    %446 = vmatprep.subr.mxu0 0.0
    %447 = vmatpush1.xpose.msra.mxu0 %v442
    %448 = vmatprep.subr.mxu0 0.0
    %449 = vmatpush1.xpose.msra.mxu0 0.0
    %450 = vmatprep.subr.mxu0 0.0
    %451 = vmatpush1.xpose.msra.mxu0 0.0
    %452 = vmatprep.subr.mxu0 0.0
    %453 = vmatpush1.xpose.msra.mxu0 0.0
    %454 = vmatprep.subr.mxu0 0.0
    %455 = vmatpush1.xpose.msra.mxu0 0.0
    %456 = vmatprep.subr.mxu0 0.0
    %457 = vmatpush1.xpose.msra.mxu0 0.0
    %458 = vmatprep.subr.mxu0 0.0
    %459 = vmatpush1.xpose.msra.mxu0 0.0
    %460 = vmatprep.subr.mxu0 0.0
    %461 = vmatpush1.xpose.msra.mxu0 0.0
    %462 = vmatprep.subr.mxu0 0.0
    %463 = vmatpush1.xpose.msra.mxu0 0.0
    %464 = vmatprep.subr.mxu0 0.0
    %465 = vmatpush1.xpose.msra.mxu0 0.0
    %466 = vmatprep.subr.mxu0 0.0
    %467 = vmatpush1.xpose.msra.mxu0 0.0
    %468 = vmatprep.subr.mxu0 0.0
    %469 = vmatpush1.xpose.msra.mxu0 0.0
    %470 = vmatprep.subr.mxu0 0.0
    %471 = vmatpush1.xpose.msra.mxu0 0.0
    %472 = vmatprep.subr.mxu0 0.0
    %473 = vmatpush1.xpose.msra.mxu0 0.0
    %474 = vmatprep.subr.mxu0 0.0
    %475 = vmatpush1.xpose.msra.mxu0 0.0
    %476 = vmatprep.subr.mxu0 0.0
    %477 = vmatpush1.xpose.msra.mxu0 0.0
    %478 = vmatprep.subr.mxu0 0.0
    %479 = vmatpush1.xpose.msra.mxu0 0.0
    %480 = vmatprep.subr.mxu0 0.0
    %481 = vmatpush1.xpose.msra.mxu0 0.0
    %482 = vmatprep.subr.mxu0 0.0
    %483 = vmatpush1.xpose.msra.mxu0 0.0
    %484 = vmatprep.subr.mxu0 0.0
    %485 = vmatpush1.xpose.msra.mxu0 0.0
    %486 = vmatprep.subr.mxu0 0.0
    %487 = vmatpush1.xpose.msra.mxu0 0.0
    %488 = vmatprep.subr.mxu0 0.0
    %489 = vmatpush1.xpose.msra.mxu0 0.0
    %490 = vmatprep.subr.mxu0 0.0
    %491 = vmatpush1.xpose.msra.mxu0 0.0
    %492 = vmatprep.subr.mxu0 0.0
    %493 = vmatpush1.xpose.msra.mxu0 0.0
    %494 = vmatprep.subr.mxu0 0.0
    %495 = vmatpush1.xpose.msra.mxu0 0.0
    %496 = vmatprep.subr.mxu0 0.0
    %497 = vmatpush1.xpose.msra.mxu0 0.0
    %498 = vmatprep.subr.mxu0 0.0
    %499 = vmatpush1.xpose.msra.mxu0 0.0
    %500 = vmatprep.subr.mxu0 0.0
    %501 = vmatpush1.xpose.msra.mxu0 0.0
    %502 = vmatprep.subr.mxu0 0.0
    %503 = vmatpush1.xpose.msra.mxu0 0.0
    %504 = vmatprep.subr.mxu0 0.0
    %505 = vmatpush1.xpose.msra.mxu0 0.0
    %506 = vmatprep.subr.mxu0 0.0
    %507 = vmatpush1.xpose.msra.mxu0 0.0
    %508 = vmatprep.mubr.f32.mxu0 0.0
    %509 = vmatmul.mubr.f32.gmra.mrb[0].mxu0 %v436
    %v510 = vpop.f32.mrb[0].mxu0
    %v511 = vadd.f32 0.0, %v510
    %v512 = vpop.f32.mrb[0].mxu0
    %513 = vmatprep.mubr.f32.mxu0 0.0
    %514 = vmatmul.mubr.f32.gmra.mrb[0].mxu0 %v438
    %v515 = vpop.f32.mrb[0].mxu0
    %v516 = vadd.f32 0.0, %v515
    %v517 = vpop.f32.mrb[0].mxu0
    %518 = vdwg.mxu0
    %519 = vrot.lane.b32.xlu0 %v239, 104
    %v520 = vpop.permute.xlu0 %519
    %521 = vrot.lane.b32.xlu0 %v244, 104
    %v522 = vpop.permute.xlu0 %521
    %523 = vrot.lane.b32.xlu0 %v239, 72
    %v524 = vpop.permute.xlu0 %523
    %525 = vrot.lane.b32.xlu0 %v244, 72
    %v526 = vpop.permute.xlu0 %525
    %v527 = vsel %vm253, %v520, 0
    %v529 = vsel %vm253, %v522, 0
    %v531 = vsel %vm253, %v524, 0
    %v533 = vsel %vm253, %v526, 0
    %535 = vmatprep.subr.mxu0 0.0
    %536 = vmatpush1.xpose.msra.mxu0 %v531
    %537 = vmatprep.subr.mxu0 0.0
    %538 = vmatpush1.xpose.msra.mxu0 %v533
    %539 = vmatprep.subr.mxu0 0.0
    %540 = vmatpush1.xpose.msra.mxu0 0.0
    %541 = vmatprep.subr.mxu0 0.0
    %542 = vmatpush1.xpose.msra.mxu0 0.0
    %543 = vmatprep.subr.mxu0 0.0
    %544 = vmatpush1.xpose.msra.mxu0 0.0
    %545 = vmatprep.subr.mxu0 0.0
    %546 = vmatpush1.xpose.msra.mxu0 0.0
    %547 = vmatprep.subr.mxu0 0.0
    %548 = vmatpush1.xpose.msra.mxu0 0.0
    %549 = vmatprep.subr.mxu0 0.0
    %550 = vmatpush1.xpose.msra.mxu0 0.0
    %551 = vmatprep.subr.mxu0 0.0
    %552 = vmatpush1.xpose.msra.mxu0 0.0
    %553 = vmatprep.subr.mxu0 0.0
    %554 = vmatpush1.xpose.msra.mxu0 0.0
    %555 = vmatprep.subr.mxu0 0.0
    %556 = vmatpush1.xpose.msra.mxu0 0.0
    %557 = vmatprep.subr.mxu0 0.0
    %558 = vmatpush1.xpose.msra.mxu0 0.0
    %559 = vmatprep.subr.mxu0 0.0
    %560 = vmatpush1.xpose.msra.mxu0 0.0
    %561 = vmatprep.subr.mxu0 0.0
    %562 = vmatpush1.xpose.msra.mxu0 0.0
    %563 = vmatprep.subr.mxu0 0.0
    %564 = vmatpush1.xpose.msra.mxu0 0.0
    %565 = vmatprep.subr.mxu0 0.0
    %566 = vmatpush1.xpose.msra.mxu0 0.0
    %567 = vmatprep.subr.mxu0 0.0
    %568 = vmatpush1.xpose.msra.mxu0 0.0
    %569 = vmatprep.subr.mxu0 0.0
    %570 = vmatpush1.xpose.msra.mxu0 0.0
    %571 = vmatprep.subr.mxu0 0.0
    %572 = vmatpush1.xpose.msra.mxu0 0.0
    %573 = vmatprep.subr.mxu0 0.0
    %574 = vmatpush1.xpose.msra.mxu0 0.0
    %575 = vmatprep.subr.mxu0 0.0
    %576 = vmatpush1.xpose.msra.mxu0 0.0
    %577 = vmatprep.subr.mxu0 0.0
    %578 = vmatpush1.xpose.msra.mxu0 0.0
    %579 = vmatprep.subr.mxu0 0.0
    %580 = vmatpush1.xpose.msra.mxu0 0.0
    %581 = vmatprep.subr.mxu0 0.0
    %582 = vmatpush1.xpose.msra.mxu0 0.0
    %583 = vmatprep.subr.mxu0 0.0
    %584 = vmatpush1.xpose.msra.mxu0 0.0
    %585 = vmatprep.subr.mxu0 0.0
    %586 = vmatpush1.xpose.msra.mxu0 0.0
    %587 = vmatprep.subr.mxu0 0.0
    %588 = vmatpush1.xpose.msra.mxu0 0.0
    %589 = vmatprep.subr.mxu0 0.0
    %590 = vmatpush1.xpose.msra.mxu0 0.0
    %591 = vmatprep.subr.mxu0 0.0
    %592 = vmatpush1.xpose.msra.mxu0 0.0
    %593 = vmatprep.subr.mxu0 0.0
    %594 = vmatpush1.xpose.msra.mxu0 0.0
    %595 = vmatprep.subr.mxu0 0.0
    %596 = vmatpush1.xpose.msra.mxu0 0.0
    %597 = vmatprep.subr.mxu0 0.0
    %598 = vmatpush1.xpose.msra.mxu0 0.0
    %599 = vmatprep.mubr.f32.mxu0 0.0
    %600 = vmatmul.mubr.f32.gmra.mrb[0].mxu0 %v527
    %v601 = vpop.f32.mrb[0].mxu0
    %v602 = vadd.f32 0.0, %v601
    %v603 = vpop.f32.mrb[0].mxu0
    %604 = vmatprep.mubr.f32.mxu0 0.0
    %605 = vmatmul.mubr.f32.gmra.mrb[0].mxu0 %v529
    %v606 = vpop.f32.mrb[0].mxu0
    %v607 = vadd.f32 0.0, %v606
    %v608 = vpop.f32.mrb[0].mxu0
    %609 = vdwg.mxu0
    %v610 = vmul.f32 %v329, 0.35355338
    %v611 = vmul.f32 %v334, 0.35355338
    %v612 = vmul.f32 %v420, 0.35355338
    %v613 = vmul.f32 %v425, 0.35355338
    %v614 = vmul.f32 %v511, 0.35355338
    %v615 = vmul.f32 %v516, 0.35355338
    %v616 = vmul.f32 %v602, 0.35355338
    %v617 = vmul.f32 %v607, 0.35355338
    %v618 = vadd.f32 %v610, %v154
    %v619 = vadd.f32 %v611, %v155
    %v620 = vadd.f32 %v612, %v154
    %v621 = vadd.f32 %v613, %v155
    %v622 = vadd.f32 %v614, %v154
    %v623 = vadd.f32 %v615, %v155
    %v624 = vadd.f32 %v616, %v154
    %v625 = vadd.f32 %v617, %v155
    %vm626 = vcmask 130048
    %v627 = vsel %vm626, %v618, -inf
    %628 = vmax.xlane.f32.xlu0 %v627
    %v629 = vpop.xlane.xlu0 %628
    %v630 = vsel %vm626, %v619, -inf
    %631 = vmax.xlane.f32.xlu0 %v630
    %v632 = vpop.xlane.xlu0 %631
    %v633 = vsel %vm626, %v620, -inf
    %634 = vmax.xlane.f32.xlu0 %v633
    %v635 = vpop.xlane.xlu0 %634
    %v636 = vsel %vm626, %v621, -inf
    %637 = vmax.xlane.f32.xlu0 %v636
    %v638 = vpop.xlane.xlu0 %637
    %v639 = vsel %vm626, %v622, -inf
    %640 = vmax.xlane.f32.xlu0 %v639
    %v641 = vpop.xlane.xlu0 %640
    %v642 = vsel %vm626, %v623, -inf
    %643 = vmax.xlane.f32.xlu0 %v642
    %v644 = vpop.xlane.xlu0 %643
    %v645 = vsel %vm626, %v624, -inf
    %646 = vmax.xlane.f32.xlu0 %v645
    %v647 = vpop.xlane.xlu0 %646
    %v648 = vsel %vm626, %v625, -inf
    %649 = vmax.xlane.f32.xlu0 %v648
    %v650 = vpop.xlane.xlu0 %649
    %v651 = vsub.f32 %v618, %v629
    %v652 = vsub.f32 %v619, %v632
    %v653 = vsub.f32 %v620, %v635
    %v654 = vsub.f32 %v621, %v638
    %v655 = vsub.f32 %v622, %v641
    %v656 = vsub.f32 %v623, %v644
    %v657 = vsub.f32 %v624, %v647
    %v658 = vsub.f32 %v625, %v650
    %v659 = vmul.f32 %v651, 1.442695
    %v660 = vpow.pop %v659
    %v661 = vmul.f32 %v652, 1.442695
    %v662 = vpow.pop %v661
    %v663 = vmul.f32 %v653, 1.442695
    %v664 = vpow.pop %v663
    %v665 = vmul.f32 %v654, 1.442695
    %v666 = vpow.pop %v665
    %v667 = vmul.f32 %v655, 1.442695
    %v668 = vpow.pop %v667
    %v669 = vmul.f32 %v656, 1.442695
    %v670 = vpow.pop %v669
    %v671 = vmul.f32 %v657, 1.442695
    %v672 = vpow.pop %v671
    %v673 = vmul.f32 %v658, 1.442695
    %v674 = vpow.pop %v673
    %v675 = vsel %vm626, %v660, 0.0
    %676 = vadd.xlane.f32.xlu0 %v675
    %v677 = vpop.xlane.xlu0 %676
    %v678 = vsel %vm626, %v662, 0.0
    %679 = vadd.xlane.f32.xlu0 %v678
    %v680 = vpop.xlane.xlu0 %679
    %v681 = vsel %vm626, %v664, 0.0
    %682 = vadd.xlane.f32.xlu0 %v681
    %v683 = vpop.xlane.xlu0 %682
    %v684 = vsel %vm626, %v666, 0.0
    %685 = vadd.xlane.f32.xlu0 %v684
    %v686 = vpop.xlane.xlu0 %685
    %v687 = vsel %vm626, %v668, 0.0
    %688 = vadd.xlane.f32.xlu0 %v687
    %v689 = vpop.xlane.xlu0 %688
    %v690 = vsel %vm626, %v670, 0.0
    %691 = vadd.xlane.f32.xlu0 %v690
    %v692 = vpop.xlane.xlu0 %691
    %v693 = vsel %vm626, %v672, 0.0
    %694 = vadd.xlane.f32.xlu0 %v693
    %v695 = vpop.xlane.xlu0 %694
    %v696 = vsel %vm626, %v674, 0.0
    %697 = vadd.xlane.f32.xlu0 %v696
    %v698 = vpop.xlane.xlu0 %697
    %v699 = vrcp.pop %v677
    %v700 = vrcp.pop %v680
    %v701 = vrcp.pop %v683
    %v702 = vrcp.pop %v686
    %v703 = vrcp.pop %v689
    %v704 = vrcp.pop %v692
    %v705 = vrcp.pop %v695
    %v706 = vrcp.pop %v698
    %v707 = vmul.f32 %v660, %v699
    %v708 = vmul.f32 %v662, %v700
    %v709 = vmul.f32 %v664, %v701
    %v710 = vmul.f32 %v666, %v702
    %v711 = vmul.f32 %v668, %v703
    %v712 = vmul.f32 %v670, %v704
    %v713 = vmul.f32 %v672, %v705
    %v714 = vmul.f32 %v674, %v706
    %715 = vrot.lane.b32.xlu0 %v239, 64
    %v716 = vpop.permute.xlu0 %715
    %717 = vrot.lane.b32.xlu0 %v244, 64
    %v718 = vpop.permute.xlu0 %717
    %v722 = vsel %vm626, %v707, 0
    %v725 = vsel %vm626, %v708, 0
    %727 = vmatprep.subr.mxu0 0.0
    %728 = vmatpush1.msra.mxu0 %v716
    %729 = vmatprep.subr.mxu0 0.0
    %730 = vmatpush1.msra.mxu0 %v718
    %731 = vmatprep.subr.mxu0 0.0
    %732 = vmatpush1.msra.mxu0 0.0
    %733 = vmatprep.subr.mxu0 0.0
    %734 = vmatpush1.msra.mxu0 0.0
    %735 = vmatprep.subr.mxu0 0.0
    %736 = vmatpush1.msra.mxu0 0.0
    %737 = vmatprep.subr.mxu0 0.0
    %738 = vmatpush1.msra.mxu0 0.0
    %739 = vmatprep.subr.mxu0 0.0
    %740 = vmatpush1.msra.mxu0 0.0
    %741 = vmatprep.subr.mxu0 0.0
    %742 = vmatpush1.msra.mxu0 0.0
    %743 = vmatprep.subr.mxu0 0.0
    %744 = vmatpush1.msra.mxu0 0.0
    %745 = vmatprep.subr.mxu0 0.0
    %746 = vmatpush1.msra.mxu0 0.0
    %747 = vmatprep.subr.mxu0 0.0
    %748 = vmatpush1.msra.mxu0 0.0
    %749 = vmatprep.subr.mxu0 0.0
    %750 = vmatpush1.msra.mxu0 0.0
    %751 = vmatprep.subr.mxu0 0.0
    %752 = vmatpush1.msra.mxu0 0.0
    %753 = vmatprep.subr.mxu0 0.0
    %754 = vmatpush1.msra.mxu0 0.0
    %755 = vmatprep.subr.mxu0 0.0
    %756 = vmatpush1.msra.mxu0 0.0
    %757 = vmatprep.subr.mxu0 0.0
    %758 = vmatpush1.msra.mxu0 0.0
    %759 = vmatprep.subr.mxu0 0.0
    %760 = vmatpush1.msra.mxu0 0.0
    %761 = vmatprep.subr.mxu0 0.0
    %762 = vmatpush1.msra.mxu0 0.0
    %763 = vmatprep.subr.mxu0 0.0
    %764 = vmatpush1.msra.mxu0 0.0
    %765 = vmatprep.subr.mxu0 0.0
    %766 = vmatpush1.msra.mxu0 0.0
    %767 = vmatprep.subr.mxu0 0.0
    %768 = vmatpush1.msra.mxu0 0.0
    %769 = vmatprep.subr.mxu0 0.0
    %770 = vmatpush1.msra.mxu0 0.0
    %771 = vmatprep.subr.mxu0 0.0
    %772 = vmatpush1.msra.mxu0 0.0
    %773 = vmatprep.subr.mxu0 0.0
    %774 = vmatpush1.msra.mxu0 0.0
    %775 = vmatprep.subr.mxu0 0.0
    %776 = vmatpush1.msra.mxu0 0.0
    %777 = vmatprep.subr.mxu0 0.0
    %778 = vmatpush1.msra.mxu0 0.0
    %779 = vmatprep.subr.mxu0 0.0
    %780 = vmatpush1.msra.mxu0 0.0
    %781 = vmatprep.subr.mxu0 0.0
    %782 = vmatpush1.msra.mxu0 0.0
    %783 = vmatprep.subr.mxu0 0.0
    %784 = vmatpush1.msra.mxu0 0.0
    %785 = vmatprep.subr.mxu0 0.0
    %786 = vmatpush1.msra.mxu0 0.0
    %787 = vmatprep.subr.mxu0 0.0
    %788 = vmatpush1.msra.mxu0 0.0
    %789 = vmatprep.subr.mxu0 0.0
    %790 = vmatpush1.msra.mxu0 0.0
    %791 = vmatprep.mubr.f32.mxu0 0.0
    %792 = vmatmul.mubr.f32.gmra.mrb[0].mxu0 %v722
    %v793 = vpop.f32.mrb[0].mxu0
    %v794 = vadd.f32 0.0, %v793
    %v795 = vpop.f32.mrb[0].mxu0
    %796 = vmatprep.mubr.f32.mxu0 0.0
    %797 = vmatmul.mubr.f32.gmra.mrb[0].mxu0 %v725
    %v798 = vpop.f32.mrb[0].mxu0
    %v799 = vadd.f32 0.0, %v798
    %v800 = vpop.f32.mrb[0].mxu0
    %801 = vdwg.mxu0
    %v802 = vld [vmem:[%s4] sm:$0xff]
    %803 = vrot.lane.b32.xlu0 %v239, 56
    %v804 = vpop.permute.xlu0 %803
    %805 = vrot.lane.b32.xlu0 %v244, 56
    %v806 = vpop.permute.xlu0 %805
    %v810 = vsel %vm626, %v709, 0
    %v813 = vsel %vm626, %v710, 0
    %815 = vmatprep.subr.mxu0 0.0
    %816 = vmatpush1.msra.mxu0 %v804
    %817 = vmatprep.subr.mxu0 0.0
    %818 = vmatpush1.msra.mxu0 %v806
    %819 = vmatprep.subr.mxu0 0.0
    %820 = vmatpush1.msra.mxu0 0.0
    %821 = vmatprep.subr.mxu0 0.0
    %822 = vmatpush1.msra.mxu0 0.0
    %823 = vmatprep.subr.mxu0 0.0
    %824 = vmatpush1.msra.mxu0 0.0
    %825 = vmatprep.subr.mxu0 0.0
    %826 = vmatpush1.msra.mxu0 0.0
    %827 = vmatprep.subr.mxu0 0.0
    %828 = vmatpush1.msra.mxu0 0.0
    %829 = vmatprep.subr.mxu0 0.0
    %830 = vmatpush1.msra.mxu0 0.0
    %831 = vmatprep.subr.mxu0 0.0
    %832 = vmatpush1.msra.mxu0 0.0
    %833 = vmatprep.subr.mxu0 0.0
    %834 = vmatpush1.msra.mxu0 0.0
    %835 = vmatprep.subr.mxu0 0.0
    %836 = vmatpush1.msra.mxu0 0.0
    %837 = vmatprep.subr.mxu0 0.0
    %838 = vmatpush1.msra.mxu0 0.0
    %839 = vmatprep.subr.mxu0 0.0
    %840 = vmatpush1.msra.mxu0 0.0
    %841 = vmatprep.subr.mxu0 0.0
    %842 = vmatpush1.msra.mxu0 0.0
    %843 = vmatprep.subr.mxu0 0.0
    %844 = vmatpush1.msra.mxu0 0.0
    %845 = vmatprep.subr.mxu0 0.0
    %846 = vmatpush1.msra.mxu0 0.0
    %847 = vmatprep.subr.mxu0 0.0
    %848 = vmatpush1.msra.mxu0 0.0
    %849 = vmatprep.subr.mxu0 0.0
    %850 = vmatpush1.msra.mxu0 0.0
    %851 = vmatprep.subr.mxu0 0.0
    %852 = vmatpush1.msra.mxu0 0.0
    %853 = vmatprep.subr.mxu0 0.0
    %854 = vmatpush1.msra.mxu0 0.0
    %855 = vmatprep.subr.mxu0 0.0
    %856 = vmatpush1.msra.mxu0 0.0
    %857 = vmatprep.subr.mxu0 0.0
    %858 = vmatpush1.msra.mxu0 0.0
    %859 = vmatprep.subr.mxu0 0.0
    %860 = vmatpush1.msra.mxu0 0.0
    %861 = vmatprep.subr.mxu0 0.0
    %862 = vmatpush1.msra.mxu0 0.0
    %863 = vmatprep.subr.mxu0 0.0
    %864 = vmatpush1.msra.mxu0 0.0
    %865 = vmatprep.subr.mxu0 0.0
    %866 = vmatpush1.msra.mxu0 0.0
    %867 = vmatprep.subr.mxu0 0.0
    %868 = vmatpush1.msra.mxu0 0.0
    %869 = vmatprep.subr.mxu0 0.0
    %870 = vmatpush1.msra.mxu0 0.0
    %871 = vmatprep.subr.mxu0 0.0
    %872 = vmatpush1.msra.mxu0 0.0
    %873 = vmatprep.subr.mxu0 0.0
    %874 = vmatpush1.msra.mxu0 0.0
    %875 = vmatprep.subr.mxu0 0.0
    %876 = vmatpush1.msra.mxu0 0.0
    %877 = vmatprep.subr.mxu0 0.0
    %878 = vmatpush1.msra.mxu0 0.0
    %879 = vmatprep.mubr.f32.mxu0 0.0
    %880 = vmatmul.mubr.f32.gmra.mrb[0].mxu0 %v810
    %v881 = vpop.f32.mrb[0].mxu0
    %v882 = vadd.f32 0.0, %v881
    %v883 = vpop.f32.mrb[0].mxu0
    %884 = vmatprep.mubr.f32.mxu0 0.0
    %885 = vmatmul.mubr.f32.gmra.mrb[0].mxu0 %v813
    %v886 = vpop.f32.mrb[0].mxu0
    %v887 = vadd.f32 0.0, %v886
    %v888 = vpop.f32.mrb[0].mxu0
    %889 = vdwg.mxu0
    %v890 = vld [vmem:[%s4 + $0x8] sm:$0xff]
    %v892 = vsel %vm253, %v882, 0
    %v895 = vsel %vm253, %v887, 0
    %897 = vmatprep.subr.mxu0 0.0
    %898 = vmatpush1.msra.mxu0 %v890
    %899 = vmatprep.subr.mxu0 0.0
    %900 = vmatpush1.msra.mxu0 0.0
    %901 = vmatprep.subr.mxu0 0.0
    %902 = vmatpush1.msra.mxu0 0.0
    %903 = vmatprep.subr.mxu0 0.0
    %904 = vmatpush1.msra.mxu0 0.0
    %905 = vmatprep.subr.mxu0 0.0
    %906 = vmatpush1.msra.mxu0 0.0
    %907 = vmatprep.subr.mxu0 0.0
    %908 = vmatpush1.msra.mxu0 0.0
    %909 = vmatprep.subr.mxu0 0.0
    %910 = vmatpush1.msra.mxu0 0.0
    %911 = vmatprep.subr.mxu0 0.0
    %912 = vmatpush1.msra.mxu0 0.0
    %913 = vmatprep.subr.mxu0 0.0
    %914 = vmatpush1.msra.mxu0 0.0
    %915 = vmatprep.subr.mxu0 0.0
    %916 = vmatpush1.msra.mxu0 0.0
    %917 = vmatprep.subr.mxu0 0.0
    %918 = vmatpush1.msra.mxu0 0.0
    %919 = vmatprep.subr.mxu0 0.0
    %920 = vmatpush1.msra.mxu0 0.0
    %921 = vmatprep.subr.mxu0 0.0
    %922 = vmatpush1.msra.mxu0 0.0
    %923 = vmatprep.subr.mxu0 0.0
    %924 = vmatpush1.msra.mxu0 0.0
    %925 = vmatprep.subr.mxu0 0.0
    %926 = vmatpush1.msra.mxu0 0.0
    %927 = vmatprep.subr.mxu0 0.0
    %928 = vmatpush1.msra.mxu0 0.0
    %929 = vmatprep.subr.mxu0 0.0
    %930 = vmatpush1.msra.mxu0 0.0
    %931 = vmatprep.subr.mxu0 0.0
    %932 = vmatpush1.msra.mxu0 0.0
    %933 = vmatprep.subr.mxu0 0.0
    %934 = vmatpush1.msra.mxu0 0.0
    %935 = vmatprep.subr.mxu0 0.0
    %936 = vmatpush1.msra.mxu0 0.0
    %937 = vmatprep.subr.mxu0 0.0
    %938 = vmatpush1.msra.mxu0 0.0
    %939 = vmatprep.subr.mxu0 0.0
    %940 = vmatpush1.msra.mxu0 0.0
    %941 = vmatprep.subr.mxu0 0.0
    %942 = vmatpush1.msra.mxu0 0.0
    %943 = vmatprep.subr.mxu0 0.0
    %944 = vmatpush1.msra.mxu0 0.0
    %945 = vmatprep.subr.mxu0 0.0
    %946 = vmatpush1.msra.mxu0 0.0
    %947 = vmatprep.subr.mxu0 0.0
    %948 = vmatpush1.msra.mxu0 0.0
    %949 = vmatprep.subr.mxu0 0.0
    %950 = vmatpush1.msra.mxu0 0.0
    %951 = vmatprep.subr.mxu0 0.0
    %952 = vmatpush1.msra.mxu0 0.0
    %953 = vmatprep.subr.mxu0 0.0
    %954 = vmatpush1.msra.mxu0 0.0
    %955 = vmatprep.subr.mxu0 0.0
    %956 = vmatpush1.msra.mxu0 0.0
    %957 = vmatprep.subr.mxu0 0.0
    %958 = vmatpush1.msra.mxu0 0.0
    %959 = vmatprep.subr.mxu0 0.0
    %960 = vmatpush1.msra.mxu0 0.0
    %961 = vmatprep.mubr.f32.mxu0 0.0
    %962 = vmatmul.mubr.f32.gmra.mrb[0].mxu0 %v892
    %v963 = vpop.f32.mrb[0].mxu0
    %v964 = vadd.f32 0.0, %v963
    %v965 = vpop.f32.mrb[0].mxu0
    %966 = vmatprep.mubr.f32.mxu0 0.0
    %967 = vmatmul.mubr.f32.gmra.mrb[0].mxu0 %v895
    %v968 = vpop.f32.mrb[0].mxu0
    %v969 = vadd.f32 0.0, %v968
    %v970 = vpop.f32.mrb[0].mxu0
    %971 = vdwg.mxu0
    %v973 = vsel %vm253, %v794, 0
    %v976 = vsel %vm253, %v799, 0
    %978 = vmatprep.subr.mxu0 0.0
    %979 = vmatpush1.msra.mxu0 %v802
    %980 = vmatprep.subr.mxu0 0.0
    %981 = vmatpush1.msra.mxu0 0.0
    %982 = vmatprep.subr.mxu0 0.0
    %983 = vmatpush1.msra.mxu0 0.0
    %984 = vmatprep.subr.mxu0 0.0
    %985 = vmatpush1.msra.mxu0 0.0
    %986 = vmatprep.subr.mxu0 0.0
    %987 = vmatpush1.msra.mxu0 0.0
    %988 = vmatprep.subr.mxu0 0.0
    %989 = vmatpush1.msra.mxu0 0.0
    %990 = vmatprep.subr.mxu0 0.0
    %991 = vmatpush1.msra.mxu0 0.0
    %992 = vmatprep.subr.mxu0 0.0
    %993 = vmatpush1.msra.mxu0 0.0
    %994 = vmatprep.subr.mxu0 0.0
    %995 = vmatpush1.msra.mxu0 0.0
    %996 = vmatprep.subr.mxu0 0.0
    %997 = vmatpush1.msra.mxu0 0.0
    %998 = vmatprep.subr.mxu0 0.0
    %999 = vmatpush1.msra.mxu0 0.0
    %1000 = vmatprep.subr.mxu0 0.0
    %1001 = vmatpush1.msra.mxu0 0.0
    %1002 = vmatprep.subr.mxu0 0.0
    %1003 = vmatpush1.msra.mxu0 0.0
    %1004 = vmatprep.subr.mxu0 0.0
    %1005 = vmatpush1.msra.mxu0 0.0
    %1006 = vmatprep.subr.mxu0 0.0
    %1007 = vmatpush1.msra.mxu0 0.0
    %1008 = vmatprep.subr.mxu0 0.0
    %1009 = vmatpush1.msra.mxu0 0.0
    %1010 = vmatprep.subr.mxu0 0.0
    %1011 = vmatpush1.msra.mxu0 0.0
    %1012 = vmatprep.subr.mxu0 0.0
    %1013 = vmatpush1.msra.mxu0 0.0
    %1014 = vmatprep.subr.mxu0 0.0
    %1015 = vmatpush1.msra.mxu0 0.0
    %1016 = vmatprep.subr.mxu0 0.0
    %1017 = vmatpush1.msra.mxu0 0.0
    %1018 = vmatprep.subr.mxu0 0.0
    %1019 = vmatpush1.msra.mxu0 0.0
    %1020 = vmatprep.subr.mxu0 0.0
    %1021 = vmatpush1.msra.mxu0 0.0
    %1022 = vmatprep.subr.mxu0 0.0
    %1023 = vmatpush1.msra.mxu0 0.0
    %1024 = vmatprep.subr.mxu0 0.0
    %1025 = vmatpush1.msra.mxu0 0.0
    %1026 = vmatprep.subr.mxu0 0.0
    %1027 = vmatpush1.msra.mxu0 0.0
    %1028 = vmatprep.subr.mxu0 0.0
    %1029 = vmatpush1.msra.mxu0 0.0
    %1030 = vmatprep.subr.mxu0 0.0
    %1031 = vmatpush1.msra.mxu0 0.0
    %1032 = vmatprep.subr.mxu0 0.0
    %1033 = vmatpush1.msra.mxu0 0.0
    %1034 = vmatprep.subr.mxu0 0.0
    %1035 = vmatpush1.msra.mxu0 0.0
    %1036 = vmatprep.subr.mxu0 0.0
    %1037 = vmatpush1.msra.mxu0 0.0
    %1038 = vmatprep.subr.mxu0 0.0
    %1039 = vmatpush1.msra.mxu0 0.0
    %1040 = vmatprep.subr.mxu0 0.0
    %1041 = vmatpush1.msra.mxu0 0.0
    %1042 = vmatprep.mubr.f32.mxu0 0.0
    %1043 = vmatmul.mubr.f32.gmra.mrb[0].mxu0 %v973
    %v1044 = vpop.f32.mrb[0].mxu0
    %v1045 = vadd.f32 %v964, %v1044
    %v1046 = vpop.f32.mrb[0].mxu0
    %1047 = vmatprep.mubr.f32.mxu0 0.0
    %1048 = vmatmul.mubr.f32.gmra.mrb[0].mxu0 %v976
    %v1049 = vpop.f32.mrb[0].mxu0
    %v1050 = vadd.f32 %v969, %v1049
    %v1051 = vpop.f32.mrb[0].mxu0
    %1052 = vdwg.mxu0
    %1053 = vrot.lane.b32.xlu0 %v239, 48
    %v1054 = vpop.permute.xlu0 %1053
    %1055 = vrot.lane.b32.xlu0 %v244, 48
    %v1056 = vpop.permute.xlu0 %1055
    %v1060 = vsel %vm626, %v711, 0
    %v1063 = vsel %vm626, %v712, 0
    %1065 = vmatprep.subr.mxu0 0.0
    %1066 = vmatpush1.msra.mxu0 %v1054
    %1067 = vmatprep.subr.mxu0 0.0
    %1068 = vmatpush1.msra.mxu0 %v1056
    %1069 = vmatprep.subr.mxu0 0.0
    %1070 = vmatpush1.msra.mxu0 0.0
    %1071 = vmatprep.subr.mxu0 0.0
    %1072 = vmatpush1.msra.mxu0 0.0
    %1073 = vmatprep.subr.mxu0 0.0
    %1074 = vmatpush1.msra.mxu0 0.0
    %1075 = vmatprep.subr.mxu0 0.0
    %1076 = vmatpush1.msra.mxu0 0.0
    %1077 = vmatprep.subr.mxu0 0.0
    %1078 = vmatpush1.msra.mxu0 0.0
    %1079 = vmatprep.subr.mxu0 0.0
    %1080 = vmatpush1.msra.mxu0 0.0
    %1081 = vmatprep.subr.mxu0 0.0
    %1082 = vmatpush1.msra.mxu0 0.0
    %1083 = vmatprep.subr.mxu0 0.0
    %1084 = vmatpush1.msra.mxu0 0.0
    %1085 = vmatprep.subr.mxu0 0.0
    %1086 = vmatpush1.msra.mxu0 0.0
    %1087 = vmatprep.subr.mxu0 0.0
    %1088 = vmatpush1.msra.mxu0 0.0
    %1089 = vmatprep.subr.mxu0 0.0
    %1090 = vmatpush1.msra.mxu0 0.0
    %1091 = vmatprep.subr.mxu0 0.0
    %1092 = vmatpush1.msra.mxu0 0.0
    %1093 = vmatprep.subr.mxu0 0.0
    %1094 = vmatpush1.msra.mxu0 0.0
    %1095 = vmatprep.subr.mxu0 0.0
    %1096 = vmatpush1.msra.mxu0 0.0
    %1097 = vmatprep.subr.mxu0 0.0
    %1098 = vmatpush1.msra.mxu0 0.0
    %1099 = vmatprep.subr.mxu0 0.0
    %1100 = vmatpush1.msra.mxu0 0.0
    %1101 = vmatprep.subr.mxu0 0.0
    %1102 = vmatpush1.msra.mxu0 0.0
    %1103 = vmatprep.subr.mxu0 0.0
    %1104 = vmatpush1.msra.mxu0 0.0
    %1105 = vmatprep.subr.mxu0 0.0
    %1106 = vmatpush1.msra.mxu0 0.0
    %1107 = vmatprep.subr.mxu0 0.0
    %1108 = vmatpush1.msra.mxu0 0.0
    %1109 = vmatprep.subr.mxu0 0.0
    %1110 = vmatpush1.msra.mxu0 0.0
    %1111 = vmatprep.subr.mxu0 0.0
    %1112 = vmatpush1.msra.mxu0 0.0
    %1113 = vmatprep.subr.mxu0 0.0
    %1114 = vmatpush1.msra.mxu0 0.0
    %1115 = vmatprep.subr.mxu0 0.0
    %1116 = vmatpush1.msra.mxu0 0.0
    %1117 = vmatprep.subr.mxu0 0.0
    %1118 = vmatpush1.msra.mxu0 0.0
    %1119 = vmatprep.subr.mxu0 0.0
    %1120 = vmatpush1.msra.mxu0 0.0
    %1121 = vmatprep.subr.mxu0 0.0
    %1122 = vmatpush1.msra.mxu0 0.0
    %1123 = vmatprep.subr.mxu0 0.0
    %1124 = vmatpush1.msra.mxu0 0.0
    %1125 = vmatprep.subr.mxu0 0.0
    %1126 = vmatpush1.msra.mxu0 0.0
    %1127 = vmatprep.subr.mxu0 0.0
    %1128 = vmatpush1.msra.mxu0 0.0
    %1129 = vmatprep.mubr.f32.mxu0 0.0
    %1130 = vmatmul.mubr.f32.gmra.mrb[0].mxu0 %v1060
    %v1131 = vpop.f32.mrb[0].mxu0
    %v1132 = vadd.f32 0.0, %v1131
    %v1133 = vpop.f32.mrb[0].mxu0
    %1134 = vmatprep.mubr.f32.mxu0 0.0
    %1135 = vmatmul.mubr.f32.gmra.mrb[0].mxu0 %v1063
    %v1136 = vpop.f32.mrb[0].mxu0
    %v1137 = vadd.f32 0.0, %v1136
    %v1138 = vpop.f32.mrb[0].mxu0
    %1139 = vdwg.mxu0
    %v1140 = vld [vmem:[%s4 + $0x10] sm:$0xff]
    %v1142 = vsel %vm253, %v1132, 0
    %v1145 = vsel %vm253, %v1137, 0
    %1147 = vmatprep.subr.mxu0 0.0
    %1148 = vmatpush1.msra.mxu0 %v1140
    %1149 = vmatprep.subr.mxu0 0.0
    %1150 = vmatpush1.msra.mxu0 0.0
    %1151 = vmatprep.subr.mxu0 0.0
    %1152 = vmatpush1.msra.mxu0 0.0
    %1153 = vmatprep.subr.mxu0 0.0
    %1154 = vmatpush1.msra.mxu0 0.0
    %1155 = vmatprep.subr.mxu0 0.0
    %1156 = vmatpush1.msra.mxu0 0.0
    %1157 = vmatprep.subr.mxu0 0.0
    %1158 = vmatpush1.msra.mxu0 0.0
    %1159 = vmatprep.subr.mxu0 0.0
    %1160 = vmatpush1.msra.mxu0 0.0
    %1161 = vmatprep.subr.mxu0 0.0
    %1162 = vmatpush1.msra.mxu0 0.0
    %1163 = vmatprep.subr.mxu0 0.0
    %1164 = vmatpush1.msra.mxu0 0.0
    %1165 = vmatprep.subr.mxu0 0.0
    %1166 = vmatpush1.msra.mxu0 0.0
    %1167 = vmatprep.subr.mxu0 0.0
    %1168 = vmatpush1.msra.mxu0 0.0
    %1169 = vmatprep.subr.mxu0 0.0
    %1170 = vmatpush1.msra.mxu0 0.0
    %1171 = vmatprep.subr.mxu0 0.0
    %1172 = vmatpush1.msra.mxu0 0.0
    %1173 = vmatprep.subr.mxu0 0.0
    %1174 = vmatpush1.msra.mxu0 0.0
    %1175 = vmatprep.subr.mxu0 0.0
    %1176 = vmatpush1.msra.mxu0 0.0
    %1177 = vmatprep.subr.mxu0 0.0
    %1178 = vmatpush1.msra.mxu0 0.0
    %1179 = vmatprep.subr.mxu0 0.0
    %1180 = vmatpush1.msra.mxu0 0.0
    %1181 = vmatprep.subr.mxu0 0.0
    %1182 = vmatpush1.msra.mxu0 0.0
    %1183 = vmatprep.subr.mxu0 0.0
    %1184 = vmatpush1.msra.mxu0 0.0
    %1185 = vmatprep.subr.mxu0 0.0
    %1186 = vmatpush1.msra.mxu0 0.0
    %1187 = vmatprep.subr.mxu0 0.0
    %1188 = vmatpush1.msra.mxu0 0.0
    %1189 = vmatprep.subr.mxu0 0.0
    %1190 = vmatpush1.msra.mxu0 0.0
    %1191 = vmatprep.subr.mxu0 0.0
    %1192 = vmatpush1.msra.mxu0 0.0
    %1193 = vmatprep.subr.mxu0 0.0
    %1194 = vmatpush1.msra.mxu0 0.0
    %1195 = vmatprep.subr.mxu0 0.0
    %1196 = vmatpush1.msra.mxu0 0.0
    %1197 = vmatprep.subr.mxu0 0.0
    %1198 = vmatpush1.msra.mxu0 0.0
    %1199 = vmatprep.subr.mxu0 0.0
    %1200 = vmatpush1.msra.mxu0 0.0
    %1201 = vmatprep.subr.mxu0 0.0
    %1202 = vmatpush1.msra.mxu0 0.0
    %1203 = vmatprep.subr.mxu0 0.0
    %1204 = vmatpush1.msra.mxu0 0.0
    %1205 = vmatprep.subr.mxu0 0.0
    %1206 = vmatpush1.msra.mxu0 0.0
    %1207 = vmatprep.subr.mxu0 0.0
    %1208 = vmatpush1.msra.mxu0 0.0
    %1209 = vmatprep.subr.mxu0 0.0
    %1210 = vmatpush1.msra.mxu0 0.0
    %1211 = vmatprep.mubr.f32.mxu0 0.0
    %1212 = vmatmul.mubr.f32.gmra.mrb[0].mxu0 %v1142
    %v1213 = vpop.f32.mrb[0].mxu0
    %v1214 = vadd.f32 0.0, %v1213
    %v1215 = vpop.f32.mrb[0].mxu0
    %1216 = vmatprep.mubr.f32.mxu0 0.0
    %1217 = vmatmul.mubr.f32.gmra.mrb[0].mxu0 %v1145
    %v1218 = vpop.f32.mrb[0].mxu0
    %v1219 = vadd.f32 0.0, %v1218
    %v1220 = vpop.f32.mrb[0].mxu0
    %1221 = vdwg.mxu0
    %v1222 = vadd.f32 %v1045, %v1214
    %v1223 = vadd.f32 %v1050, %v1219
    %1224 = vrot.lane.b32.xlu0 %v239, 40
    %v1225 = vpop.permute.xlu0 %1224
    %1226 = vrot.lane.b32.xlu0 %v244, 40
    %v1227 = vpop.permute.xlu0 %1226
    %v1231 = vsel %vm626, %v713, 0
    %v1234 = vsel %vm626, %v714, 0
    %1236 = vmatprep.subr.mxu0 0.0
    %1237 = vmatpush1.msra.mxu0 %v1225
    %1238 = vmatprep.subr.mxu0 0.0
    %1239 = vmatpush1.msra.mxu0 %v1227
    %1240 = vmatprep.subr.mxu0 0.0
    %1241 = vmatpush1.msra.mxu0 0.0
    %1242 = vmatprep.subr.mxu0 0.0
    %1243 = vmatpush1.msra.mxu0 0.0
    %1244 = vmatprep.subr.mxu0 0.0
    %1245 = vmatpush1.msra.mxu0 0.0
    %1246 = vmatprep.subr.mxu0 0.0
    %1247 = vmatpush1.msra.mxu0 0.0
    %1248 = vmatprep.subr.mxu0 0.0
    %1249 = vmatpush1.msra.mxu0 0.0
    %1250 = vmatprep.subr.mxu0 0.0
    %1251 = vmatpush1.msra.mxu0 0.0
    %1252 = vmatprep.subr.mxu0 0.0
    %1253 = vmatpush1.msra.mxu0 0.0
    %1254 = vmatprep.subr.mxu0 0.0
    %1255 = vmatpush1.msra.mxu0 0.0
    %1256 = vmatprep.subr.mxu0 0.0
    %1257 = vmatpush1.msra.mxu0 0.0
    %1258 = vmatprep.subr.mxu0 0.0
    %1259 = vmatpush1.msra.mxu0 0.0
    %1260 = vmatprep.subr.mxu0 0.0
    %1261 = vmatpush1.msra.mxu0 0.0
    %1262 = vmatprep.subr.mxu0 0.0
    %1263 = vmatpush1.msra.mxu0 0.0
    %1264 = vmatprep.subr.mxu0 0.0
    %1265 = vmatpush1.msra.mxu0 0.0
    %1266 = vmatprep.subr.mxu0 0.0
    %1267 = vmatpush1.msra.mxu0 0.0
    %1268 = vmatprep.subr.mxu0 0.0
    %1269 = vmatpush1.msra.mxu0 0.0
    %1270 = vmatprep.subr.mxu0 0.0
    %1271 = vmatpush1.msra.mxu0 0.0
    %1272 = vmatprep.subr.mxu0 0.0
    %1273 = vmatpush1.msra.mxu0 0.0
    %1274 = vmatprep.subr.mxu0 0.0
    %1275 = vmatpush1.msra.mxu0 0.0
    %1276 = vmatprep.subr.mxu0 0.0
    %1277 = vmatpush1.msra.mxu0 0.0
    %1278 = vmatprep.subr.mxu0 0.0
    %1279 = vmatpush1.msra.mxu0 0.0
    %1280 = vmatprep.subr.mxu0 0.0
    %1281 = vmatpush1.msra.mxu0 0.0
    %1282 = vmatprep.subr.mxu0 0.0
    %1283 = vmatpush1.msra.mxu0 0.0
    %1284 = vmatprep.subr.mxu0 0.0
    %1285 = vmatpush1.msra.mxu0 0.0
    %1286 = vmatprep.subr.mxu0 0.0
    %1287 = vmatpush1.msra.mxu0 0.0
    %1288 = vmatprep.subr.mxu0 0.0
    %1289 = vmatpush1.msra.mxu0 0.0
    %1290 = vmatprep.subr.mxu0 0.0
    %1291 = vmatpush1.msra.mxu0 0.0
    %1292 = vmatprep.subr.mxu0 0.0
    %1293 = vmatpush1.msra.mxu0 0.0
    %1294 = vmatprep.subr.mxu0 0.0
    %1295 = vmatpush1.msra.mxu0 0.0
    %1296 = vmatprep.subr.mxu0 0.0
    %1297 = vmatpush1.msra.mxu0 0.0
    %1298 = vmatprep.subr.mxu0 0.0
    %1299 = vmatpush1.msra.mxu0 0.0
    %1300 = vmatprep.mubr.f32.mxu0 0.0
    %1301 = vmatmul.mubr.f32.gmra.mrb[0].mxu0 %v1231
    %v1302 = vpop.f32.mrb[0].mxu0
    %v1303 = vadd.f32 0.0, %v1302
    %v1304 = vpop.f32.mrb[0].mxu0
    %1305 = vmatprep.mubr.f32.mxu0 0.0
    %1306 = vmatmul.mubr.f32.gmra.mrb[0].mxu0 %v1234
    %v1307 = vpop.f32.mrb[0].mxu0
    %v1308 = vadd.f32 0.0, %v1307
    %v1309 = vpop.f32.mrb[0].mxu0
    %1310 = vdwg.mxu0
    %v1311 = vld [vmem:[%s4 + $0x18] sm:$0xff]
    %v1313 = vsel %vm253, %v1303, 0
    %v1316 = vsel %vm253, %v1308, 0
    %1318 = vmatprep.subr.mxu0 0.0
    %1319 = vmatpush1.msra.mxu0 %v1311
    %1320 = vmatprep.subr.mxu0 0.0
    %1321 = vmatpush1.msra.mxu0 0.0
    %1322 = vmatprep.subr.mxu0 0.0
    %1323 = vmatpush1.msra.mxu0 0.0
    %1324 = vmatprep.subr.mxu0 0.0
    %1325 = vmatpush1.msra.mxu0 0.0
    %1326 = vmatprep.subr.mxu0 0.0
    %1327 = vmatpush1.msra.mxu0 0.0
    %1328 = vmatprep.subr.mxu0 0.0
    %1329 = vmatpush1.msra.mxu0 0.0
    %1330 = vmatprep.subr.mxu0 0.0
    %1331 = vmatpush1.msra.mxu0 0.0
    %1332 = vmatprep.subr.mxu0 0.0
    %1333 = vmatpush1.msra.mxu0 0.0
    %1334 = vmatprep.subr.mxu0 0.0
    %1335 = vmatpush1.msra.mxu0 0.0
    %1336 = vmatprep.subr.mxu0 0.0
    %1337 = vmatpush1.msra.mxu0 0.0
    %1338 = vmatprep.subr.mxu0 0.0
    %1339 = vmatpush1.msra.mxu0 0.0
    %1340 = vmatprep.subr.mxu0 0.0
    %1341 = vmatpush1.msra.mxu0 0.0
    %1342 = vmatprep.subr.mxu0 0.0
    %1343 = vmatpush1.msra.mxu0 0.0
    %1344 = vmatprep.subr.mxu0 0.0
    %1345 = vmatpush1.msra.mxu0 0.0
    %1346 = vmatprep.subr.mxu0 0.0
    %1347 = vmatpush1.msra.mxu0 0.0
    %1348 = vmatprep.subr.mxu0 0.0
    %1349 = vmatpush1.msra.mxu0 0.0
    %1350 = vmatprep.subr.mxu0 0.0
    %1351 = vmatpush1.msra.mxu0 0.0
    %1352 = vmatprep.subr.mxu0 0.0
    %1353 = vmatpush1.msra.mxu0 0.0
    %1354 = vmatprep.subr.mxu0 0.0
    %1355 = vmatpush1.msra.mxu0 0.0
    %1356 = vmatprep.subr.mxu0 0.0
    %1357 = vmatpush1.msra.mxu0 0.0
    %1358 = vmatprep.subr.mxu0 0.0
    %1359 = vmatpush1.msra.mxu0 0.0
    %1360 = vmatprep.subr.mxu0 0.0
    %1361 = vmatpush1.msra.mxu0 0.0
    %1362 = vmatprep.subr.mxu0 0.0
    %1363 = vmatpush1.msra.mxu0 0.0
    %1364 = vmatprep.subr.mxu0 0.0
    %1365 = vmatpush1.msra.mxu0 0.0
    %1366 = vmatprep.subr.mxu0 0.0
    %1367 = vmatpush1.msra.mxu0 0.0
    %1368 = vmatprep.subr.mxu0 0.0
    %1369 = vmatpush1.msra.mxu0 0.0
    %1370 = vmatprep.subr.mxu0 0.0
    %1371 = vmatpush1.msra.mxu0 0.0
    %1372 = vmatprep.subr.mxu0 0.0
    %1373 = vmatpush1.msra.mxu0 0.0
    %1374 = vmatprep.subr.mxu0 0.0
    %1375 = vmatpush1.msra.mxu0 0.0
    %1376 = vmatprep.subr.mxu0 0.0
    %1377 = vmatpush1.msra.mxu0 0.0
    %1378 = vmatprep.subr.mxu0 0.0
    %1379 = vmatpush1.msra.mxu0 0.0
    %1380 = vmatprep.subr.mxu0 0.0
    %1381 = vmatpush1.msra.mxu0 0.0
    %1382 = vmatprep.mubr.f32.mxu0 0.0
    %1383 = vmatmul.mubr.f32.gmra.mrb[0].mxu0 %v1313
    %v1384 = vpop.f32.mrb[0].mxu0
    %v1385 = vadd.f32 0.0, %v1384
    %v1386 = vpop.f32.mrb[0].mxu0
    %1387 = vmatprep.mubr.f32.mxu0 0.0
    %1388 = vmatmul.mubr.f32.gmra.mrb[0].mxu0 %v1316
    %v1389 = vpop.f32.mrb[0].mxu0
    %v1390 = vadd.f32 0.0, %v1389
    %v1391 = vpop.f32.mrb[0].mxu0
    %1392 = vdwg.mxu0
    %v1393 = vadd.f32 %v1222, %v1385
    %v1394 = vadd.f32 %v1223, %v1390
    %v1395 = vld [vmem:[%s4 + $0xa0] sm:$0x1]
    %v1396 = vlaneseq
    %v1397 = vshrl.u32 %v1396, 7
    %v1398 = vsub.s32 0, %v1397
    %v1399 = vrot.slane %v1395, %v1398
    %v1400 = vadd.f32 %v1393, %v1399
    %v1401 = vadd.f32 %v1394, %v1399
    %v1402 = vld [vmem:[%s4 + $0xa2] sm:$0x1]
    %v1403 = vld [vmem:[%s4 + $0xa3] sm:$0x1]
    %v1404 = vsel %vm165, %v1400, 0.0
    %1405 = vadd.xlane.f32.xlu0 %v1404
    %v1406 = vpop.xlane.xlu0 %1405
    %v1407 = vsel %vm165, %v1401, 0.0
    %1408 = vadd.xlane.f32.xlu0 %v1407
    %v1409 = vpop.xlane.xlu0 %1408
    %v1410 = vrcp.pop 32.0
    %v1411 = vmul.f32 %v1406, %v1410
    %v1412 = vmul.f32 %v1409, %v1410
    %v1413 = vmul.f32 %v1400, %v1400
    %v1414 = vmul.f32 %v1401, %v1401
    %v1415 = vsel %vm165, %v1413, 0.0
    %1416 = vadd.xlane.f32.xlu0 %v1415
    %v1417 = vpop.xlane.xlu0 %1416
    %v1418 = vsel %vm165, %v1414, 0.0
    %1419 = vadd.xlane.f32.xlu0 %v1418
    %v1420 = vpop.xlane.xlu0 %1419
    %v1421 = vmul.f32 %v1417, %v1410
    %v1422 = vmul.f32 %v1420, %v1410
    %v1423 = vmul.f32 %v1411, %v1411
    %v1424 = vmul.f32 %v1412, %v1412
    %v1425 = vsub.f32 %v1421, %v1423
    %v1426 = vsub.f32 %v1422, %v1424
    %v1427 = vsub.f32 %v1400, %v1411
    %v1428 = vsub.f32 %v1401, %v1412
    %v1429 = vadd.f32 %v1425, 1e-05
    %v1430 = vadd.f32 %v1426, 1e-05
    %v1431 = vrsqrt.pop %v1429
    %v1432 = vrsqrt.pop %v1430
    %v1433 = vmul.f32 %v1427, %v1431
    %v1434 = vmul.f32 %v1428, %v1432
    %v1435 = vlaneseq
    %v1436 = vshrl.u32 %v1435, 7
    %v1437 = vsub.s32 0, %v1436
    %v1438 = vrot.slane %v1402, %v1437
    %v1439 = vmul.f32 %v1433, %v1438
    %v1440 = vmul.f32 %v1434, %v1438
    %v1441 = vlaneseq
    %v1442 = vshrl.u32 %v1441, 7
    %v1443 = vsub.s32 0, %v1442
    %v1444 = vrot.slane %v1403, %v1443
    %v1445 = vadd.f32 %v1439, %v1444
    %v1446 = vadd.f32 %v1440, %v1444
    %v1447 = vadd.f32 %v1445, %v125
    %v1448 = vadd.f32 %v1446, %v130
    %v1449 = vld [vmem:[%s5] sm:$0xff]
    %v1450 = vld [vmem:[%s5 + $0x8] sm:$0xff]
    %v1451 = vld [vmem:[%s5 + $0x10] sm:$0xff]
    %v1452 = vld [vmem:[%s5 + $0x18] sm:$0xff]
    %v1453 = vld [vmem:[%s5 + $0x20] sm:$0x1]
    %v1454 = vlaneseq
    %v1455 = vshrl.u32 %v1454, 7
    %v1456 = vsub.s32 0, %v1455
    %v1457 = vrot.slane %v1453, %v1456
    %v1459 = vsel %vm165, %v1447, 0
    %v1462 = vsel %vm165, %v1448, 0
    %1464 = vmatprep.subr.mxu0 0.0
    %1465 = vmatpush1.msra.mxu0 %v1449
    %1466 = vmatprep.subr.mxu0 0.0
    %1467 = vmatpush1.msra.mxu0 %v1450
    %1468 = vmatprep.subr.mxu0 0.0
    %1469 = vmatpush1.msra.mxu0 %v1451
    %1470 = vmatprep.subr.mxu0 0.0
    %1471 = vmatpush1.msra.mxu0 %v1452
    %1472 = vmatprep.subr.mxu0 0.0
    %1473 = vmatpush1.msra.mxu0 0.0
    %1474 = vmatprep.subr.mxu0 0.0
    %1475 = vmatpush1.msra.mxu0 0.0
    %1476 = vmatprep.subr.mxu0 0.0
    %1477 = vmatpush1.msra.mxu0 0.0
    %1478 = vmatprep.subr.mxu0 0.0
    %1479 = vmatpush1.msra.mxu0 0.0
    %1480 = vmatprep.subr.mxu0 0.0
    %1481 = vmatpush1.msra.mxu0 0.0
    %1482 = vmatprep.subr.mxu0 0.0
    %1483 = vmatpush1.msra.mxu0 0.0
    %1484 = vmatprep.subr.mxu0 0.0
    %1485 = vmatpush1.msra.mxu0 0.0
    %1486 = vmatprep.subr.mxu0 0.0
    %1487 = vmatpush1.msra.mxu0 0.0
    %1488 = vmatprep.subr.mxu0 0.0
    %1489 = vmatpush1.msra.mxu0 0.0
    %1490 = vmatprep.subr.mxu0 0.0
    %1491 = vmatpush1.msra.mxu0 0.0
    %1492 = vmatprep.subr.mxu0 0.0
    %1493 = vmatpush1.msra.mxu0 0.0
    %1494 = vmatprep.subr.mxu0 0.0
    %1495 = vmatpush1.msra.mxu0 0.0
    %1496 = vmatprep.subr.mxu0 0.0
    %1497 = vmatpush1.msra.mxu0 0.0
    %1498 = vmatprep.subr.mxu0 0.0
    %1499 = vmatpush1.msra.mxu0 0.0
    %1500 = vmatprep.subr.mxu0 0.0
    %1501 = vmatpush1.msra.mxu0 0.0
    %1502 = vmatprep.subr.mxu0 0.0
    %1503 = vmatpush1.msra.mxu0 0.0
    %1504 = vmatprep.subr.mxu0 0.0
    %1505 = vmatpush1.msra.mxu0 0.0
    %1506 = vmatprep.subr.mxu0 0.0
    %1507 = vmatpush1.msra.mxu0 0.0
    %1508 = vmatprep.subr.mxu0 0.0
    %1509 = vmatpush1.msra.mxu0 0.0
    %1510 = vmatprep.subr.mxu0 0.0
    %1511 = vmatpush1.msra.mxu0 0.0
    %1512 = vmatprep.subr.mxu0 0.0
    %1513 = vmatpush1.msra.mxu0 0.0
    %1514 = vmatprep.subr.mxu0 0.0
    %1515 = vmatpush1.msra.mxu0 0.0
    %1516 = vmatprep.subr.mxu0 0.0
    %1517 = vmatpush1.msra.mxu0 0.0
    %1518 = vmatprep.subr.mxu0 0.0
    %1519 = vmatpush1.msra.mxu0 0.0
    %1520 = vmatprep.subr.mxu0 0.0
    %1521 = vmatpush1.msra.mxu0 0.0
    %1522 = vmatprep.subr.mxu0 0.0
    %1523 = vmatpush1.msra.mxu0 0.0
    %1524 = vmatprep.subr.mxu0 0.0
    %1525 = vmatpush1.msra.mxu0 0.0
    %1526 = vmatprep.subr.mxu0 0.0
    %1527 = vmatpush1.msra.mxu0 0.0
    %1528 = vmatprep.mubr.f32.mxu0 0.0
    %1529 = vmatmul.mubr.f32.gmra.mrb[0].mxu0 %v1459
    %v1530 = vpop.f32.mrb[0].mxu0
    %v1531 = vadd.f32 %v1457, %v1530
    %v1532 = vpop.f32.mrb[0].mxu0
    %1533 = vmatprep.mubr.f32.mxu0 0.0
    %1534 = vmatmul.mubr.f32.gmra.mrb[0].mxu0 %v1462
    %v1535 = vpop.f32.mrb[0].mxu0
    %v1536 = vadd.f32 %v1457, %v1535
    %v1537 = vpop.f32.mrb[0].mxu0
    %1538 = vdwg.mxu0
    %v1539 = vmax.f32 %v1531, 0.0
    %v1540 = vmax.f32 %v1536, 0.0
    %v1541 = vld [vmem:[%s4 + $0x20] sm:$0xff]
    %v1542 = vld [vmem:[%s4 + $0x28] sm:$0xff]
    %v1543 = vld [vmem:[%s4 + $0x30] sm:$0xff]
    %v1544 = vld [vmem:[%s4 + $0x38] sm:$0xff]
    %v1545 = vld [vmem:[%s4 + $0x40] sm:$0xff]
    %v1546 = vld [vmem:[%s4 + $0x48] sm:$0xff]
    %v1547 = vld [vmem:[%s4 + $0x50] sm:$0xff]
    %v1548 = vld [vmem:[%s4 + $0x58] sm:$0xff]
    %v1549 = vld [vmem:[%s4 + $0x60] sm:$0xff]
    %v1550 = vld [vmem:[%s4 + $0x68] sm:$0xff]
    %v1551 = vld [vmem:[%s4 + $0x70] sm:$0xff]
    %v1552 = vld [vmem:[%s4 + $0x78] sm:$0xff]
    %v1553 = vld [vmem:[%s4 + $0x80] sm:$0xff]
    %v1554 = vld [vmem:[%s4 + $0x88] sm:$0xff]
    %v1555 = vld [vmem:[%s4 + $0x90] sm:$0xff]
    %v1556 = vld [vmem:[%s4 + $0x98] sm:$0xff]
    %v1557 = vld [vmem:[%s4 + $0xa1] sm:$0x1]
    %v1558 = vlaneseq
    %v1559 = vshrl.u32 %v1558, 7
    %v1560 = vsub.s32 0, %v1559
    %v1561 = vrot.slane %v1557, %v1560
    %1562 = vmatprep.subr.mxu0 0.0
    %1563 = vmatpush1.msra.mxu0 %v1541
    %1564 = vmatprep.subr.mxu0 0.0
    %1565 = vmatpush1.msra.mxu0 %v1542
    %1566 = vmatprep.subr.mxu0 0.0
    %1567 = vmatpush1.msra.mxu0 %v1543
    %1568 = vmatprep.subr.mxu0 0.0
    %1569 = vmatpush1.msra.mxu0 %v1544
    %1570 = vmatprep.subr.mxu0 0.0
    %1571 = vmatpush1.msra.mxu0 %v1545
    %1572 = vmatprep.subr.mxu0 0.0
    %1573 = vmatpush1.msra.mxu0 %v1546
    %1574 = vmatprep.subr.mxu0 0.0
    %1575 = vmatpush1.msra.mxu0 %v1547
    %1576 = vmatprep.subr.mxu0 0.0
    %1577 = vmatpush1.msra.mxu0 %v1548
    %1578 = vmatprep.subr.mxu0 0.0
    %1579 = vmatpush1.msra.mxu0 %v1549
    %1580 = vmatprep.subr.mxu0 0.0
    %1581 = vmatpush1.msra.mxu0 %v1550
    %1582 = vmatprep.subr.mxu0 0.0
    %1583 = vmatpush1.msra.mxu0 %v1551
    %1584 = vmatprep.subr.mxu0 0.0
    %1585 = vmatpush1.msra.mxu0 %v1552
    %1586 = vmatprep.subr.mxu0 0.0
    %1587 = vmatpush1.msra.mxu0 %v1553
    %1588 = vmatprep.subr.mxu0 0.0
    %1589 = vmatpush1.msra.mxu0 %v1554
    %1590 = vmatprep.subr.mxu0 0.0
    %1591 = vmatpush1.msra.mxu0 %v1555
    %1592 = vmatprep.subr.mxu0 0.0
    %1593 = vmatpush1.msra.mxu0 %v1556
    %1594 = vmatprep.subr.mxu0 0.0
    %1595 = vmatpush1.msra.mxu0 0.0
    %1596 = vmatprep.subr.mxu0 0.0
    %1597 = vmatpush1.msra.mxu0 0.0
    %1598 = vmatprep.subr.mxu0 0.0
    %1599 = vmatpush1.msra.mxu0 0.0
    %1600 = vmatprep.subr.mxu0 0.0
    %1601 = vmatpush1.msra.mxu0 0.0
    %1602 = vmatprep.subr.mxu0 0.0
    %1603 = vmatpush1.msra.mxu0 0.0
    %1604 = vmatprep.subr.mxu0 0.0
    %1605 = vmatpush1.msra.mxu0 0.0
    %1606 = vmatprep.subr.mxu0 0.0
    %1607 = vmatpush1.msra.mxu0 0.0
    %1608 = vmatprep.subr.mxu0 0.0
    %1609 = vmatpush1.msra.mxu0 0.0
    %1610 = vmatprep.subr.mxu0 0.0
    %1611 = vmatpush1.msra.mxu0 0.0
    %1612 = vmatprep.subr.mxu0 0.0
    %1613 = vmatpush1.msra.mxu0 0.0
    %1614 = vmatprep.subr.mxu0 0.0
    %1615 = vmatpush1.msra.mxu0 0.0
    %1616 = vmatprep.subr.mxu0 0.0
    %1617 = vmatpush1.msra.mxu0 0.0
    %1618 = vmatprep.subr.mxu0 0.0
    %1619 = vmatpush1.msra.mxu0 0.0
    %1620 = vmatprep.subr.mxu0 0.0
    %1621 = vmatpush1.msra.mxu0 0.0
    %1622 = vmatprep.subr.mxu0 0.0
    %1623 = vmatpush1.msra.mxu0 0.0
    %1624 = vmatprep.subr.mxu0 0.0
    %1625 = vmatpush1.msra.mxu0 0.0
    %1626 = vmatprep.mubr.f32.mxu0 0.0
    %1627 = vmatmul.mubr.f32.gmra.mrb[0].mxu0 %v1539
    %v1628 = vpop.f32.mrb[0].mxu0
    %v1629 = vadd.f32 %v1561, %v1628
    %v1630 = vpop.f32.mrb[0].mxu0
    %1631 = vmatprep.mubr.f32.mxu0 0.0
    %1632 = vmatmul.mubr.f32.gmra.mrb[0].mxu0 %v1540
    %v1633 = vpop.f32.mrb[0].mxu0
    %v1634 = vadd.f32 %v1561, %v1633
    %v1635 = vpop.f32.mrb[0].mxu0
    %1636 = vdwg.mxu0
    %v1637 = vld [vmem:[%s4 + $0xa4] sm:$0x1]
    %v1638 = vld [vmem:[%s4 + $0xa5] sm:$0x1]
    %v1639 = vsel %vm165, %v1629, 0.0
    %1640 = vadd.xlane.f32.xlu0 %v1639
    %v1641 = vpop.xlane.xlu0 %1640
    %v1642 = vsel %vm165, %v1634, 0.0
    %1643 = vadd.xlane.f32.xlu0 %v1642
    %v1644 = vpop.xlane.xlu0 %1643
    %v1645 = vmul.f32 %v1641, %v1410
    %v1646 = vmul.f32 %v1644, %v1410
    %v1647 = vmul.f32 %v1629, %v1629
    %v1648 = vmul.f32 %v1634, %v1634
    %v1649 = vsel %vm165, %v1647, 0.0
    %1650 = vadd.xlane.f32.xlu0 %v1649
    %v1651 = vpop.xlane.xlu0 %1650
    %v1652 = vsel %vm165, %v1648, 0.0
    %1653 = vadd.xlane.f32.xlu0 %v1652
    %v1654 = vpop.xlane.xlu0 %1653
    %v1655 = vmul.f32 %v1651, %v1410
    %v1656 = vmul.f32 %v1654, %v1410
    %v1657 = vmul.f32 %v1645, %v1645
    %v1658 = vmul.f32 %v1646, %v1646
    %v1659 = vsub.f32 %v1655, %v1657
    %v1660 = vsub.f32 %v1656, %v1658
    %v1661 = vsub.f32 %v1629, %v1645
    %v1662 = vsub.f32 %v1634, %v1646
    %v1663 = vadd.f32 %v1659, 1e-05
    %v1664 = vadd.f32 %v1660, 1e-05
    %v1665 = vrsqrt.pop %v1663
    %v1666 = vrsqrt.pop %v1664
    %v1667 = vmul.f32 %v1661, %v1665
    %v1668 = vmul.f32 %v1662, %v1666
    %v1669 = vlaneseq
    %v1670 = vshrl.u32 %v1669, 7
    %v1671 = vsub.s32 0, %v1670
    %v1672 = vrot.slane %v1637, %v1671
    %v1673 = vmul.f32 %v1667, %v1672
    %v1674 = vmul.f32 %v1668, %v1672
    %v1675 = vlaneseq
    %v1676 = vshrl.u32 %v1675, 7
    %v1677 = vsub.s32 0, %v1676
    %v1678 = vrot.slane %v1638, %v1677
    %v1679 = vadd.f32 %v1673, %v1678
    %v1680 = vadd.f32 %v1674, %v1678
    %v1681 = vadd.f32 %v1679, %v1447
    %v1682 = vadd.f32 %v1680, %v1448
    %s1683 = scalar_lea.vmem %s3, 40
    %v1684 = vld [vmem:[%s1683] sm:$0xff]
    %v1685 = vld [vmem:[%s1683 + $0x8] sm:$0xff]
    %v1686 = vld [vmem:[%s1683 + $0x10] sm:$0xff]
    %v1687 = vld [vmem:[%s1683 + $0x18] sm:$0xff]
    %v1688 = vld [vmem:[%s1683 + $0x20] sm:$0x1]
    %v1689 = vlaneseq
    %v1690 = vshrl.u32 %v1689, 7
    %v1691 = vsub.s32 0, %v1690
    %v1692 = vrot.slane %v1688, %v1691
    %1693 = vmatprep.subr.mxu0 0.0
    %1694 = vmatpush1.msra.mxu0 %v1684
    %1695 = vmatprep.subr.mxu0 0.0
    %1696 = vmatpush1.msra.mxu0 %v1685
    %1697 = vmatprep.subr.mxu0 0.0
    %1698 = vmatpush1.msra.mxu0 %v1686
    %1699 = vmatprep.subr.mxu0 0.0
    %1700 = vmatpush1.msra.mxu0 %v1687
    %1701 = vmatprep.subr.mxu0 0.0
    %1702 = vmatpush1.msra.mxu0 0.0
    %1703 = vmatprep.subr.mxu0 0.0
    %1704 = vmatpush1.msra.mxu0 0.0
    %1705 = vmatprep.subr.mxu0 0.0
    %1706 = vmatpush1.msra.mxu0 0.0
    %1707 = vmatprep.subr.mxu0 0.0
    %1708 = vmatpush1.msra.mxu0 0.0
    %1709 = vmatprep.subr.mxu0 0.0
    %1710 = vmatpush1.msra.mxu0 0.0
    %1711 = vmatprep.subr.mxu0 0.0
    %1712 = vmatpush1.msra.mxu0 0.0
    %1713 = vmatprep.subr.mxu0 0.0
    %1714 = vmatpush1.msra.mxu0 0.0
    %1715 = vmatprep.subr.mxu0 0.0
    %1716 = vmatpush1.msra.mxu0 0.0
    %1717 = vmatprep.subr.mxu0 0.0
    %1718 = vmatpush1.msra.mxu0 0.0
    %1719 = vmatprep.subr.mxu0 0.0
    %1720 = vmatpush1.msra.mxu0 0.0
    %1721 = vmatprep.subr.mxu0 0.0
    %1722 = vmatpush1.msra.mxu0 0.0
    %1723 = vmatprep.subr.mxu0 0.0
    %1724 = vmatpush1.msra.mxu0 0.0
    %1725 = vmatprep.subr.mxu0 0.0
    %1726 = vmatpush1.msra.mxu0 0.0
    %1727 = vmatprep.subr.mxu0 0.0
    %1728 = vmatpush1.msra.mxu0 0.0
    %1729 = vmatprep.subr.mxu0 0.0
    %1730 = vmatpush1.msra.mxu0 0.0
    %1731 = vmatprep.subr.mxu0 0.0
    %1732 = vmatpush1.msra.mxu0 0.0
    %1733 = vmatprep.subr.mxu0 0.0
    %1734 = vmatpush1.msra.mxu0 0.0
    %1735 = vmatprep.subr.mxu0 0.0
    %1736 = vmatpush1.msra.mxu0 0.0
    %1737 = vmatprep.subr.mxu0 0.0
    %1738 = vmatpush1.msra.mxu0 0.0
    %1739 = vmatprep.subr.mxu0 0.0
    %1740 = vmatpush1.msra.mxu0 0.0
    %1741 = vmatprep.subr.mxu0 0.0
    %1742 = vmatpush1.msra.mxu0 0.0
    %1743 = vmatprep.subr.mxu0 0.0
    %1744 = vmatpush1.msra.mxu0 0.0
    %1745 = vmatprep.subr.mxu0 0.0
    %1746 = vmatpush1.msra.mxu0 0.0
    %1747 = vmatprep.subr.mxu0 0.0
    %1748 = vmatpush1.msra.mxu0 0.0
    %1749 = vmatprep.subr.mxu0 0.0
    %1750 = vmatpush1.msra.mxu0 0.0
    %1751 = vmatprep.subr.mxu0 0.0
    %1752 = vmatpush1.msra.mxu0 0.0
    %1753 = vmatprep.subr.mxu0 0.0
    %1754 = vmatpush1.msra.mxu0 0.0
    %1755 = vmatprep.subr.mxu0 0.0
    %1756 = vmatpush1.msra.mxu0 0.0
    %1757 = vmatprep.mubr.f32.mxu0 0.0
    %1758 = vmatmul.mubr.f32.gmra.mrb[0].mxu0 %v167
    %v1759 = vpop.f32.mrb[0].mxu0
    %v1760 = vadd.f32 %v1692, %v1759
    %v1761 = vpop.f32.mrb[0].mxu0
    %1762 = vmatprep.mubr.f32.mxu0 0.0
    %1763 = vmatmul.mubr.f32.gmra.mrb[0].mxu0 %v170
    %v1764 = vpop.f32.mrb[0].mxu0
    %v1765 = vadd.f32 %v1692, %v1764
    %v1766 = vpop.f32.mrb[0].mxu0
    %1767 = vdwg.mxu0
    %1770 = vrot.lane.b32.xlu0 %v1760, 96
    %v1771 = vpop.permute.xlu0 %1770
    %1772 = vrot.lane.b32.xlu0 %v1765, 96
    %v1773 = vpop.permute.xlu0 %1772
    %v1774 = vsel %vm253, %v1760, 0
    %v1776 = vsel %vm253, %v1765, 0
    %v1778 = vsel %vm253, %v1771, 0
    %v1780 = vsel %vm253, %v1773, 0
    %1782 = vmatprep.subr.mxu0 0.0
    %1783 = vmatpush1.xpose.msra.mxu0 %v1778
    %1784 = vmatprep.subr.mxu0 0.0
    %1785 = vmatpush1.xpose.msra.mxu0 %v1780
    %1786 = vmatprep.subr.mxu0 0.0
    %1787 = vmatpush1.xpose.msra.mxu0 0.0
    %1788 = vmatprep.subr.mxu0 0.0
    %1789 = vmatpush1.xpose.msra.mxu0 0.0
    %1790 = vmatprep.subr.mxu0 0.0
    %1791 = vmatpush1.xpose.msra.mxu0 0.0
    %1792 = vmatprep.subr.mxu0 0.0
    %1793 = vmatpush1.xpose.msra.mxu0 0.0
    %1794 = vmatprep.subr.mxu0 0.0
    %1795 = vmatpush1.xpose.msra.mxu0 0.0
    %1796 = vmatprep.subr.mxu0 0.0
    %1797 = vmatpush1.xpose.msra.mxu0 0.0
    %1798 = vmatprep.subr.mxu0 0.0
    %1799 = vmatpush1.xpose.msra.mxu0 0.0
    %1800 = vmatprep.subr.mxu0 0.0
    %1801 = vmatpush1.xpose.msra.mxu0 0.0
    %1802 = vmatprep.subr.mxu0 0.0
    %1803 = vmatpush1.xpose.msra.mxu0 0.0
    %1804 = vmatprep.subr.mxu0 0.0
    %1805 = vmatpush1.xpose.msra.mxu0 0.0
    %1806 = vmatprep.subr.mxu0 0.0
    %1807 = vmatpush1.xpose.msra.mxu0 0.0
    %1808 = vmatprep.subr.mxu0 0.0
    %1809 = vmatpush1.xpose.msra.mxu0 0.0
    %1810 = vmatprep.subr.mxu0 0.0
    %1811 = vmatpush1.xpose.msra.mxu0 0.0
    %1812 = vmatprep.subr.mxu0 0.0
    %1813 = vmatpush1.xpose.msra.mxu0 0.0
    %1814 = vmatprep.subr.mxu0 0.0
    %1815 = vmatpush1.xpose.msra.mxu0 0.0
    %1816 = vmatprep.subr.mxu0 0.0
    %1817 = vmatpush1.xpose.msra.mxu0 0.0
    %1818 = vmatprep.subr.mxu0 0.0
    %1819 = vmatpush1.xpose.msra.mxu0 0.0
    %1820 = vmatprep.subr.mxu0 0.0
    %1821 = vmatpush1.xpose.msra.mxu0 0.0
    %1822 = vmatprep.subr.mxu0 0.0
    %1823 = vmatpush1.xpose.msra.mxu0 0.0
    %1824 = vmatprep.subr.mxu0 0.0
    %1825 = vmatpush1.xpose.msra.mxu0 0.0
    %1826 = vmatprep.subr.mxu0 0.0
    %1827 = vmatpush1.xpose.msra.mxu0 0.0
    %1828 = vmatprep.subr.mxu0 0.0
    %1829 = vmatpush1.xpose.msra.mxu0 0.0
    %1830 = vmatprep.subr.mxu0 0.0
    %1831 = vmatpush1.xpose.msra.mxu0 0.0
    %1832 = vmatprep.subr.mxu0 0.0
    %1833 = vmatpush1.xpose.msra.mxu0 0.0
    %1834 = vmatprep.subr.mxu0 0.0
    %1835 = vmatpush1.xpose.msra.mxu0 0.0
    %1836 = vmatprep.subr.mxu0 0.0
    %1837 = vmatpush1.xpose.msra.mxu0 0.0
    %1838 = vmatprep.subr.mxu0 0.0
    %1839 = vmatpush1.xpose.msra.mxu0 0.0
    %1840 = vmatprep.subr.mxu0 0.0
    %1841 = vmatpush1.xpose.msra.mxu0 0.0
    %1842 = vmatprep.subr.mxu0 0.0
    %1843 = vmatpush1.xpose.msra.mxu0 0.0
    %1844 = vmatprep.subr.mxu0 0.0
    %1845 = vmatpush1.xpose.msra.mxu0 0.0
    %1846 = vmatprep.mubr.f32.mxu0 0.0
    %1847 = vmatmul.mubr.f32.gmra.mrb[0].mxu0 %v1774
    %v1848 = vpop.f32.mrb[0].mxu0
    %v1849 = vadd.f32 0.0, %v1848
    %v1850 = vpop.f32.mrb[0].mxu0
    %1851 = vmatprep.mubr.f32.mxu0 0.0
    %1852 = vmatmul.mubr.f32.gmra.mrb[0].mxu0 %v1776
    %v1853 = vpop.f32.mrb[0].mxu0
    %v1854 = vadd.f32 0.0, %v1853
    %v1855 = vpop.f32.mrb[0].mxu0
    %1856 = vdwg.mxu0
    %1857 = vrot.lane.b32.xlu0 %v1760, 120
    %v1858 = vpop.permute.xlu0 %1857
    %1859 = vrot.lane.b32.xlu0 %v1765, 120
    %v1860 = vpop.permute.xlu0 %1859
    %1861 = vrot.lane.b32.xlu0 %v1760, 88
    %v1862 = vpop.permute.xlu0 %1861
    %1863 = vrot.lane.b32.xlu0 %v1765, 88
    %v1864 = vpop.permute.xlu0 %1863
    %v1865 = vsel %vm253, %v1858, 0
    %v1867 = vsel %vm253, %v1860, 0
    %v1869 = vsel %vm253, %v1862, 0
    %v1871 = vsel %vm253, %v1864, 0
    %1873 = vmatprep.subr.mxu0 0.0
    %1874 = vmatpush1.xpose.msra.mxu0 %v1869
    %1875 = vmatprep.subr.mxu0 0.0
    %1876 = vmatpush1.xpose.msra.mxu0 %v1871
    %1877 = vmatprep.subr.mxu0 0.0
    %1878 = vmatpush1.xpose.msra.mxu0 0.0
    %1879 = vmatprep.subr.mxu0 0.0
    %1880 = vmatpush1.xpose.msra.mxu0 0.0
    %1881 = vmatprep.subr.mxu0 0.0
    %1882 = vmatpush1.xpose.msra.mxu0 0.0
    %1883 = vmatprep.subr.mxu0 0.0
    %1884 = vmatpush1.xpose.msra.mxu0 0.0
    %1885 = vmatprep.subr.mxu0 0.0
    %1886 = vmatpush1.xpose.msra.mxu0 0.0
    %1887 = vmatprep.subr.mxu0 0.0
    %1888 = vmatpush1.xpose.msra.mxu0 0.0
    %1889 = vmatprep.subr.mxu0 0.0
    %1890 = vmatpush1.xpose.msra.mxu0 0.0
    %1891 = vmatprep.subr.mxu0 0.0
    %1892 = vmatpush1.xpose.msra.mxu0 0.0
    %1893 = vmatprep.subr.mxu0 0.0
    %1894 = vmatpush1.xpose.msra.mxu0 0.0
    %1895 = vmatprep.subr.mxu0 0.0
    %1896 = vmatpush1.xpose.msra.mxu0 0.0
    %1897 = vmatprep.subr.mxu0 0.0
    %1898 = vmatpush1.xpose.msra.mxu0 0.0
    %1899 = vmatprep.subr.mxu0 0.0
    %1900 = vmatpush1.xpose.msra.mxu0 0.0
    %1901 = vmatprep.subr.mxu0 0.0
    %1902 = vmatpush1.xpose.msra.mxu0 0.0
    %1903 = vmatprep.subr.mxu0 0.0
    %1904 = vmatpush1.xpose.msra.mxu0 0.0
    %1905 = vmatprep.subr.mxu0 0.0
    %1906 = vmatpush1.xpose.msra.mxu0 0.0
    %1907 = vmatprep.subr.mxu0 0.0
    %1908 = vmatpush1.xpose.msra.mxu0 0.0
    %1909 = vmatprep.subr.mxu0 0.0
    %1910 = vmatpush1.xpose.msra.mxu0 0.0
    %1911 = vmatprep.subr.mxu0 0.0
    %1912 = vmatpush1.xpose.msra.mxu0 0.0
    %1913 = vmatprep.subr.mxu0 0.0
    %1914 = vmatpush1.xpose.msra.mxu0 0.0
    %1915 = vmatprep.subr.mxu0 0.0
    %1916 = vmatpush1.xpose.msra.mxu0 0.0
    %1917 = vmatprep.subr.mxu0 0.0
    %1918 = vmatpush1.xpose.msra.mxu0 0.0
    %1919 = vmatprep.subr.mxu0 0.0
    %1920 = vmatpush1.xpose.msra.mxu0 0.0
    %1921 = vmatprep.subr.mxu0 0.0
    %1922 = vmatpush1.xpose.msra.mxu0 0.0
    %1923 = vmatprep.subr.mxu0 0.0
    %1924 = vmatpush1.xpose.msra.mxu0 0.0
    %1925 = vmatprep.subr.mxu0 0.0
    %1926 = vmatpush1.xpose.msra.mxu0 0.0
    %1927 = vmatprep.subr.mxu0 0.0
    %1928 = vmatpush1.xpose.msra.mxu0 0.0
    %1929 = vmatprep.subr.mxu0 0.0
    %1930 = vmatpush1.xpose.msra.mxu0 0.0
    %1931 = vmatprep.subr.mxu0 0.0
    %1932 = vmatpush1.xpose.msra.mxu0 0.0
    %1933 = vmatprep.subr.mxu0 0.0
    %1934 = vmatpush1.xpose.msra.mxu0 0.0
    %1935 = vmatprep.subr.mxu0 0.0
    %1936 = vmatpush1.xpose.msra.mxu0 0.0
    %1937 = vmatprep.mubr.f32.mxu0 0.0
    %1938 = vmatmul.mubr.f32.gmra.mrb[0].mxu0 %v1865
    %v1939 = vpop.f32.mrb[0].mxu0
    %v1940 = vadd.f32 0.0, %v1939
    %v1941 = vpop.f32.mrb[0].mxu0
    %1942 = vmatprep.mubr.f32.mxu0 0.0
    %1943 = vmatmul.mubr.f32.gmra.mrb[0].mxu0 %v1867
    %v1944 = vpop.f32.mrb[0].mxu0
    %v1945 = vadd.f32 0.0, %v1944
    %v1946 = vpop.f32.mrb[0].mxu0
    %1947 = vdwg.mxu0
    %1948 = vrot.lane.b32.xlu0 %v1760, 112
    %v1949 = vpop.permute.xlu0 %1948
    %1950 = vrot.lane.b32.xlu0 %v1765, 112
    %v1951 = vpop.permute.xlu0 %1950
    %1952 = vrot.lane.b32.xlu0 %v1760, 80
    %v1953 = vpop.permute.xlu0 %1952
    %1954 = vrot.lane.b32.xlu0 %v1765, 80
    %v1955 = vpop.permute.xlu0 %1954
    %v1956 = vsel %vm253, %v1949, 0
    %v1958 = vsel %vm253, %v1951, 0
    %v1960 = vsel %vm253, %v1953, 0
    %v1962 = vsel %vm253, %v1955, 0
    %1964 = vmatprep.subr.mxu0 0.0
    %1965 = vmatpush1.xpose.msra.mxu0 %v1960
    %1966 = vmatprep.subr.mxu0 0.0
    %1967 = vmatpush1.xpose.msra.mxu0 %v1962
    %1968 = vmatprep.subr.mxu0 0.0
    %1969 = vmatpush1.xpose.msra.mxu0 0.0
    %1970 = vmatprep.subr.mxu0 0.0
    %1971 = vmatpush1.xpose.msra.mxu0 0.0
    %1972 = vmatprep.subr.mxu0 0.0
    %1973 = vmatpush1.xpose.msra.mxu0 0.0
    %1974 = vmatprep.subr.mxu0 0.0
    %1975 = vmatpush1.xpose.msra.mxu0 0.0
    %1976 = vmatprep.subr.mxu0 0.0
    %1977 = vmatpush1.xpose.msra.mxu0 0.0
    %1978 = vmatprep.subr.mxu0 0.0
    %1979 = vmatpush1.xpose.msra.mxu0 0.0
    %1980 = vmatprep.subr.mxu0 0.0
    %1981 = vmatpush1.xpose.msra.mxu0 0.0
    %1982 = vmatprep.subr.mxu0 0.0
    %1983 = vmatpush1.xpose.msra.mxu0 0.0
    %1984 = vmatprep.subr.mxu0 0.0
    %1985 = vmatpush1.xpose.msra.mxu0 0.0
    %1986 = vmatprep.subr.mxu0 0.0
    %1987 = vmatpush1.xpose.msra.mxu0 0.0
    %1988 = vmatprep.subr.mxu0 0.0
    %1989 = vmatpush1.xpose.msra.mxu0 0.0
    %1990 = vmatprep.subr.mxu0 0.0
    %1991 = vmatpush1.xpose.msra.mxu0 0.0
    %1992 = vmatprep.subr.mxu0 0.0
    %1993 = vmatpush1.xpose.msra.mxu0 0.0
    %1994 = vmatprep.subr.mxu0 0.0
    %1995 = vmatpush1.xpose.msra.mxu0 0.0
    %1996 = vmatprep.subr.mxu0 0.0
    %1997 = vmatpush1.xpose.msra.mxu0 0.0
    %1998 = vmatprep.subr.mxu0 0.0
    %1999 = vmatpush1.xpose.msra.mxu0 0.0
    %2000 = vmatprep.subr.mxu0 0.0
    %2001 = vmatpush1.xpose.msra.mxu0 0.0
    %2002 = vmatprep.subr.mxu0 0.0
    %2003 = vmatpush1.xpose.msra.mxu0 0.0
    %2004 = vmatprep.subr.mxu0 0.0
    %2005 = vmatpush1.xpose.msra.mxu0 0.0
    %2006 = vmatprep.subr.mxu0 0.0
    %2007 = vmatpush1.xpose.msra.mxu0 0.0
    %2008 = vmatprep.subr.mxu0 0.0
    %2009 = vmatpush1.xpose.msra.mxu0 0.0
    %2010 = vmatprep.subr.mxu0 0.0
    %2011 = vmatpush1.xpose.msra.mxu0 0.0
    %2012 = vmatprep.subr.mxu0 0.0
    %2013 = vmatpush1.xpose.msra.mxu0 0.0
    %2014 = vmatprep.subr.mxu0 0.0
    %2015 = vmatpush1.xpose.msra.mxu0 0.0
    %2016 = vmatprep.subr.mxu0 0.0
    %2017 = vmatpush1.xpose.msra.mxu0 0.0
    %2018 = vmatprep.subr.mxu0 0.0
    %2019 = vmatpush1.xpose.msra.mxu0 0.0
    %2020 = vmatprep.subr.mxu0 0.0
    %2021 = vmatpush1.xpose.msra.mxu0 0.0
    %2022 = vmatprep.subr.mxu0 0.0
    %2023 = vmatpush1.xpose.msra.mxu0 0.0
    %2024 = vmatprep.subr.mxu0 0.0
    %2025 = vmatpush1.xpose.msra.mxu0 0.0
    %2026 = vmatprep.subr.mxu0 0.0
    %2027 = vmatpush1.xpose.msra.mxu0 0.0
    %2028 = vmatprep.mubr.f32.mxu0 0.0
    %2029 = vmatmul.mubr.f32.gmra.mrb[0].mxu0 %v1956
    %v2030 = vpop.f32.mrb[0].mxu0
    %v2031 = vadd.f32 0.0, %v2030
    %v2032 = vpop.f32.mrb[0].mxu0
    %2033 = vmatprep.mubr.f32.mxu0 0.0
    %2034 = vmatmul.mubr.f32.gmra.mrb[0].mxu0 %v1958
    %v2035 = vpop.f32.mrb[0].mxu0
    %v2036 = vadd.f32 0.0, %v2035
    %v2037 = vpop.f32.mrb[0].mxu0
    %2038 = vdwg.mxu0
    %2039 = vrot.lane.b32.xlu0 %v1760, 104
    %v2040 = vpop.permute.xlu0 %2039
    %2041 = vrot.lane.b32.xlu0 %v1765, 104
    %v2042 = vpop.permute.xlu0 %2041
    %2043 = vrot.lane.b32.xlu0 %v1760, 72
    %v2044 = vpop.permute.xlu0 %2043
    %2045 = vrot.lane.b32.xlu0 %v1765, 72
    %v2046 = vpop.permute.xlu0 %2045
    %v2047 = vsel %vm253, %v2040, 0
    %v2049 = vsel %vm253, %v2042, 0
    %v2051 = vsel %vm253, %v2044, 0
    %v2053 = vsel %vm253, %v2046, 0
    %2055 = vmatprep.subr.mxu0 0.0
    %2056 = vmatpush1.xpose.msra.mxu0 %v2051
    %2057 = vmatprep.subr.mxu0 0.0
    %2058 = vmatpush1.xpose.msra.mxu0 %v2053
    %2059 = vmatprep.subr.mxu0 0.0
    %2060 = vmatpush1.xpose.msra.mxu0 0.0
    %2061 = vmatprep.subr.mxu0 0.0
    %2062 = vmatpush1.xpose.msra.mxu0 0.0
    %2063 = vmatprep.subr.mxu0 0.0
    %2064 = vmatpush1.xpose.msra.mxu0 0.0
    %2065 = vmatprep.subr.mxu0 0.0
    %2066 = vmatpush1.xpose.msra.mxu0 0.0
    %2067 = vmatprep.subr.mxu0 0.0
    %2068 = vmatpush1.xpose.msra.mxu0 0.0
    %2069 = vmatprep.subr.mxu0 0.0
    %2070 = vmatpush1.xpose.msra.mxu0 0.0
    %2071 = vmatprep.subr.mxu0 0.0
    %2072 = vmatpush1.xpose.msra.mxu0 0.0
    %2073 = vmatprep.subr.mxu0 0.0
    %2074 = vmatpush1.xpose.msra.mxu0 0.0
    %2075 = vmatprep.subr.mxu0 0.0
    %2076 = vmatpush1.xpose.msra.mxu0 0.0
    %2077 = vmatprep.subr.mxu0 0.0
    %2078 = vmatpush1.xpose.msra.mxu0 0.0
    %2079 = vmatprep.subr.mxu0 0.0
    %2080 = vmatpush1.xpose.msra.mxu0 0.0
    %2081 = vmatprep.subr.mxu0 0.0
    %2082 = vmatpush1.xpose.msra.mxu0 0.0
    %2083 = vmatprep.subr.mxu0 0.0
    %2084 = vmatpush1.xpose.msra.mxu0 0.0
    %2085 = vmatprep.subr.mxu0 0.0
    %2086 = vmatpush1.xpose.msra.mxu0 0.0
    %2087 = vmatprep.subr.mxu0 0.0
    %2088 = vmatpush1.xpose.msra.mxu0 0.0
    %2089 = vmatprep.subr.mxu0 0.0
    %2090 = vmatpush1.xpose.msra.mxu0 0.0
    %2091 = vmatprep.subr.mxu0 0.0
    %2092 = vmatpush1.xpose.msra.mxu0 0.0
    %2093 = vmatprep.subr.mxu0 0.0
    %2094 = vmatpush1.xpose.msra.mxu0 0.0
    %2095 = vmatprep.subr.mxu0 0.0
    %2096 = vmatpush1.xpose.msra.mxu0 0.0
    %2097 = vmatprep.subr.mxu0 0.0
    %2098 = vmatpush1.xpose.msra.mxu0 0.0
    %2099 = vmatprep.subr.mxu0 0.0
    %2100 = vmatpush1.xpose.msra.mxu0 0.0
    %2101 = vmatprep.subr.mxu0 0.0
    %2102 = vmatpush1.xpose.msra.mxu0 0.0
    %2103 = vmatprep.subr.mxu0 0.0
    %2104 = vmatpush1.xpose.msra.mxu0 0.0
    %2105 = vmatprep.subr.mxu0 0.0
    %2106 = vmatpush1.xpose.msra.mxu0 0.0
    %2107 = vmatprep.subr.mxu0 0.0
    %2108 = vmatpush1.xpose.msra.mxu0 0.0
    %2109 = vmatprep.subr.mxu0 0.0
    %2110 = vmatpush1.xpose.msra.mxu0 0.0
    %2111 = vmatprep.subr.mxu0 0.0
    %2112 = vmatpush1.xpose.msra.mxu0 0.0
    %2113 = vmatprep.subr.mxu0 0.0
    %2114 = vmatpush1.xpose.msra.mxu0 0.0
    %2115 = vmatprep.subr.mxu0 0.0
    %2116 = vmatpush1.xpose.msra.mxu0 0.0
    %2117 = vmatprep.subr.mxu0 0.0
    %2118 = vmatpush1.xpose.msra.mxu0 0.0
    %2119 = vmatprep.mubr.f32.mxu0 0.0
    %2120 = vmatmul.mubr.f32.gmra.mrb[0].mxu0 %v2047
    %v2121 = vpop.f32.mrb[0].mxu0
    %v2122 = vadd.f32 0.0, %v2121
    %v2123 = vpop.f32.mrb[0].mxu0
    %2124 = vmatprep.mubr.f32.mxu0 0.0
    %2125 = vmatmul.mubr.f32.gmra.mrb[0].mxu0 %v2049
    %v2126 = vpop.f32.mrb[0].mxu0
    %v2127 = vadd.f32 0.0, %v2126
    %v2128 = vpop.f32.mrb[0].mxu0
    %2129 = vdwg.mxu0
    %v2130 = vmul.f32 %v1849, 0.35355338
    %v2131 = vmul.f32 %v1854, 0.35355338
    %v2132 = vmul.f32 %v1940, 0.35355338
    %v2133 = vmul.f32 %v1945, 0.35355338
    %v2134 = vmul.f32 %v2031, 0.35355338
    %v2135 = vmul.f32 %v2036, 0.35355338
    %v2136 = vmul.f32 %v2122, 0.35355338
    %v2137 = vmul.f32 %v2127, 0.35355338
    %v2138 = vadd.f32 %v2130, %v154
    %v2139 = vadd.f32 %v2131, %v155
    %v2140 = vadd.f32 %v2132, %v154
    %v2141 = vadd.f32 %v2133, %v155
    %v2142 = vadd.f32 %v2134, %v154
    %v2143 = vadd.f32 %v2135, %v155
    %v2144 = vadd.f32 %v2136, %v154
    %v2145 = vadd.f32 %v2137, %v155
    %v2146 = vsel %vm626, %v2138, -inf
    %2147 = vmax.xlane.f32.xlu0 %v2146
    %v2148 = vpop.xlane.xlu0 %2147
    %v2149 = vsel %vm626, %v2139, -inf
    %2150 = vmax.xlane.f32.xlu0 %v2149
    %v2151 = vpop.xlane.xlu0 %2150
    %v2152 = vsel %vm626, %v2140, -inf
    %2153 = vmax.xlane.f32.xlu0 %v2152
    %v2154 = vpop.xlane.xlu0 %2153
    %v2155 = vsel %vm626, %v2141, -inf
    %2156 = vmax.xlane.f32.xlu0 %v2155
    %v2157 = vpop.xlane.xlu0 %2156
    %v2158 = vsel %vm626, %v2142, -inf
    %2159 = vmax.xlane.f32.xlu0 %v2158
    %v2160 = vpop.xlane.xlu0 %2159
    %v2161 = vsel %vm626, %v2143, -inf
    %2162 = vmax.xlane.f32.xlu0 %v2161
    %v2163 = vpop.xlane.xlu0 %2162
    %v2164 = vsel %vm626, %v2144, -inf
    %2165 = vmax.xlane.f32.xlu0 %v2164
    %v2166 = vpop.xlane.xlu0 %2165
    %v2167 = vsel %vm626, %v2145, -inf
    %2168 = vmax.xlane.f32.xlu0 %v2167
    %v2169 = vpop.xlane.xlu0 %2168
    %v2170 = vsub.f32 %v2138, %v2148
    %v2171 = vsub.f32 %v2139, %v2151
    %v2172 = vsub.f32 %v2140, %v2154
    %v2173 = vsub.f32 %v2141, %v2157
    %v2174 = vsub.f32 %v2142, %v2160
    %v2175 = vsub.f32 %v2143, %v2163
    %v2176 = vsub.f32 %v2144, %v2166
    %v2177 = vsub.f32 %v2145, %v2169
    %v2178 = vmul.f32 %v2170, 1.442695
    %v2179 = vpow.pop %v2178
    %v2180 = vmul.f32 %v2171, 1.442695
    %v2181 = vpow.pop %v2180
    %v2182 = vmul.f32 %v2172, 1.442695
    %v2183 = vpow.pop %v2182
    %v2184 = vmul.f32 %v2173, 1.442695
    %v2185 = vpow.pop %v2184
    %v2186 = vmul.f32 %v2174, 1.442695
    %v2187 = vpow.pop %v2186
    %v2188 = vmul.f32 %v2175, 1.442695
    %v2189 = vpow.pop %v2188
    %v2190 = vmul.f32 %v2176, 1.442695
    %v2191 = vpow.pop %v2190
    %v2192 = vmul.f32 %v2177, 1.442695
    %v2193 = vpow.pop %v2192
    %v2194 = vsel %vm626, %v2179, 0.0
    %2195 = vadd.xlane.f32.xlu0 %v2194
    %v2196 = vpop.xlane.xlu0 %2195
    %v2197 = vsel %vm626, %v2181, 0.0
    %2198 = vadd.xlane.f32.xlu0 %v2197
    %v2199 = vpop.xlane.xlu0 %2198
    %v2200 = vsel %vm626, %v2183, 0.0
    %2201 = vadd.xlane.f32.xlu0 %v2200
    %v2202 = vpop.xlane.xlu0 %2201
    %v2203 = vsel %vm626, %v2185, 0.0
    %2204 = vadd.xlane.f32.xlu0 %v2203
    %v2205 = vpop.xlane.xlu0 %2204
    %v2206 = vsel %vm626, %v2187, 0.0
    %2207 = vadd.xlane.f32.xlu0 %v2206
    %v2208 = vpop.xlane.xlu0 %2207
    %v2209 = vsel %vm626, %v2189, 0.0
    %2210 = vadd.xlane.f32.xlu0 %v2209
    %v2211 = vpop.xlane.xlu0 %2210
    %v2212 = vsel %vm626, %v2191, 0.0
    %2213 = vadd.xlane.f32.xlu0 %v2212
    %v2214 = vpop.xlane.xlu0 %2213
    %v2215 = vsel %vm626, %v2193, 0.0
    %2216 = vadd.xlane.f32.xlu0 %v2215
    %v2217 = vpop.xlane.xlu0 %2216
    %v2218 = vrcp.pop %v2196
    %v2219 = vrcp.pop %v2199
    %v2220 = vrcp.pop %v2202
    %v2221 = vrcp.pop %v2205
    %v2222 = vrcp.pop %v2208
    %v2223 = vrcp.pop %v2211
    %v2224 = vrcp.pop %v2214
    %v2225 = vrcp.pop %v2217
    %v2226 = vmul.f32 %v2179, %v2218
    %v2227 = vmul.f32 %v2181, %v2219
    %v2228 = vmul.f32 %v2183, %v2220
    %v2229 = vmul.f32 %v2185, %v2221
    %v2230 = vmul.f32 %v2187, %v2222
    %v2231 = vmul.f32 %v2189, %v2223
    %v2232 = vmul.f32 %v2191, %v2224
    %v2233 = vmul.f32 %v2193, %v2225
    %2234 = vrot.lane.b32.xlu0 %v1760, 64
    %v2235 = vpop.permute.xlu0 %2234
    %2236 = vrot.lane.b32.xlu0 %v1765, 64
    %v2237 = vpop.permute.xlu0 %2236
    %v2241 = vsel %vm626, %v2226, 0
    %v2244 = vsel %vm626, %v2227, 0
    %2246 = vmatprep.subr.mxu0 0.0
    %2247 = vmatpush1.msra.mxu0 %v2235
    %2248 = vmatprep.subr.mxu0 0.0
    %2249 = vmatpush1.msra.mxu0 %v2237
    %2250 = vmatprep.subr.mxu0 0.0
    %2251 = vmatpush1.msra.mxu0 0.0
    %2252 = vmatprep.subr.mxu0 0.0
    %2253 = vmatpush1.msra.mxu0 0.0
    %2254 = vmatprep.subr.mxu0 0.0
    %2255 = vmatpush1.msra.mxu0 0.0
    %2256 = vmatprep.subr.mxu0 0.0
    %2257 = vmatpush1.msra.mxu0 0.0
    %2258 = vmatprep.subr.mxu0 0.0
    %2259 = vmatpush1.msra.mxu0 0.0
    %2260 = vmatprep.subr.mxu0 0.0
    %2261 = vmatpush1.msra.mxu0 0.0
    %2262 = vmatprep.subr.mxu0 0.0
    %2263 = vmatpush1.msra.mxu0 0.0
    %2264 = vmatprep.subr.mxu0 0.0
    %2265 = vmatpush1.msra.mxu0 0.0
    %2266 = vmatprep.subr.mxu0 0.0
    %2267 = vmatpush1.msra.mxu0 0.0
    %2268 = vmatprep.subr.mxu0 0.0
    %2269 = vmatpush1.msra.mxu0 0.0
    %2270 = vmatprep.subr.mxu0 0.0
    %2271 = vmatpush1.msra.mxu0 0.0
    %2272 = vmatprep.subr.mxu0 0.0
    %2273 = vmatpush1.msra.mxu0 0.0
    %2274 = vmatprep.subr.mxu0 0.0
    %2275 = vmatpush1.msra.mxu0 0.0
    %2276 = vmatprep.subr.mxu0 0.0
    %2277 = vmatpush1.msra.mxu0 0.0
    %2278 = vmatprep.subr.mxu0 0.0
    %2279 = vmatpush1.msra.mxu0 0.0
    %2280 = vmatprep.subr.mxu0 0.0
    %2281 = vmatpush1.msra.mxu0 0.0
    %2282 = vmatprep.subr.mxu0 0.0
    %2283 = vmatpush1.msra.mxu0 0.0
    %2284 = vmatprep.subr.mxu0 0.0
    %2285 = vmatpush1.msra.mxu0 0.0
    %2286 = vmatprep.subr.mxu0 0.0
    %2287 = vmatpush1.msra.mxu0 0.0
    %2288 = vmatprep.subr.mxu0 0.0
    %2289 = vmatpush1.msra.mxu0 0.0
    %2290 = vmatprep.subr.mxu0 0.0
    %2291 = vmatpush1.msra.mxu0 0.0
    %2292 = vmatprep.subr.mxu0 0.0
    %2293 = vmatpush1.msra.mxu0 0.0
    %2294 = vmatprep.subr.mxu0 0.0
    %2295 = vmatpush1.msra.mxu0 0.0
    %2296 = vmatprep.subr.mxu0 0.0
    %2297 = vmatpush1.msra.mxu0 0.0
    %2298 = vmatprep.subr.mxu0 0.0
    %2299 = vmatpush1.msra.mxu0 0.0
    %2300 = vmatprep.subr.mxu0 0.0
    %2301 = vmatpush1.msra.mxu0 0.0
    %2302 = vmatprep.subr.mxu0 0.0
    %2303 = vmatpush1.msra.mxu0 0.0
    %2304 = vmatprep.subr.mxu0 0.0
    %2305 = vmatpush1.msra.mxu0 0.0
    %2306 = vmatprep.subr.mxu0 0.0
    %2307 = vmatpush1.msra.mxu0 0.0
    %2308 = vmatprep.subr.mxu0 0.0
    %2309 = vmatpush1.msra.mxu0 0.0
    %2310 = vmatprep.mubr.f32.mxu0 0.0
    %2311 = vmatmul.mubr.f32.gmra.mrb[0].mxu0 %v2241
    %v2312 = vpop.f32.mrb[0].mxu0
    %v2313 = vadd.f32 0.0, %v2312
    %v2314 = vpop.f32.mrb[0].mxu0
    %2315 = vmatprep.mubr.f32.mxu0 0.0
    %2316 = vmatmul.mubr.f32.gmra.mrb[0].mxu0 %v2244
    %v2317 = vpop.f32.mrb[0].mxu0
    %v2318 = vadd.f32 0.0, %v2317
    %v2319 = vpop.f32.mrb[0].mxu0
    %2320 = vdwg.mxu0
    %s2321 = scalar_lea.vmem %s4, 168
    %v2322 = vld [vmem:[%s2321] sm:$0xff]
    %2323 = vrot.lane.b32.xlu0 %v1760, 56
    %v2324 = vpop.permute.xlu0 %2323
    %2325 = vrot.lane.b32.xlu0 %v1765, 56
    %v2326 = vpop.permute.xlu0 %2325
    %v2330 = vsel %vm626, %v2228, 0
    %v2333 = vsel %vm626, %v2229, 0
    %2335 = vmatprep.subr.mxu0 0.0
    %2336 = vmatpush1.msra.mxu0 %v2324
    %2337 = vmatprep.subr.mxu0 0.0
    %2338 = vmatpush1.msra.mxu0 %v2326
    %2339 = vmatprep.subr.mxu0 0.0
    %2340 = vmatpush1.msra.mxu0 0.0
    %2341 = vmatprep.subr.mxu0 0.0
    %2342 = vmatpush1.msra.mxu0 0.0
    %2343 = vmatprep.subr.mxu0 0.0
    %2344 = vmatpush1.msra.mxu0 0.0
    %2345 = vmatprep.subr.mxu0 0.0
    %2346 = vmatpush1.msra.mxu0 0.0
    %2347 = vmatprep.subr.mxu0 0.0
    %2348 = vmatpush1.msra.mxu0 0.0
    %2349 = vmatprep.subr.mxu0 0.0
    %2350 = vmatpush1.msra.mxu0 0.0
    %2351 = vmatprep.subr.mxu0 0.0
    %2352 = vmatpush1.msra.mxu0 0.0
    %2353 = vmatprep.subr.mxu0 0.0
    %2354 = vmatpush1.msra.mxu0 0.0
    %2355 = vmatprep.subr.mxu0 0.0
    %2356 = vmatpush1.msra.mxu0 0.0
    %2357 = vmatprep.subr.mxu0 0.0
    %2358 = vmatpush1.msra.mxu0 0.0
    %2359 = vmatprep.subr.mxu0 0.0
    %2360 = vmatpush1.msra.mxu0 0.0
    %2361 = vmatprep.subr.mxu0 0.0
    %2362 = vmatpush1.msra.mxu0 0.0
    %2363 = vmatprep.subr.mxu0 0.0
    %2364 = vmatpush1.msra.mxu0 0.0
    %2365 = vmatprep.subr.mxu0 0.0
    %2366 = vmatpush1.msra.mxu0 0.0
    %2367 = vmatprep.subr.mxu0 0.0
    %2368 = vmatpush1.msra.mxu0 0.0
    %2369 = vmatprep.subr.mxu0 0.0
    %2370 = vmatpush1.msra.mxu0 0.0
    %2371 = vmatprep.subr.mxu0 0.0
    %2372 = vmatpush1.msra.mxu0 0.0
    %2373 = vmatprep.subr.mxu0 0.0
    %2374 = vmatpush1.msra.mxu0 0.0
    %2375 = vmatprep.subr.mxu0 0.0
    %2376 = vmatpush1.msra.mxu0 0.0
    %2377 = vmatprep.subr.mxu0 0.0
    %2378 = vmatpush1.msra.mxu0 0.0
    %2379 = vmatprep.subr.mxu0 0.0
    %2380 = vmatpush1.msra.mxu0 0.0
    %2381 = vmatprep.subr.mxu0 0.0
    %2382 = vmatpush1.msra.mxu0 0.0
    %2383 = vmatprep.subr.mxu0 0.0
    %2384 = vmatpush1.msra.mxu0 0.0
    %2385 = vmatprep.subr.mxu0 0.0
    %2386 = vmatpush1.msra.mxu0 0.0
    %2387 = vmatprep.subr.mxu0 0.0
    %2388 = vmatpush1.msra.mxu0 0.0
    %2389 = vmatprep.subr.mxu0 0.0
    %2390 = vmatpush1.msra.mxu0 0.0
    %2391 = vmatprep.subr.mxu0 0.0
    %2392 = vmatpush1.msra.mxu0 0.0
    %2393 = vmatprep.subr.mxu0 0.0
    %2394 = vmatpush1.msra.mxu0 0.0
    %2395 = vmatprep.subr.mxu0 0.0
    %2396 = vmatpush1.msra.mxu0 0.0
    %2397 = vmatprep.subr.mxu0 0.0
    %2398 = vmatpush1.msra.mxu0 0.0
    %2399 = vmatprep.mubr.f32.mxu0 0.0
    %2400 = vmatmul.mubr.f32.gmra.mrb[0].mxu0 %v2330
    %v2401 = vpop.f32.mrb[0].mxu0
    %v2402 = vadd.f32 0.0, %v2401
    %v2403 = vpop.f32.mrb[0].mxu0
    %2404 = vmatprep.mubr.f32.mxu0 0.0
    %2405 = vmatmul.mubr.f32.gmra.mrb[0].mxu0 %v2333
    %v2406 = vpop.f32.mrb[0].mxu0
    %v2407 = vadd.f32 0.0, %v2406
    %v2408 = vpop.f32.mrb[0].mxu0
    %2409 = vdwg.mxu0
    %v2410 = vld [vmem:[%s2321 + $0x8] sm:$0xff]
    %v2412 = vsel %vm253, %v2402, 0
    %v2415 = vsel %vm253, %v2407, 0
    %2417 = vmatprep.subr.mxu0 0.0
    %2418 = vmatpush1.msra.mxu0 %v2410
    %2419 = vmatprep.subr.mxu0 0.0
    %2420 = vmatpush1.msra.mxu0 0.0
    %2421 = vmatprep.subr.mxu0 0.0
    %2422 = vmatpush1.msra.mxu0 0.0
    %2423 = vmatprep.subr.mxu0 0.0
    %2424 = vmatpush1.msra.mxu0 0.0
    %2425 = vmatprep.subr.mxu0 0.0
    %2426 = vmatpush1.msra.mxu0 0.0
    %2427 = vmatprep.subr.mxu0 0.0
    %2428 = vmatpush1.msra.mxu0 0.0
    %2429 = vmatprep.subr.mxu0 0.0
    %2430 = vmatpush1.msra.mxu0 0.0
    %2431 = vmatprep.subr.mxu0 0.0
    %2432 = vmatpush1.msra.mxu0 0.0
    %2433 = vmatprep.subr.mxu0 0.0
    %2434 = vmatpush1.msra.mxu0 0.0
    %2435 = vmatprep.subr.mxu0 0.0
    %2436 = vmatpush1.msra.mxu0 0.0
    %2437 = vmatprep.subr.mxu0 0.0
    %2438 = vmatpush1.msra.mxu0 0.0
    %2439 = vmatprep.subr.mxu0 0.0
    %2440 = vmatpush1.msra.mxu0 0.0
    %2441 = vmatprep.subr.mxu0 0.0
    %2442 = vmatpush1.msra.mxu0 0.0
    %2443 = vmatprep.subr.mxu0 0.0
    %2444 = vmatpush1.msra.mxu0 0.0
    %2445 = vmatprep.subr.mxu0 0.0
    %2446 = vmatpush1.msra.mxu0 0.0
    %2447 = vmatprep.subr.mxu0 0.0
    %2448 = vmatpush1.msra.mxu0 0.0
    %2449 = vmatprep.subr.mxu0 0.0
    %2450 = vmatpush1.msra.mxu0 0.0
    %2451 = vmatprep.subr.mxu0 0.0
    %2452 = vmatpush1.msra.mxu0 0.0
    %2453 = vmatprep.subr.mxu0 0.0
    %2454 = vmatpush1.msra.mxu0 0.0
    %2455 = vmatprep.subr.mxu0 0.0
    %2456 = vmatpush1.msra.mxu0 0.0
    %2457 = vmatprep.subr.mxu0 0.0
    %2458 = vmatpush1.msra.mxu0 0.0
    %2459 = vmatprep.subr.mxu0 0.0
    %2460 = vmatpush1.msra.mxu0 0.0
    %2461 = vmatprep.subr.mxu0 0.0
    %2462 = vmatpush1.msra.mxu0 0.0
    %2463 = vmatprep.subr.mxu0 0.0
    %2464 = vmatpush1.msra.mxu0 0.0
    %2465 = vmatprep.subr.mxu0 0.0
    %2466 = vmatpush1.msra.mxu0 0.0
    %2467 = vmatprep.subr.mxu0 0.0
    %2468 = vmatpush1.msra.mxu0 0.0
    %2469 = vmatprep.subr.mxu0 0.0
    %2470 = vmatpush1.msra.mxu0 0.0
    %2471 = vmatprep.subr.mxu0 0.0
    %2472 = vmatpush1.msra.mxu0 0.0
    %2473 = vmatprep.subr.mxu0 0.0
    %2474 = vmatpush1.msra.mxu0 0.0
    %2475 = vmatprep.subr.mxu0 0.0
    %2476 = vmatpush1.msra.mxu0 0.0
    %2477 = vmatprep.subr.mxu0 0.0
    %2478 = vmatpush1.msra.mxu0 0.0
    %2479 = vmatprep.subr.mxu0 0.0
    %2480 = vmatpush1.msra.mxu0 0.0
    %2481 = vmatprep.mubr.f32.mxu0 0.0
    %2482 = vmatmul.mubr.f32.gmra.mrb[0].mxu0 %v2412
    %v2483 = vpop.f32.mrb[0].mxu0
    %v2484 = vadd.f32 0.0, %v2483
    %v2485 = vpop.f32.mrb[0].mxu0
    %2486 = vmatprep.mubr.f32.mxu0 0.0
    %2487 = vmatmul.mubr.f32.gmra.mrb[0].mxu0 %v2415
    %v2488 = vpop.f32.mrb[0].mxu0
    %v2489 = vadd.f32 0.0, %v2488
    %v2490 = vpop.f32.mrb[0].mxu0
    %2491 = vdwg.mxu0
    %v2493 = vsel %vm253, %v2313, 0
    %v2496 = vsel %vm253, %v2318, 0
    %2498 = vmatprep.subr.mxu0 0.0
    %2499 = vmatpush1.msra.mxu0 %v2322
    %2500 = vmatprep.subr.mxu0 0.0
    %2501 = vmatpush1.msra.mxu0 0.0
    %2502 = vmatprep.subr.mxu0 0.0
    %2503 = vmatpush1.msra.mxu0 0.0
    %2504 = vmatprep.subr.mxu0 0.0
    %2505 = vmatpush1.msra.mxu0 0.0
    %2506 = vmatprep.subr.mxu0 0.0
    %2507 = vmatpush1.msra.mxu0 0.0
    %2508 = vmatprep.subr.mxu0 0.0
    %2509 = vmatpush1.msra.mxu0 0.0
    %2510 = vmatprep.subr.mxu0 0.0
    %2511 = vmatpush1.msra.mxu0 0.0
    %2512 = vmatprep.subr.mxu0 0.0
    %2513 = vmatpush1.msra.mxu0 0.0
    %2514 = vmatprep.subr.mxu0 0.0
    %2515 = vmatpush1.msra.mxu0 0.0
    %2516 = vmatprep.subr.mxu0 0.0
    %2517 = vmatpush1.msra.mxu0 0.0
    %2518 = vmatprep.subr.mxu0 0.0
    %2519 = vmatpush1.msra.mxu0 0.0
    %2520 = vmatprep.subr.mxu0 0.0
    %2521 = vmatpush1.msra.mxu0 0.0
    %2522 = vmatprep.subr.mxu0 0.0
    %2523 = vmatpush1.msra.mxu0 0.0
    %2524 = vmatprep.subr.mxu0 0.0
    %2525 = vmatpush1.msra.mxu0 0.0
    %2526 = vmatprep.subr.mxu0 0.0
    %2527 = vmatpush1.msra.mxu0 0.0
    %2528 = vmatprep.subr.mxu0 0.0
    %2529 = vmatpush1.msra.mxu0 0.0
    %2530 = vmatprep.subr.mxu0 0.0
    %2531 = vmatpush1.msra.mxu0 0.0
    %2532 = vmatprep.subr.mxu0 0.0
    %2533 = vmatpush1.msra.mxu0 0.0
    %2534 = vmatprep.subr.mxu0 0.0
    %2535 = vmatpush1.msra.mxu0 0.0
    %2536 = vmatprep.subr.mxu0 0.0
    %2537 = vmatpush1.msra.mxu0 0.0
    %2538 = vmatprep.subr.mxu0 0.0
    %2539 = vmatpush1.msra.mxu0 0.0
    %2540 = vmatprep.subr.mxu0 0.0
    %2541 = vmatpush1.msra.mxu0 0.0
    %2542 = vmatprep.subr.mxu0 0.0
    %2543 = vmatpush1.msra.mxu0 0.0
    %2544 = vmatprep.subr.mxu0 0.0
    %2545 = vmatpush1.msra.mxu0 0.0
    %2546 = vmatprep.subr.mxu0 0.0
    %2547 = vmatpush1.msra.mxu0 0.0
    %2548 = vmatprep.subr.mxu0 0.0
    %2549 = vmatpush1.msra.mxu0 0.0
    %2550 = vmatprep.subr.mxu0 0.0
    %2551 = vmatpush1.msra.mxu0 0.0
    %2552 = vmatprep.subr.mxu0 0.0
    %2553 = vmatpush1.msra.mxu0 0.0
    %2554 = vmatprep.subr.mxu0 0.0
    %2555 = vmatpush1.msra.mxu0 0.0
    %2556 = vmatprep.subr.mxu0 0.0
    %2557 = vmatpush1.msra.mxu0 0.0
    %2558 = vmatprep.subr.mxu0 0.0
    %2559 = vmatpush1.msra.mxu0 0.0
    %2560 = vmatprep.subr.mxu0 0.0
    %2561 = vmatpush1.msra.mxu0 0.0
    %2562 = vmatprep.mubr.f32.mxu0 0.0
    %2563 = vmatmul.mubr.f32.gmra.mrb[0].mxu0 %v2493
    %v2564 = vpop.f32.mrb[0].mxu0
    %v2565 = vadd.f32 %v2484, %v2564
    %v2566 = vpop.f32.mrb[0].mxu0
    %2567 = vmatprep.mubr.f32.mxu0 0.0
    %2568 = vmatmul.mubr.f32.gmra.mrb[0].mxu0 %v2496
    %v2569 = vpop.f32.mrb[0].mxu0
    %v2570 = vadd.f32 %v2489, %v2569
    %v2571 = vpop.f32.mrb[0].mxu0
    %2572 = vdwg.mxu0
    %2573 = vrot.lane.b32.xlu0 %v1760, 48
    %v2574 = vpop.permute.xlu0 %2573
    %2575 = vrot.lane.b32.xlu0 %v1765, 48
    %v2576 = vpop.permute.xlu0 %2575
    %v2580 = vsel %vm626, %v2230, 0
    %v2583 = vsel %vm626, %v2231, 0
    %2585 = vmatprep.subr.mxu0 0.0
    %2586 = vmatpush1.msra.mxu0 %v2574
    %2587 = vmatprep.subr.mxu0 0.0
    %2588 = vmatpush1.msra.mxu0 %v2576
    %2589 = vmatprep.subr.mxu0 0.0
    %2590 = vmatpush1.msra.mxu0 0.0
    %2591 = vmatprep.subr.mxu0 0.0
    %2592 = vmatpush1.msra.mxu0 0.0
    %2593 = vmatprep.subr.mxu0 0.0
    %2594 = vmatpush1.msra.mxu0 0.0
    %2595 = vmatprep.subr.mxu0 0.0
    %2596 = vmatpush1.msra.mxu0 0.0
    %2597 = vmatprep.subr.mxu0 0.0
    %2598 = vmatpush1.msra.mxu0 0.0
    %2599 = vmatprep.subr.mxu0 0.0
    %2600 = vmatpush1.msra.mxu0 0.0
    %2601 = vmatprep.subr.mxu0 0.0
    %2602 = vmatpush1.msra.mxu0 0.0
    %2603 = vmatprep.subr.mxu0 0.0
    %2604 = vmatpush1.msra.mxu0 0.0
    %2605 = vmatprep.subr.mxu0 0.0
    %2606 = vmatpush1.msra.mxu0 0.0
    %2607 = vmatprep.subr.mxu0 0.0
    %2608 = vmatpush1.msra.mxu0 0.0
    %2609 = vmatprep.subr.mxu0 0.0
    %2610 = vmatpush1.msra.mxu0 0.0
    %2611 = vmatprep.subr.mxu0 0.0
    %2612 = vmatpush1.msra.mxu0 0.0
    %2613 = vmatprep.subr.mxu0 0.0
    %2614 = vmatpush1.msra.mxu0 0.0
    %2615 = vmatprep.subr.mxu0 0.0
    %2616 = vmatpush1.msra.mxu0 0.0
    %2617 = vmatprep.subr.mxu0 0.0
    %2618 = vmatpush1.msra.mxu0 0.0
    %2619 = vmatprep.subr.mxu0 0.0
    %2620 = vmatpush1.msra.mxu0 0.0
    %2621 = vmatprep.subr.mxu0 0.0
    %2622 = vmatpush1.msra.mxu0 0.0
    %2623 = vmatprep.subr.mxu0 0.0
    %2624 = vmatpush1.msra.mxu0 0.0
    %2625 = vmatprep.subr.mxu0 0.0
    %2626 = vmatpush1.msra.mxu0 0.0
    %2627 = vmatprep.subr.mxu0 0.0
    %2628 = vmatpush1.msra.mxu0 0.0
    %2629 = vmatprep.subr.mxu0 0.0
    %2630 = vmatpush1.msra.mxu0 0.0
    %2631 = vmatprep.subr.mxu0 0.0
    %2632 = vmatpush1.msra.mxu0 0.0
    %2633 = vmatprep.subr.mxu0 0.0
    %2634 = vmatpush1.msra.mxu0 0.0
    %2635 = vmatprep.subr.mxu0 0.0
    %2636 = vmatpush1.msra.mxu0 0.0
    %2637 = vmatprep.subr.mxu0 0.0
    %2638 = vmatpush1.msra.mxu0 0.0
    %2639 = vmatprep.subr.mxu0 0.0
    %2640 = vmatpush1.msra.mxu0 0.0
    %2641 = vmatprep.subr.mxu0 0.0
    %2642 = vmatpush1.msra.mxu0 0.0
    %2643 = vmatprep.subr.mxu0 0.0
    %2644 = vmatpush1.msra.mxu0 0.0
    %2645 = vmatprep.subr.mxu0 0.0
    %2646 = vmatpush1.msra.mxu0 0.0
    %2647 = vmatprep.subr.mxu0 0.0
    %2648 = vmatpush1.msra.mxu0 0.0
    %2649 = vmatprep.mubr.f32.mxu0 0.0
    %2650 = vmatmul.mubr.f32.gmra.mrb[0].mxu0 %v2580
    %v2651 = vpop.f32.mrb[0].mxu0
    %v2652 = vadd.f32 0.0, %v2651
    %v2653 = vpop.f32.mrb[0].mxu0
    %2654 = vmatprep.mubr.f32.mxu0 0.0
    %2655 = vmatmul.mubr.f32.gmra.mrb[0].mxu0 %v2583
    %v2656 = vpop.f32.mrb[0].mxu0
    %v2657 = vadd.f32 0.0, %v2656
    %v2658 = vpop.f32.mrb[0].mxu0
    %2659 = vdwg.mxu0
    %v2660 = vld [vmem:[%s2321 + $0x10] sm:$0xff]
    %v2662 = vsel %vm253, %v2652, 0
    %v2665 = vsel %vm253, %v2657, 0
    %2667 = vmatprep.subr.mxu0 0.0
    %2668 = vmatpush1.msra.mxu0 %v2660
    %2669 = vmatprep.subr.mxu0 0.0
    %2670 = vmatpush1.msra.mxu0 0.0
    %2671 = vmatprep.subr.mxu0 0.0
    %2672 = vmatpush1.msra.mxu0 0.0
    %2673 = vmatprep.subr.mxu0 0.0
    %2674 = vmatpush1.msra.mxu0 0.0
    %2675 = vmatprep.subr.mxu0 0.0
    %2676 = vmatpush1.msra.mxu0 0.0
    %2677 = vmatprep.subr.mxu0 0.0
    %2678 = vmatpush1.msra.mxu0 0.0
    %2679 = vmatprep.subr.mxu0 0.0
    %2680 = vmatpush1.msra.mxu0 0.0
    %2681 = vmatprep.subr.mxu0 0.0
    %2682 = vmatpush1.msra.mxu0 0.0
    %2683 = vmatprep.subr.mxu0 0.0
    %2684 = vmatpush1.msra.mxu0 0.0
    %2685 = vmatprep.subr.mxu0 0.0
    %2686 = vmatpush1.msra.mxu0 0.0
    %2687 = vmatprep.subr.mxu0 0.0
    %2688 = vmatpush1.msra.mxu0 0.0
    %2689 = vmatprep.subr.mxu0 0.0
    %2690 = vmatpush1.msra.mxu0 0.0
    %2691 = vmatprep.subr.mxu0 0.0
    %2692 = vmatpush1.msra.mxu0 0.0
    %2693 = vmatprep.subr.mxu0 0.0
    %2694 = vmatpush1.msra.mxu0 0.0
    %2695 = vmatprep.subr.mxu0 0.0
    %2696 = vmatpush1.msra.mxu0 0.0
    %2697 = vmatprep.subr.mxu0 0.0
    %2698 = vmatpush1.msra.mxu0 0.0
    %2699 = vmatprep.subr.mxu0 0.0
    %2700 = vmatpush1.msra.mxu0 0.0
    %2701 = vmatprep.subr.mxu0 0.0
    %2702 = vmatpush1.msra.mxu0 0.0
    %2703 = vmatprep.subr.mxu0 0.0
    %2704 = vmatpush1.msra.mxu0 0.0
    %2705 = vmatprep.subr.mxu0 0.0
    %2706 = vmatpush1.msra.mxu0 0.0
    %2707 = vmatprep.subr.mxu0 0.0
    %2708 = vmatpush1.msra.mxu0 0.0
    %2709 = vmatprep.subr.mxu0 0.0
    %2710 = vmatpush1.msra.mxu0 0.0
    %2711 = vmatprep.subr.mxu0 0.0
    %2712 = vmatpush1.msra.mxu0 0.0
    %2713 = vmatprep.subr.mxu0 0.0
    %2714 = vmatpush1.msra.mxu0 0.0
    %2715 = vmatprep.subr.mxu0 0.0
    %2716 = vmatpush1.msra.mxu0 0.0
    %2717 = vmatprep.subr.mxu0 0.0
    %2718 = vmatpush1.msra.mxu0 0.0
    %2719 = vmatprep.subr.mxu0 0.0
    %2720 = vmatpush1.msra.mxu0 0.0
    %2721 = vmatprep.subr.mxu0 0.0
    %2722 = vmatpush1.msra.mxu0 0.0
    %2723 = vmatprep.subr.mxu0 0.0
    %2724 = vmatpush1.msra.mxu0 0.0
    %2725 = vmatprep.subr.mxu0 0.0
    %2726 = vmatpush1.msra.mxu0 0.0
    %2727 = vmatprep.subr.mxu0 0.0
    %2728 = vmatpush1.msra.mxu0 0.0
    %2729 = vmatprep.subr.mxu0 0.0
    %2730 = vmatpush1.msra.mxu0 0.0
    %2731 = vmatprep.mubr.f32.mxu0 0.0
    %2732 = vmatmul.mubr.f32.gmra.mrb[0].mxu0 %v2662
    %v2733 = vpop.f32.mrb[0].mxu0
    %v2734 = vadd.f32 0.0, %v2733
    %v2735 = vpop.f32.mrb[0].mxu0
    %2736 = vmatprep.mubr.f32.mxu0 0.0
    %2737 = vmatmul.mubr.f32.gmra.mrb[0].mxu0 %v2665
    %v2738 = vpop.f32.mrb[0].mxu0
    %v2739 = vadd.f32 0.0, %v2738
    %v2740 = vpop.f32.mrb[0].mxu0
    %2741 = vdwg.mxu0
    %v2742 = vadd.f32 %v2565, %v2734
    %v2743 = vadd.f32 %v2570, %v2739
    %2744 = vrot.lane.b32.xlu0 %v1760, 40
    %v2745 = vpop.permute.xlu0 %2744
    %2746 = vrot.lane.b32.xlu0 %v1765, 40
    %v2747 = vpop.permute.xlu0 %2746
    %v2751 = vsel %vm626, %v2232, 0
    %v2754 = vsel %vm626, %v2233, 0
    %2756 = vmatprep.subr.mxu0 0.0
    %2757 = vmatpush1.msra.mxu0 %v2745
    %2758 = vmatprep.subr.mxu0 0.0
    %2759 = vmatpush1.msra.mxu0 %v2747
    %2760 = vmatprep.subr.mxu0 0.0
    %2761 = vmatpush1.msra.mxu0 0.0
    %2762 = vmatprep.subr.mxu0 0.0
    %2763 = vmatpush1.msra.mxu0 0.0
    %2764 = vmatprep.subr.mxu0 0.0
    %2765 = vmatpush1.msra.mxu0 0.0
    %2766 = vmatprep.subr.mxu0 0.0
    %2767 = vmatpush1.msra.mxu0 0.0
    %2768 = vmatprep.subr.mxu0 0.0
    %2769 = vmatpush1.msra.mxu0 0.0
    %2770 = vmatprep.subr.mxu0 0.0
    %2771 = vmatpush1.msra.mxu0 0.0
    %2772 = vmatprep.subr.mxu0 0.0
    %2773 = vmatpush1.msra.mxu0 0.0
    %2774 = vmatprep.subr.mxu0 0.0
    %2775 = vmatpush1.msra.mxu0 0.0
    %2776 = vmatprep.subr.mxu0 0.0
    %2777 = vmatpush1.msra.mxu0 0.0
    %2778 = vmatprep.subr.mxu0 0.0
    %2779 = vmatpush1.msra.mxu0 0.0
    %2780 = vmatprep.subr.mxu0 0.0
    %2781 = vmatpush1.msra.mxu0 0.0
    %2782 = vmatprep.subr.mxu0 0.0
    %2783 = vmatpush1.msra.mxu0 0.0
    %2784 = vmatprep.subr.mxu0 0.0
    %2785 = vmatpush1.msra.mxu0 0.0
    %2786 = vmatprep.subr.mxu0 0.0
    %2787 = vmatpush1.msra.mxu0 0.0
    %2788 = vmatprep.subr.mxu0 0.0
    %2789 = vmatpush1.msra.mxu0 0.0
    %2790 = vmatprep.subr.mxu0 0.0
    %2791 = vmatpush1.msra.mxu0 0.0
    %2792 = vmatprep.subr.mxu0 0.0
    %2793 = vmatpush1.msra.mxu0 0.0
    %2794 = vmatprep.subr.mxu0 0.0
    %2795 = vmatpush1.msra.mxu0 0.0
    %2796 = vmatprep.subr.mxu0 0.0
    %2797 = vmatpush1.msra.mxu0 0.0
    %2798 = vmatprep.subr.mxu0 0.0
    %2799 = vmatpush1.msra.mxu0 0.0
    %2800 = vmatprep.subr.mxu0 0.0
    %2801 = vmatpush1.msra.mxu0 0.0
    %2802 = vmatprep.subr.mxu0 0.0
    %2803 = vmatpush1.msra.mxu0 0.0
    %2804 = vmatprep.subr.mxu0 0.0
    %2805 = vmatpush1.msra.mxu0 0.0
    %2806 = vmatprep.subr.mxu0 0.0
    %2807 = vmatpush1.msra.mxu0 0.0
    %2808 = vmatprep.subr.mxu0 0.0
    %2809 = vmatpush1.msra.mxu0 0.0
    %2810 = vmatprep.subr.mxu0 0.0
    %2811 = vmatpush1.msra.mxu0 0.0
    %2812 = vmatprep.subr.mxu0 0.0
    %2813 = vmatpush1.msra.mxu0 0.0
    %2814 = vmatprep.subr.mxu0 0.0
    %2815 = vmatpush1.msra.mxu0 0.0
    %2816 = vmatprep.subr.mxu0 0.0
    %2817 = vmatpush1.msra.mxu0 0.0
    %2818 = vmatprep.subr.mxu0 0.0
    %2819 = vmatpush1.msra.mxu0 0.0
    %2820 = vmatprep.mubr.f32.mxu0 0.0
    %2821 = vmatmul.mubr.f32.gmra.mrb[0].mxu0 %v2751
    %v2822 = vpop.f32.mrb[0].mxu0
    %v2823 = vadd.f32 0.0, %v2822
    %v2824 = vpop.f32.mrb[0].mxu0
    %2825 = vmatprep.mubr.f32.mxu0 0.0
    %2826 = vmatmul.mubr.f32.gmra.mrb[0].mxu0 %v2754
    %v2827 = vpop.f32.mrb[0].mxu0
    %v2828 = vadd.f32 0.0, %v2827
    %v2829 = vpop.f32.mrb[0].mxu0
    %2830 = vdwg.mxu0
    %v2831 = vld [vmem:[%s2321 + $0x18] sm:$0xff]
    %v2833 = vsel %vm253, %v2823, 0
    %v2836 = vsel %vm253, %v2828, 0
    %2838 = vmatprep.subr.mxu0 0.0
    %2839 = vmatpush1.msra.mxu0 %v2831
    %2840 = vmatprep.subr.mxu0 0.0
    %2841 = vmatpush1.msra.mxu0 0.0
    %2842 = vmatprep.subr.mxu0 0.0
    %2843 = vmatpush1.msra.mxu0 0.0
    %2844 = vmatprep.subr.mxu0 0.0
    %2845 = vmatpush1.msra.mxu0 0.0
    %2846 = vmatprep.subr.mxu0 0.0
    %2847 = vmatpush1.msra.mxu0 0.0
    %2848 = vmatprep.subr.mxu0 0.0
    %2849 = vmatpush1.msra.mxu0 0.0
    %2850 = vmatprep.subr.mxu0 0.0
    %2851 = vmatpush1.msra.mxu0 0.0
    %2852 = vmatprep.subr.mxu0 0.0
    %2853 = vmatpush1.msra.mxu0 0.0
    %2854 = vmatprep.subr.mxu0 0.0
    %2855 = vmatpush1.msra.mxu0 0.0
    %2856 = vmatprep.subr.mxu0 0.0
    %2857 = vmatpush1.msra.mxu0 0.0
    %2858 = vmatprep.subr.mxu0 0.0
    %2859 = vmatpush1.msra.mxu0 0.0
    %2860 = vmatprep.subr.mxu0 0.0
    %2861 = vmatpush1.msra.mxu0 0.0
    %2862 = vmatprep.subr.mxu0 0.0
    %2863 = vmatpush1.msra.mxu0 0.0
    %2864 = vmatprep.subr.mxu0 0.0
    %2865 = vmatpush1.msra.mxu0 0.0
    %2866 = vmatprep.subr.mxu0 0.0
    %2867 = vmatpush1.msra.mxu0 0.0
    %2868 = vmatprep.subr.mxu0 0.0
    %2869 = vmatpush1.msra.mxu0 0.0
    %2870 = vmatprep.subr.mxu0 0.0
    %2871 = vmatpush1.msra.mxu0 0.0
    %2872 = vmatprep.subr.mxu0 0.0
    %2873 = vmatpush1.msra.mxu0 0.0
    %2874 = vmatprep.subr.mxu0 0.0
    %2875 = vmatpush1.msra.mxu0 0.0
    %2876 = vmatprep.subr.mxu0 0.0
    %2877 = vmatpush1.msra.mxu0 0.0
    %2878 = vmatprep.subr.mxu0 0.0
    %2879 = vmatpush1.msra.mxu0 0.0
    %2880 = vmatprep.subr.mxu0 0.0
    %2881 = vmatpush1.msra.mxu0 0.0
    %2882 = vmatprep.subr.mxu0 0.0
    %2883 = vmatpush1.msra.mxu0 0.0
    %2884 = vmatprep.subr.mxu0 0.0
    %2885 = vmatpush1.msra.mxu0 0.0
    %2886 = vmatprep.subr.mxu0 0.0
    %2887 = vmatpush1.msra.mxu0 0.0
    %2888 = vmatprep.subr.mxu0 0.0
    %2889 = vmatpush1.msra.mxu0 0.0
    %2890 = vmatprep.subr.mxu0 0.0
    %2891 = vmatpush1.msra.mxu0 0.0
    %2892 = vmatprep.subr.mxu0 0.0
    %2893 = vmatpush1.msra.mxu0 0.0
    %2894 = vmatprep.subr.mxu0 0.0
    %2895 = vmatpush1.msra.mxu0 0.0
    %2896 = vmatprep.subr.mxu0 0.0
    %2897 = vmatpush1.msra.mxu0 0.0
    %2898 = vmatprep.subr.mxu0 0.0
    %2899 = vmatpush1.msra.mxu0 0.0
    %2900 = vmatprep.subr.mxu0 0.0
    %2901 = vmatpush1.msra.mxu0 0.0
    %2902 = vmatprep.mubr.f32.mxu0 0.0
    %2903 = vmatmul.mubr.f32.gmra.mrb[0].mxu0 %v2833
    %v2904 = vpop.f32.mrb[0].mxu0
    %v2905 = vadd.f32 0.0, %v2904
    %v2906 = vpop.f32.mrb[0].mxu0
    %2907 = vmatprep.mubr.f32.mxu0 0.0
    %2908 = vmatmul.mubr.f32.gmra.mrb[0].mxu0 %v2836
    %v2909 = vpop.f32.mrb[0].mxu0
    %v2910 = vadd.f32 0.0, %v2909
    %v2911 = vpop.f32.mrb[0].mxu0
    %2912 = vdwg.mxu0
    %v2913 = vadd.f32 %v2742, %v2905
    %v2914 = vadd.f32 %v2743, %v2910
    %v2915 = vld [vmem:[%s2321 + $0xa0] sm:$0x1]
    %v2916 = vlaneseq
    %v2917 = vshrl.u32 %v2916, 7
    %v2918 = vsub.s32 0, %v2917
    %v2919 = vrot.slane %v2915, %v2918
    %v2920 = vadd.f32 %v2913, %v2919
    %v2921 = vadd.f32 %v2914, %v2919
    %v2922 = vld [vmem:[%s2321 + $0xa2] sm:$0x1]
    %v2923 = vld [vmem:[%s2321 + $0xa3] sm:$0x1]
    %v2924 = vsel %vm165, %v2920, 0.0
    %2925 = vadd.xlane.f32.xlu0 %v2924
    %v2926 = vpop.xlane.xlu0 %2925
    %v2927 = vsel %vm165, %v2921, 0.0
    %2928 = vadd.xlane.f32.xlu0 %v2927
    %v2929 = vpop.xlane.xlu0 %2928
    %v2930 = vmul.f32 %v2926, %v1410
    %v2931 = vmul.f32 %v2929, %v1410
    %v2932 = vmul.f32 %v2920, %v2920
    %v2933 = vmul.f32 %v2921, %v2921
    %v2934 = vsel %vm165, %v2932, 0.0
    %2935 = vadd.xlane.f32.xlu0 %v2934
    %v2936 = vpop.xlane.xlu0 %2935
    %v2937 = vsel %vm165, %v2933, 0.0
    %2938 = vadd.xlane.f32.xlu0 %v2937
    %v2939 = vpop.xlane.xlu0 %2938
    %v2940 = vmul.f32 %v2936, %v1410
    %v2941 = vmul.f32 %v2939, %v1410
    %v2942 = vmul.f32 %v2930, %v2930
    %v2943 = vmul.f32 %v2931, %v2931
    %v2944 = vsub.f32 %v2940, %v2942
    %v2945 = vsub.f32 %v2941, %v2943
    %v2946 = vsub.f32 %v2920, %v2930
    %v2947 = vsub.f32 %v2921, %v2931
    %v2948 = vadd.f32 %v2944, 1e-05
    %v2949 = vadd.f32 %v2945, 1e-05
    %v2950 = vrsqrt.pop %v2948
    %v2951 = vrsqrt.pop %v2949
    %v2952 = vmul.f32 %v2946, %v2950
    %v2953 = vmul.f32 %v2947, %v2951
    %v2954 = vlaneseq
    %v2955 = vshrl.u32 %v2954, 7
    %v2956 = vsub.s32 0, %v2955
    %v2957 = vrot.slane %v2922, %v2956
    %v2958 = vmul.f32 %v2952, %v2957
    %v2959 = vmul.f32 %v2953, %v2957
    %v2960 = vlaneseq
    %v2961 = vshrl.u32 %v2960, 7
    %v2962 = vsub.s32 0, %v2961
    %v2963 = vrot.slane %v2923, %v2962
    %v2964 = vadd.f32 %v2958, %v2963
    %v2965 = vadd.f32 %v2959, %v2963
    %v2966 = vadd.f32 %v2964, %v1681
    %v2967 = vadd.f32 %v2965, %v1682
    %s2968 = scalar_lea.vmem %s5, 40
    %v2969 = vld [vmem:[%s2968] sm:$0xff]
    %v2970 = vld [vmem:[%s2968 + $0x8] sm:$0xff]
    %v2971 = vld [vmem:[%s2968 + $0x10] sm:$0xff]
    %v2972 = vld [vmem:[%s2968 + $0x18] sm:$0xff]
    %v2973 = vld [vmem:[%s2968 + $0x20] sm:$0x1]
    %v2974 = vlaneseq
    %v2975 = vshrl.u32 %v2974, 7
    %v2976 = vsub.s32 0, %v2975
    %v2977 = vrot.slane %v2973, %v2976
    %v2979 = vsel %vm165, %v2966, 0
    %v2982 = vsel %vm165, %v2967, 0
    %2984 = vmatprep.subr.mxu0 0.0
    %2985 = vmatpush1.msra.mxu0 %v2969
    %2986 = vmatprep.subr.mxu0 0.0
    %2987 = vmatpush1.msra.mxu0 %v2970
    %2988 = vmatprep.subr.mxu0 0.0
    %2989 = vmatpush1.msra.mxu0 %v2971
    %2990 = vmatprep.subr.mxu0 0.0
    %2991 = vmatpush1.msra.mxu0 %v2972
    %2992 = vmatprep.subr.mxu0 0.0
    %2993 = vmatpush1.msra.mxu0 0.0
    %2994 = vmatprep.subr.mxu0 0.0
    %2995 = vmatpush1.msra.mxu0 0.0
    %2996 = vmatprep.subr.mxu0 0.0
    %2997 = vmatpush1.msra.mxu0 0.0
    %2998 = vmatprep.subr.mxu0 0.0
    %2999 = vmatpush1.msra.mxu0 0.0
    %3000 = vmatprep.subr.mxu0 0.0
    %3001 = vmatpush1.msra.mxu0 0.0
    %3002 = vmatprep.subr.mxu0 0.0
    %3003 = vmatpush1.msra.mxu0 0.0
    %3004 = vmatprep.subr.mxu0 0.0
    %3005 = vmatpush1.msra.mxu0 0.0
    %3006 = vmatprep.subr.mxu0 0.0
    %3007 = vmatpush1.msra.mxu0 0.0
    %3008 = vmatprep.subr.mxu0 0.0
    %3009 = vmatpush1.msra.mxu0 0.0
    %3010 = vmatprep.subr.mxu0 0.0
    %3011 = vmatpush1.msra.mxu0 0.0
    %3012 = vmatprep.subr.mxu0 0.0
    %3013 = vmatpush1.msra.mxu0 0.0
    %3014 = vmatprep.subr.mxu0 0.0
    %3015 = vmatpush1.msra.mxu0 0.0
    %3016 = vmatprep.subr.mxu0 0.0
    %3017 = vmatpush1.msra.mxu0 0.0
    %3018 = vmatprep.subr.mxu0 0.0
    %3019 = vmatpush1.msra.mxu0 0.0
    %3020 = vmatprep.subr.mxu0 0.0
    %3021 = vmatpush1.msra.mxu0 0.0
    %3022 = vmatprep.subr.mxu0 0.0
    %3023 = vmatpush1.msra.mxu0 0.0
    %3024 = vmatprep.subr.mxu0 0.0
    %3025 = vmatpush1.msra.mxu0 0.0
    %3026 = vmatprep.subr.mxu0 0.0
    %3027 = vmatpush1.msra.mxu0 0.0
    %3028 = vmatprep.subr.mxu0 0.0
    %3029 = vmatpush1.msra.mxu0 0.0
    %3030 = vmatprep.subr.mxu0 0.0
    %3031 = vmatpush1.msra.mxu0 0.0
    %3032 = vmatprep.subr.mxu0 0.0
    %3033 = vmatpush1.msra.mxu0 0.0
    %3034 = vmatprep.subr.mxu0 0.0
    %3035 = vmatpush1.msra.mxu0 0.0
    %3036 = vmatprep.subr.mxu0 0.0
    %3037 = vmatpush1.msra.mxu0 0.0
    %3038 = vmatprep.subr.mxu0 0.0
    %3039 = vmatpush1.msra.mxu0 0.0
    %3040 = vmatprep.subr.mxu0 0.0
    %3041 = vmatpush1.msra.mxu0 0.0
    %3042 = vmatprep.subr.mxu0 0.0
    %3043 = vmatpush1.msra.mxu0 0.0
    %3044 = vmatprep.subr.mxu0 0.0
    %3045 = vmatpush1.msra.mxu0 0.0
    %3046 = vmatprep.subr.mxu0 0.0
    %3047 = vmatpush1.msra.mxu0 0.0
    %3048 = vmatprep.mubr.f32.mxu0 0.0
    %3049 = vmatmul.mubr.f32.gmra.mrb[0].mxu0 %v2979
    %v3050 = vpop.f32.mrb[0].mxu0
    %v3051 = vadd.f32 %v2977, %v3050
    %v3052 = vpop.f32.mrb[0].mxu0
    %3053 = vmatprep.mubr.f32.mxu0 0.0
    %3054 = vmatmul.mubr.f32.gmra.mrb[0].mxu0 %v2982
    %v3055 = vpop.f32.mrb[0].mxu0
    %v3056 = vadd.f32 %v2977, %v3055
    %v3057 = vpop.f32.mrb[0].mxu0
    %3058 = vdwg.mxu0
    %v3059 = vmax.f32 %v3051, 0.0
    %v3060 = vmax.f32 %v3056, 0.0
    %v3061 = vld [vmem:[%s2321 + $0x20] sm:$0xff]
    %v3062 = vld [vmem:[%s2321 + $0x28] sm:$0xff]
    %v3063 = vld [vmem:[%s2321 + $0x30] sm:$0xff]
    %v3064 = vld [vmem:[%s2321 + $0x38] sm:$0xff]
    %v3065 = vld [vmem:[%s2321 + $0x40] sm:$0xff]
    %v3066 = vld [vmem:[%s2321 + $0x48] sm:$0xff]
    %v3067 = vld [vmem:[%s2321 + $0x50] sm:$0xff]
    %v3068 = vld [vmem:[%s2321 + $0x58] sm:$0xff]
    %v3069 = vld [vmem:[%s2321 + $0x60] sm:$0xff]
    %v3070 = vld [vmem:[%s2321 + $0x68] sm:$0xff]
    %v3071 = vld [vmem:[%s2321 + $0x70] sm:$0xff]
    %v3072 = vld [vmem:[%s2321 + $0x78] sm:$0xff]
    %v3073 = vld [vmem:[%s2321 + $0x80] sm:$0xff]
    %v3074 = vld [vmem:[%s2321 + $0x88] sm:$0xff]
    %v3075 = vld [vmem:[%s2321 + $0x90] sm:$0xff]
    %v3076 = vld [vmem:[%s2321 + $0x98] sm:$0xff]
    %v3077 = vld [vmem:[%s2321 + $0xa1] sm:$0x1]
    %v3078 = vlaneseq
    %v3079 = vshrl.u32 %v3078, 7
    %v3080 = vsub.s32 0, %v3079
    %v3081 = vrot.slane %v3077, %v3080
    %3082 = vmatprep.subr.mxu0 0.0
    %3083 = vmatpush1.msra.mxu0 %v3061
    %3084 = vmatprep.subr.mxu0 0.0
    %3085 = vmatpush1.msra.mxu0 %v3062
    %3086 = vmatprep.subr.mxu0 0.0
    %3087 = vmatpush1.msra.mxu0 %v3063
    %3088 = vmatprep.subr.mxu0 0.0
    %3089 = vmatpush1.msra.mxu0 %v3064
    %3090 = vmatprep.subr.mxu0 0.0
    %3091 = vmatpush1.msra.mxu0 %v3065
    %3092 = vmatprep.subr.mxu0 0.0
    %3093 = vmatpush1.msra.mxu0 %v3066
    %3094 = vmatprep.subr.mxu0 0.0
    %3095 = vmatpush1.msra.mxu0 %v3067
    %3096 = vmatprep.subr.mxu0 0.0
    %3097 = vmatpush1.msra.mxu0 %v3068
    %3098 = vmatprep.subr.mxu0 0.0
    %3099 = vmatpush1.msra.mxu0 %v3069
    %3100 = vmatprep.subr.mxu0 0.0
    %3101 = vmatpush1.msra.mxu0 %v3070
    %3102 = vmatprep.subr.mxu0 0.0
    %3103 = vmatpush1.msra.mxu0 %v3071
    %3104 = vmatprep.subr.mxu0 0.0
    %3105 = vmatpush1.msra.mxu0 %v3072
    %3106 = vmatprep.subr.mxu0 0.0
    %3107 = vmatpush1.msra.mxu0 %v3073
    %3108 = vmatprep.subr.mxu0 0.0
    %3109 = vmatpush1.msra.mxu0 %v3074
    %3110 = vmatprep.subr.mxu0 0.0
    %3111 = vmatpush1.msra.mxu0 %v3075
    %3112 = vmatprep.subr.mxu0 0.0
    %3113 = vmatpush1.msra.mxu0 %v3076
    %3114 = vmatprep.subr.mxu0 0.0
    %3115 = vmatpush1.msra.mxu0 0.0
    %3116 = vmatprep.subr.mxu0 0.0
    %3117 = vmatpush1.msra.mxu0 0.0
    %3118 = vmatprep.subr.mxu0 0.0
    %3119 = vmatpush1.msra.mxu0 0.0
    %3120 = vmatprep.subr.mxu0 0.0
    %3121 = vmatpush1.msra.mxu0 0.0
    %3122 = vmatprep.subr.mxu0 0.0
    %3123 = vmatpush1.msra.mxu0 0.0
    %3124 = vmatprep.subr.mxu0 0.0
    %3125 = vmatpush1.msra.mxu0 0.0
    %3126 = vmatprep.subr.mxu0 0.0
    %3127 = vmatpush1.msra.mxu0 0.0
    %3128 = vmatprep.subr.mxu0 0.0
    %3129 = vmatpush1.msra.mxu0 0.0
    %3130 = vmatprep.subr.mxu0 0.0
    %3131 = vmatpush1.msra.mxu0 0.0
    %3132 = vmatprep.subr.mxu0 0.0
    %3133 = vmatpush1.msra.mxu0 0.0
    %3134 = vmatprep.subr.mxu0 0.0
    %3135 = vmatpush1.msra.mxu0 0.0
    %3136 = vmatprep.subr.mxu0 0.0
    %3137 = vmatpush1.msra.mxu0 0.0
    %3138 = vmatprep.subr.mxu0 0.0
    %3139 = vmatpush1.msra.mxu0 0.0
    %3140 = vmatprep.subr.mxu0 0.0
    %3141 = vmatpush1.msra.mxu0 0.0
    %3142 = vmatprep.subr.mxu0 0.0
    %3143 = vmatpush1.msra.mxu0 0.0
    %3144 = vmatprep.subr.mxu0 0.0
    %3145 = vmatpush1.msra.mxu0 0.0
    %3146 = vmatprep.mubr.f32.mxu0 0.0
    %3147 = vmatmul.mubr.f32.gmra.mrb[0].mxu0 %v3059
    %v3148 = vpop.f32.mrb[0].mxu0
    %v3149 = vadd.f32 %v3081, %v3148
    %v3150 = vpop.f32.mrb[0].mxu0
    %3151 = vmatprep.mubr.f32.mxu0 0.0
    %3152 = vmatmul.mubr.f32.gmra.mrb[0].mxu0 %v3060
    %v3153 = vpop.f32.mrb[0].mxu0
    %v3154 = vadd.f32 %v3081, %v3153
    %v3155 = vpop.f32.mrb[0].mxu0
    %3156 = vdwg.mxu0
    %v3157 = vld [vmem:[%s2321 + $0xa4] sm:$0x1]
    %v3158 = vld [vmem:[%s2321 + $0xa5] sm:$0x1]
    %v3159 = vsel %vm165, %v3149, 0.0
    %3160 = vadd.xlane.f32.xlu0 %v3159
    %v3161 = vpop.xlane.xlu0 %3160
    %v3162 = vsel %vm165, %v3154, 0.0
    %3163 = vadd.xlane.f32.xlu0 %v3162
    %v3164 = vpop.xlane.xlu0 %3163
    %v3165 = vmul.f32 %v3161, %v1410
    %v3166 = vmul.f32 %v3164, %v1410
    %v3167 = vmul.f32 %v3149, %v3149
    %v3168 = vmul.f32 %v3154, %v3154
    %v3169 = vsel %vm165, %v3167, 0.0
    %3170 = vadd.xlane.f32.xlu0 %v3169
    %v3171 = vpop.xlane.xlu0 %3170
    %v3172 = vsel %vm165, %v3168, 0.0
    %3173 = vadd.xlane.f32.xlu0 %v3172
    %v3174 = vpop.xlane.xlu0 %3173
    %v3175 = vmul.f32 %v3171, %v1410
    %v3176 = vmul.f32 %v3174, %v1410
    %v3177 = vmul.f32 %v3165, %v3165
    %v3178 = vmul.f32 %v3166, %v3166
    %v3179 = vsub.f32 %v3175, %v3177
    %v3180 = vsub.f32 %v3176, %v3178
    %v3181 = vsub.f32 %v3149, %v3165
    %v3182 = vsub.f32 %v3154, %v3166
    %v3183 = vadd.f32 %v3179, 1e-05
    %v3184 = vadd.f32 %v3180, 1e-05
    %v3185 = vrsqrt.pop %v3183
    %v3186 = vrsqrt.pop %v3184
    %v3187 = vmul.f32 %v3181, %v3185
    %v3188 = vmul.f32 %v3182, %v3186
    %v3189 = vlaneseq
    %v3190 = vshrl.u32 %v3189, 7
    %v3191 = vsub.s32 0, %v3190
    %v3192 = vrot.slane %v3157, %v3191
    %v3193 = vmul.f32 %v3187, %v3192
    %v3194 = vmul.f32 %v3188, %v3192
    %v3195 = vlaneseq
    %v3196 = vshrl.u32 %v3195, 7
    %v3197 = vsub.s32 0, %v3196
    %v3198 = vrot.slane %v3158, %v3197
    %v3199 = vadd.f32 %v3193, %v3198
    %v3200 = vadd.f32 %v3194, %v3198
    %v3201 = vadd.f32 %v3199, %v2966
    %v3202 = vadd.f32 %v3200, %v2967
    %v3203 = vld [vmem:[%s2 + $0x50] sm:$0x1]
    %v3204 = vld [vmem:[%s2 + $0x51] sm:$0x1]
    %v3205 = vsel %vm165, %v3201, 0.0
    %3206 = vadd.xlane.f32.xlu0 %v3205
    %v3207 = vpop.xlane.xlu0 %3206
    %v3208 = vsel %vm165, %v3202, 0.0
    %3209 = vadd.xlane.f32.xlu0 %v3208
    %v3210 = vpop.xlane.xlu0 %3209
    %v3211 = vmul.f32 %v3207, %v1410
    %v3212 = vmul.f32 %v3210, %v1410
    %v3213 = vmul.f32 %v3201, %v3201
    %v3214 = vmul.f32 %v3202, %v3202
    %v3215 = vsel %vm165, %v3213, 0.0
    %3216 = vadd.xlane.f32.xlu0 %v3215
    %v3217 = vpop.xlane.xlu0 %3216
    %v3218 = vsel %vm165, %v3214, 0.0
    %3219 = vadd.xlane.f32.xlu0 %v3218
    %v3220 = vpop.xlane.xlu0 %3219
    %v3221 = vmul.f32 %v3217, %v1410
    %v3222 = vmul.f32 %v3220, %v1410
    %v3223 = vmul.f32 %v3211, %v3211
    %v3224 = vmul.f32 %v3212, %v3212
    %v3225 = vsub.f32 %v3221, %v3223
    %v3226 = vsub.f32 %v3222, %v3224
    %v3227 = vsub.f32 %v3201, %v3211
    %v3228 = vsub.f32 %v3202, %v3212
    %v3229 = vadd.f32 %v3225, 1e-05
    %v3230 = vadd.f32 %v3226, 1e-05
    %v3231 = vrsqrt.pop %v3229
    %v3232 = vrsqrt.pop %v3230
    %v3233 = vmul.f32 %v3227, %v3231
    %v3234 = vmul.f32 %v3228, %v3232
    %v3235 = vlaneseq
    %v3236 = vshrl.u32 %v3235, 7
    %v3237 = vsub.s32 0, %v3236
    %v3238 = vrot.slane %v3203, %v3237
    %v3239 = vmul.f32 %v3233, %v3238
    %v3240 = vmul.f32 %v3234, %v3238
    %v3241 = vlaneseq
    %v3242 = vshrl.u32 %v3241, 7
    %v3243 = vsub.s32 0, %v3242
    %v3244 = vrot.slane %v3204, %v3243
    %v3245 = vadd.f32 %v3239, %v3244
    %v3246 = vadd.f32 %v3240, %v3244
    %s3247 = scalar_lea.vmem %s5, 80
    %v3248 = vld [vmem:[%s3247] sm:$0xff]
    %v3249 = vld [vmem:[%s3247 + $0x8] sm:$0xff]
    %v3250 = vld [vmem:[%s3247 + $0x10] sm:$0xff]
    %v3251 = vld [vmem:[%s3247 + $0x18] sm:$0xff]
    %v3252 = vld [vmem:[%s3247 + $0x20] sm:$0x1]
    %v3253 = vlaneseq
    %v3254 = vshrl.u32 %v3253, 7
    %v3255 = vsub.s32 0, %v3254
    %v3256 = vrot.slane %v3252, %v3255
    %v3258 = vsel %vm165, %v3245, 0
    %v3261 = vsel %vm165, %v3246, 0
    %3263 = vmatprep.subr.mxu0 0.0
    %3264 = vmatpush1.msra.mxu0 %v3248
    %3265 = vmatprep.subr.mxu0 0.0
    %3266 = vmatpush1.msra.mxu0 %v3249
    %3267 = vmatprep.subr.mxu0 0.0
    %3268 = vmatpush1.msra.mxu0 %v3250
    %3269 = vmatprep.subr.mxu0 0.0
    %3270 = vmatpush1.msra.mxu0 %v3251
    %3271 = vmatprep.subr.mxu0 0.0
    %3272 = vmatpush1.msra.mxu0 0.0
    %3273 = vmatprep.subr.mxu0 0.0
    %3274 = vmatpush1.msra.mxu0 0.0
    %3275 = vmatprep.subr.mxu0 0.0
    %3276 = vmatpush1.msra.mxu0 0.0
    %3277 = vmatprep.subr.mxu0 0.0
    %3278 = vmatpush1.msra.mxu0 0.0
    %3279 = vmatprep.subr.mxu0 0.0
    %3280 = vmatpush1.msra.mxu0 0.0
    %3281 = vmatprep.subr.mxu0 0.0
    %3282 = vmatpush1.msra.mxu0 0.0
    %3283 = vmatprep.subr.mxu0 0.0
    %3284 = vmatpush1.msra.mxu0 0.0
    %3285 = vmatprep.subr.mxu0 0.0
    %3286 = vmatpush1.msra.mxu0 0.0
    %3287 = vmatprep.subr.mxu0 0.0
    %3288 = vmatpush1.msra.mxu0 0.0
    %3289 = vmatprep.subr.mxu0 0.0
    %3290 = vmatpush1.msra.mxu0 0.0
    %3291 = vmatprep.subr.mxu0 0.0
    %3292 = vmatpush1.msra.mxu0 0.0
    %3293 = vmatprep.subr.mxu0 0.0
    %3294 = vmatpush1.msra.mxu0 0.0
    %3295 = vmatprep.subr.mxu0 0.0
    %3296 = vmatpush1.msra.mxu0 0.0
    %3297 = vmatprep.subr.mxu0 0.0
    %3298 = vmatpush1.msra.mxu0 0.0
    %3299 = vmatprep.subr.mxu0 0.0
    %3300 = vmatpush1.msra.mxu0 0.0
    %3301 = vmatprep.subr.mxu0 0.0
    %3302 = vmatpush1.msra.mxu0 0.0
    %3303 = vmatprep.subr.mxu0 0.0
    %3304 = vmatpush1.msra.mxu0 0.0
    %3305 = vmatprep.subr.mxu0 0.0
    %3306 = vmatpush1.msra.mxu0 0.0
    %3307 = vmatprep.subr.mxu0 0.0
    %3308 = vmatpush1.msra.mxu0 0.0
    %3309 = vmatprep.subr.mxu0 0.0
    %3310 = vmatpush1.msra.mxu0 0.0
    %3311 = vmatprep.subr.mxu0 0.0
    %3312 = vmatpush1.msra.mxu0 0.0
    %3313 = vmatprep.subr.mxu0 0.0
    %3314 = vmatpush1.msra.mxu0 0.0
    %3315 = vmatprep.subr.mxu0 0.0
    %3316 = vmatpush1.msra.mxu0 0.0
    %3317 = vmatprep.subr.mxu0 0.0
    %3318 = vmatpush1.msra.mxu0 0.0
    %3319 = vmatprep.subr.mxu0 0.0
    %3320 = vmatpush1.msra.mxu0 0.0
    %3321 = vmatprep.subr.mxu0 0.0
    %3322 = vmatpush1.msra.mxu0 0.0
    %3323 = vmatprep.subr.mxu0 0.0
    %3324 = vmatpush1.msra.mxu0 0.0
    %3325 = vmatprep.subr.mxu0 0.0
    %3326 = vmatpush1.msra.mxu0 0.0
    %3327 = vmatprep.mubr.f32.mxu0 0.0
    %3328 = vmatmul.mubr.f32.gmra.mrb[0].mxu0 %v3258
    %v3329 = vpop.f32.mrb[0].mxu0
    %v3330 = vadd.f32 %v3256, %v3329
    %v3331 = vpop.f32.mrb[0].mxu0
    %3332 = vmatprep.mubr.f32.mxu0 0.0
    %3333 = vmatmul.mubr.f32.gmra.mrb[0].mxu0 %v3261
    %v3334 = vpop.f32.mrb[0].mxu0
    %v3335 = vadd.f32 %v3256, %v3334
    %v3336 = vpop.f32.mrb[0].mxu0
    %3337 = vdwg.mxu0
    %v3338 = vmax.f32 %v3330, 0.0
    %v3339 = vmax.f32 %v3335, 0.0
    %vm3340 = vcmp.lt.s32.totalorder %v38, 64
    %v3341 = vsel %vm3340, %v3338, -1e+09
    %v3342 = vsel %vm3340, %v3339, -1e+09
    %3343 = vmax.xlane.f32.xlu0 %v3341
    %v3344 = vpop.xlane.xlu0 %3343
    %3345 = vmax.xlane.f32.xlu0 %v3342
    %v3346 = vpop.xlane.xlu0 %3345
    %v3347 = vsub.f32 %v3341, %v3344
    %v3348 = vsub.f32 %v3342, %v3346
    %v3349 = vmul.f32 %v3347, 1.442695
    %v3350 = vpow.pop %v3349
    %v3351 = vmul.f32 %v3348, 1.442695
    %v3352 = vpow.pop %v3351
    %3353 = vadd.xlane.f32.xlu0 %v3350
    %v3354 = vpop.xlane.xlu0 %3353
    %3355 = vadd.xlane.f32.xlu0 %v3352
    %v3356 = vpop.xlane.xlu0 %3355
    %v3357 = vlog2.pop %v3354
    %v3358 = vmul.f32 %v3357, 0.6931472
    %v3359 = vlog2.pop %v3356
    %v3360 = vmul.f32 %v3359, 0.6931472
    %v3361 = vadd.f32 %v3358, %v3344
    %v3362 = vadd.f32 %v3360, %v3346
    %v3363 = vsub.f32 %v3341, %v3361
    %v3364 = vsub.f32 %v3342, %v3362
    %3365 = vst [vmem:[#allocation2] sm:$0xff] %v3363
    %3366 = vst [vmem:[#allocation2 + $0x8] sm:$0xff] %v3364
    // Predicated region
    $region26: #{tpu_custom_call.1} parent=1 // pred_check
      _
    $region27: #{tpu_custom_call.1} parent=1 // pred_check_branch
      %3368 = sbr.rel (0) target = $region29
    $region28: #{tpu_custom_call.1} parent=1 // pred_region
      %s3370 = ssub.s32 256, 256
      %3371 = vsyncadd [#allocation3], %s3370
      %s3372 = sshll.u32 [#allocation2], 4
      %s3373 = int_to_ptr.vmem [resolvable:$true] %s3372
      %3378 = dma.vmem_to_hbm [thread:$0]  %s3373, 256, %s6, [#allocation3], 128, 128, 8
    $region29: #{tpu_custom_call.1} parent=1 // pred_fallthru
      _
    // Predicated region
    $region30: #{tpu_custom_call.1} parent=1 // pred_check
      _
    $region31: #{tpu_custom_call.1} parent=1 // pred_check_branch
      %3380 = sbr.rel (0) target = $region33
    $region32: #{tpu_custom_call.1} parent=1 // pred_region
      %3381 = dma.done [#allocation3], 256
    $region33: #{tpu_custom_call.1} parent=1 // pred_fallthru
      _
    %3382 = vsyncpa [#allocation3], 1

</llo_original>
